<compile_context>
chip_gen: v7x
topology: tpu7x:2x2x1
jax: 0.10.0
libtpu: 0.0.40
codegen_flags: <defaults>
</compile_context>

<pallas_src>
import functools
import math

import jax
import jax.numpy as jnp
from jax.experimental import pallas as pl
from jax.experimental.pallas import tpu as pltpu

_VMEM_LIMIT_BYTES = 48 * 1024 * 1024   # headroom under v7x's 64 MiB physical VMEM
_LN_EPS = 1e-5                          # torch.nn.LayerNorm default


def _round_up(x, m):
    return ((x + m - 1) // m) * m


# ---------------------------------------------------------------------------
# Fused (LayerNorm?) -> Linear -> (GELU?) -> (Linear?) -> (+residual?) kernel,
# tiled over rows (flattened batch*tokens).  Matmuls feed the MXU with bf16
# operands + f32 accumulation; everything else stays in f32 on the VPU/EUP.
# ---------------------------------------------------------------------------
def _fused_linear_kernel(*refs, use_ln, activation, two_layer, use_res):
    i = 0
    x_ref = refs[i]; i += 1
    if use_ln:
        g_ref, bln_ref = refs[i], refs[i + 1]; i += 2
    w1_ref, b1_ref = refs[i], refs[i + 1]; i += 2
    if two_layer:
        w2_ref, b2_ref = refs[i], refs[i + 1]; i += 2
    if use_res:
        res_ref = refs[i]; i += 1
    o_ref = refs[i]

    x = x_ref[...].astype(jnp.float32)
    if use_ln:
        mu = jnp.mean(x, axis=-1, keepdims=True)
        xc = x - mu
        var = jnp.mean(xc * xc, axis=-1, keepdims=True)
        x = xc * jax.lax.rsqrt(var + _LN_EPS)
        x = x * g_ref[...] + bln_ref[...]

    h = jnp.dot(x.astype(jnp.bfloat16), w1_ref[...],
                preferred_element_type=jnp.float32)
    h = h + b1_ref[...]
    if activation == "gelu":
        h = jax.nn.gelu(h, approximate=True)  # tanh form -> EUP
        # TODO(synk): torch nn.GELU default is the exact erf form; tanh approx used here.

    if two_layer:
        h = jnp.dot(h.astype(jnp.bfloat16), w2_ref[...],
                    preferred_element_type=jnp.float32)
        h = h + b2_ref[...]

    if use_res:
        h = h + res_ref[...].astype(jnp.float32)

    o_ref[...] = h.astype(o_ref.dtype)


def fused_linear(x2d, *, w1, b1, w2=None, b2=None, ln=None, res=None,
                 activation=None, tm=256, out_dtype=jnp.float32):
    """x2d: (M, D_in) -> (M, D_out). Optional fused LN / second matmul / residual."""
    m, d_in = x2d.shape
    two_layer = w2 is not None
    use_ln = ln is not None
    use_res = res is not None
    d_mid = w1.shape[1]
    d_out = w2.shape[1] if two_layer else d_mid

    # Large MXU-friendly row tile (tunable per chip), clipped so the grid keeps
    # at least 2 steps (v7x megacore) and padding stays bounded.
    tm_eff = max(8, min(_round_up(tm, 8), _round_up(pl.cdiv(m, 2), 8)))
    mp = _round_up(m, tm_eff)
    x_p = jnp.pad(x2d, ((0, mp - m), (0, 0))) if mp != m else x2d

    args = [x_p]
    in_specs = [pl.BlockSpec((tm_eff, d_in), lambda i: (i, 0))]

    def add_resident(a):
        # Constant index_map: same block every grid step -> fetched once and
        # kept resident in VMEM by the pipeline.
        args.append(a)
        in_specs.append(pl.BlockSpec(a.shape, lambda i, _nd=a.ndim: (0,) * _nd))

    if use_ln:
        g, bln = ln
        add_resident(g.reshape(1, d_in).astype(jnp.float32))
        add_resident(bln.reshape(1, d_in).astype(jnp.float32))
    add_resident(w1.astype(jnp.bfloat16))
    add_resident(b1.reshape(1, d_mid).astype(jnp.float32))
    if two_layer:
        add_resident(w2.astype(jnp.bfloat16))
        add_resident(b2.reshape(1, d_out).astype(jnp.float32))
    if use_res:
        res_p = jnp.pad(res, ((0, mp - m), (0, 0))) if mp != m else res
        args.append(res_p)
        in_specs.append(pl.BlockSpec((tm_eff, d_out), lambda i: (i, 0)))

    flops = 2 * mp * d_in * d_mid + (2 * mp * d_mid * d_out if two_layer else 0)
    transcendentals = mp * d_mid if activation == "gelu" else 0
    bytes_accessed = sum(int(a.size) * a.dtype.itemsize for a in args)
    bytes_accessed += mp * d_out * jnp.dtype(out_dtype).itemsize

    kernel = functools.partial(_fused_linear_kernel, use_ln=use_ln,
                               activation=activation, two_layer=two_layer,
                               use_res=use_res)

    out = pl.pallas_call(
        kernel,
        out_shape=jax.ShapeDtypeStruct((mp, d_out), out_dtype),
        grid_spec=pltpu.PrefetchScalarGridSpec(
            num_scalar_prefetch=0,
            grid=(mp // tm_eff,),
            in_specs=in_specs,
            out_specs=pl.BlockSpec((tm_eff, d_out), lambda i: (i, 0)),
        ),
        compiler_params=pltpu.CompilerParams(
            dimension_semantics=("parallel",),
            vmem_limit_bytes=_VMEM_LIMIT_BYTES),
        cost_estimate=pl.CostEstimate(flops=int(flops),
                                      transcendentals=int(transcendentals),
                                      bytes_accessed=int(bytes_accessed)),
    )(*args)
    return out[:m]


# ---------------------------------------------------------------------------
# Multi-head self-attention core.  Grid over batch; all heads of one batch
# element handled in one invocation; output already concatenated over heads
# (B, N, E) so the out-projection kernel can consume it directly.
# ---------------------------------------------------------------------------
def _mhsa_kernel(q_ref, k_ref, v_ref, o_ref, *, n_head, scale):
    dh = q_ref.shape[-1]
    for h in range(n_head):
        q = q_ref[0, h].astype(jnp.bfloat16)
        k = k_ref[0, h].astype(jnp.bfloat16)
        v = v_ref[0, h].astype(jnp.bfloat16)
        s = jax.lax.dot_general(q, k, (((1,), (1,)), ((), ())),
                                preferred_element_type=jnp.float32) * scale
        s = s - jnp.max(s, axis=-1, keepdims=True)
        p = jnp.exp(s)
        p = p / jnp.sum(p, axis=-1, keepdims=True)
        ctx = jnp.dot(p.astype(jnp.bfloat16), v,
                      preferred_element_type=jnp.float32)
        o_ref[0, :, h * dh:(h + 1) * dh] = ctx.astype(o_ref.dtype)


def mhsa_attention(q, k, v, *, scale, out_dtype=jnp.float32):
    b, n_head, n, dh = q.shape
    e = n_head * dh
    flops = 4 * b * n_head * n * n * dh
    bytes_accessed = sum(int(a.size) * a.dtype.itemsize for a in (q, k, v))
    bytes_accessed += b * n * e * jnp.dtype(out_dtype).itemsize
    kernel = functools.partial(_mhsa_kernel, n_head=n_head, scale=scale)
    return pl.pallas_call(
        kernel,
        out_shape=jax.ShapeDtypeStruct((b, n, e), out_dtype),
        grid_spec=pltpu.PrefetchScalarGridSpec(
            num_scalar_prefetch=0,
            grid=(b,),
            in_specs=[pl.BlockSpec((1, n_head, n, dh), lambda i: (i, 0, 0, 0))] * 3,
            out_specs=pl.BlockSpec((1, n, e), lambda i: (i, 0, 0)),
        ),
        compiler_params=pltpu.CompilerParams(
            dimension_semantics=("parallel",),
            vmem_limit_bytes=_VMEM_LIMIT_BYTES),
        cost_estimate=pl.CostEstimate(flops=int(flops),
                                      transcendentals=int(b * n_head * n * n),
                                      bytes_accessed=int(bytes_accessed)),
    )(q, k, v)


# ---------------------------------------------------------------------------
# Model: params, forward (Pallas), reference (pure jnp, mirrors the same math)
# ---------------------------------------------------------------------------
def _extract_patches(x, px, py):
    # Conv2d(kernel=stride=patch) == per-patch flatten in (c, kx, ky) order @ W.
    b, c, sx, sy = x.shape
    nx, ny = sx // px, sy // py
    p = x.reshape(b, c, nx, px, ny, py).transpose(0, 2, 4, 1, 3, 5)
    return p.reshape(b, nx * ny, c * px * py)


def init_vit_encoder_params(key, cfg):
    c = cfg["in_channels"]
    px, py = cfg["patch_size_x"], cfg["patch_size_y"]
    nx = cfg["input_size_x"] // px
    ny = cfg["input_size_y"] // py
    n_tokens = nx * ny
    e, hd = cfg["emb_dim"], cfg["hidden_dim"]
    patch_dim = c * px * py

    def linear(k, fan_in, fan_out):
        kw, kb = jax.random.split(k)
        bound = 1.0 / math.sqrt(fan_in)
        w = jax.random.uniform(kw, (fan_in, fan_out), jnp.float32, -bound, bound)
        b = jax.random.uniform(kb, (fan_out,), jnp.float32, -bound, bound)
        return w.astype(jnp.bfloat16), b   # weights stored bf16 (MXU-native)

    keys = jax.random.split(key, 2 + cfg["num_block"])
    w_p, b_p = linear(keys[0], patch_dim, e)
    params = {
        "patch": {"w": w_p, "b": b_p},
        "pos_emb": 0.02 * jax.random.normal(keys[1], (1, n_tokens, e), jnp.float32),
        "blocks": [],
    }
    for i in range(cfg["num_block"]):
        bk = jax.random.split(keys[2 + i], 4)
        w_qkv, b_qkv = linear(bk[0], e, 3 * e)
        w_o, b_o = linear(bk[1], e, e)
        w_fc1, b_fc1 = linear(bk[2], e, hd)
        w_fc2, b_fc2 = linear(bk[3], hd, e)
        params["blocks"].append({
            "ln1_g": jnp.ones((e,), jnp.float32), "ln1_b": jnp.zeros((e,), jnp.float32),
            "w_qkv": w_qkv, "b_qkv": b_qkv,
            "w_o": w_o, "b_o": b_o,
            "ln2_g": jnp.ones((e,), jnp.float32), "ln2_b": jnp.zeros((e,), jnp.float32),
            "w_fc1": w_fc1, "b_fc1": b_fc1,
            "w_fc2": w_fc2, "b_fc2": b_fc2,
        })
    return params


def vit_encoder_forward(x, params, cfg, *, tm=256):
    b = x.shape[0]
    px, py = cfg["patch_size_x"], cfg["patch_size_y"]
    e, n_head = cfg["emb_dim"], cfg["n_head"]
    dh = e // n_head
    patches = _extract_patches(x, px, py)
    n = patches.shape[1]
    m = b * n

    # --- VitInputLayer: patch embedding + positional embedding -------------
    tok = fused_linear(patches.reshape(m, -1),
                       w1=params["patch"]["w"], b1=params["patch"]["b"], tm=tm)
    tok = (tok.reshape(b, n, e) + params["pos_emb"]).reshape(m, e)
    # TODO(synk): dropout is the identity at inference; training-mode dropout not implemented.

    # --- VitEncoderBlocks ----------------------------------------------------
    scale = 1.0 / math.sqrt(dh)
    for blk in params["blocks"]:
        qkv = fused_linear(tok, ln=(blk["ln1_g"], blk["ln1_b"]),
                           w1=blk["w_qkv"], b1=blk["b_qkv"], tm=tm)
        qkv = qkv.reshape(b, n, 3, n_head, dh)
        q = qkv[:, :, 0].transpose(0, 2, 1, 3)
        k = qkv[:, :, 1].transpose(0, 2, 1, 3)
        v = qkv[:, :, 2].transpose(0, 2, 1, 3)
        ctx = mhsa_attention(q, k, v, scale=scale).reshape(m, e)
        # attention output projection + residual
        tok = fused_linear(ctx, w1=blk["w_o"], b1=blk["b_o"], res=tok, tm=tm)
        # LN -> Linear -> GELU -> Linear + residual, fully fused
        tok = fused_linear(tok, ln=(blk["ln2_g"], blk["ln2_b"]),
                           w1=blk["w_fc1"], b1=blk["b_fc1"],
                           w2=blk["w_fc2"], b2=blk["b_fc2"],
                           activation="gelu", res=tok, tm=tm)
    return tok.reshape(b, n, e)


# --------------------------- pure-JAX reference -----------------------------
def _mm_ref(x, w):
    return jnp.dot(x.astype(jnp.bfloat16), w.astype(jnp.bfloat16),
                   preferred_element_type=jnp.float32)


def _ln_ref(x, g, b):
    mu = jnp.mean(x, axis=-1, keepdims=True)
    xc = x - mu
    var = jnp.mean(xc * xc, axis=-1, keepdims=True)
    return xc * jax.lax.rsqrt(var + _LN_EPS) * g + b


def vit_encoder_reference(x, params, cfg):
    b = x.shape[0]
    px, py = cfg["patch_size_x"], cfg["patch_size_y"]
    e, n_head = cfg["emb_dim"], cfg["n_head"]
    dh = e // n_head
    patches = _extract_patches(x, px, py)
    n = patches.shape[1]

    tok = _mm_ref(patches, params["patch"]["w"]) + params["patch"]["b"]
    tok = tok + params["pos_emb"]
    scale = 1.0 / math.sqrt(dh)
    for blk in params["blocks"]:
        z = _ln_ref(tok, blk["ln1_g"], blk["ln1_b"])
        qkv = (_mm_ref(z, blk["w_qkv"]) + blk["b_qkv"]).reshape(b, n, 3, n_head, dh)
        q = qkv[:, :, 0].transpose(0, 2, 1, 3)
        k = qkv[:, :, 1].transpose(0, 2, 1, 3)
        v = qkv[:, :, 2].transpose(0, 2, 1, 3)
        s = jnp.einsum("bhqd,bhkd->bhqk", q.astype(jnp.bfloat16),
                       k.astype(jnp.bfloat16),
                       preferred_element_type=jnp.float32) * scale
        s = s - jnp.max(s, axis=-1, keepdims=True)
        p = jnp.exp(s)
        p = p / jnp.sum(p, axis=-1, keepdims=True)
        ctx = jnp.einsum("bhqk,bhkd->bhqd", p.astype(jnp.bfloat16),
                         v.astype(jnp.bfloat16),
                         preferred_element_type=jnp.float32)
        ctx = ctx.transpose(0, 2, 1, 3).reshape(b, n, e)
        tok = tok + _mm_ref(ctx, blk["w_o"]) + blk["b_o"]
        z2 = _ln_ref(tok, blk["ln2_g"], blk["ln2_b"])
        h = jax.nn.gelu(_mm_ref(z2, blk["w_fc1"]) + blk["b_fc1"], approximate=True)
        tok = tok + _mm_ref(h, blk["w_fc2"]) + blk["b_fc2"]
    return tok


if __name__ == "__main__":
    cfg = dict(in_channels=4, input_size_x=16, input_size_y=16,
               patch_size_x=4, patch_size_y=4, emb_dim=128, n_head=4,
               hidden_dim=256, dropout=0.0, num_block=2)

    key = jax.random.PRNGKey(0)
    kx, kp = jax.random.split(key)
    x = jax.random.normal(
        kx, (2, cfg["in_channels"], cfg["input_size_x"], cfg["input_size_y"]),
        dtype=jnp.float32)
    params = init_vit_encoder_params(kp, cfg)

    fwd = jax.jit(functools.partial(vit_encoder_forward, cfg=cfg, tm=256))
    out = jax.block_until_ready(fwd(x, params))

    n_tokens = (cfg["input_size_x"] // cfg["patch_size_x"]) * \
               (cfg["input_size_y"] // cfg["patch_size_y"])
    assert out.shape == (2, n_tokens, cfg["emb_dim"])
    assert bool(jnp.all(jnp.isfinite(out)))

    ref = vit_encoder_reference(x, params, cfg)
    max_diff = float(jnp.max(jnp.abs(out - ref)))
    assert jnp.allclose(out, ref, atol=2e-2, rtol=2e-2), max_diff

    print("KERNEL_OK")
</pallas_src>

<mosaic_0001>
module attributes {stable_mosaic.version = 11 : i64} {
  func.func @_fused_linear_kernel(%arg0: i32, %arg1: memref<16x64xf32, #tpu.memory_space<vmem>>, %arg2: memref<64x128xbf16, #tpu.memory_space<vmem>>, %arg3: memref<1x128xf32, #tpu.memory_space<vmem>>, %arg4: memref<16x128xf32, #tpu.memory_space<vmem>>) attributes {dimension_semantics = [#tpu.dimension_semantics<parallel>], iteration_bounds = array<i64: 2>, scalar_prefetch = 0 : i64, scratch_operands = 0 : i64, tpu.core_type = #tpu.core_type<tc>, window_params = [{transform_indices = @transform_0, window_bounds = array<i64: 16, 64>}, {pipeline_mode = #tpu.pipeline_mode<synchronous>, transform_indices = @transform_1, window_bounds = array<i64: 64, 128>}, {pipeline_mode = #tpu.pipeline_mode<synchronous>, transform_indices = @transform_2, window_bounds = array<i64: 1, 128>}, {transform_indices = @transform_3, window_bounds = array<i64: 16, 128>}]} {
    %c0 = arith.constant 0 : index
    %c0_0 = arith.constant 0 : index
    %0 = vector.load %arg1[%c0, %c0_0] : memref<16x64xf32, #tpu.memory_space<vmem>>, vector<16x64xf32>
    %1 = arith.truncf %0 : vector<16x64xf32> to vector<16x64xbf16>
    %c0_1 = arith.constant 0 : index
    %c0_2 = arith.constant 0 : index
    %2 = vector.load %arg2[%c0_1, %c0_2] : memref<64x128xbf16, #tpu.memory_space<vmem>>, vector<64x128xbf16>
    %cst = arith.constant dense<0.000000e+00> : vector<16x128xf32>
    %3 = tpu.matmul %1, %2, %cst {dimension_numbers = #tpu.dot_dimension_numbers<[1], [0], [0], [1], [0, 0, 1, 1], [], []>} : vector<16x64xbf16>, vector<64x128xbf16>, vector<16x128xf32> -> vector<16x128xf32>
    %c0_3 = arith.constant 0 : index
    %c0_4 = arith.constant 0 : index
    %4 = vector.load %arg3[%c0_3, %c0_4] : memref<1x128xf32, #tpu.memory_space<vmem>>, vector<1x128xf32>
    %5 = vector.broadcast %4 : vector<1x128xf32> to vector<16x128xf32>
    %6 = arith.addf %3, %5 : vector<16x128xf32>
    %c0_5 = arith.constant 0 : index
    %c0_6 = arith.constant 0 : index
    %7 = vector.load %arg4[%c0_5, %c0_6] : memref<16x128xf32, #tpu.memory_space<vmem>>, vector<16x128xf32>
    tpu.vector_store %arg4[%c0_5, %c0_6], %6 {strides = array<i32>} : memref<16x128xf32, #tpu.memory_space<vmem>>, vector<16x128xf32>,
    return
  }
  func.func @transform_0(%arg0: i32) -> (i32, i32) {
    %c0_i32 = arith.constant 0 : i32
    %c0_i32_0 = arith.constant 0 : i32
    return %arg0, %c0_i32 : i32, i32
  }
  func.func @transform_1(%arg0: i32) -> (i32, i32) {
    %c0_i32 = arith.constant 0 : i32
    %c0_i32_0 = arith.constant 0 : i32
    %c0_i32_1 = arith.constant 0 : i32
    return %c0_i32, %c0_i32_0 : i32, i32
  }
  func.func @transform_2(%arg0: i32) -> (i32, i32) {
    %c0_i32 = arith.constant 0 : i32
    %c0_i32_0 = arith.constant 0 : i32
    %c0_i32_1 = arith.constant 0 : i32
    return %c0_i32, %c0_i32_0 : i32, i32
  }
  func.func @transform_3(%arg0: i32) -> (i32, i32) {
    %c0_i32 = arith.constant 0 : i32
    %c0_i32_0 = arith.constant 0 : i32
    return %arg0, %c0_i32 : i32, i32
  }
}

module attributes {stable_mosaic.version = 11 : i64} {
  func.func @_fused_linear_kernel(%arg0: i32, %arg1: memref<16x128xf32, #tpu.memory_space<vmem>>, %arg2: memref<1x128xf32, #tpu.memory_space<vmem>>, %arg3: memref<1x128xf32, #tpu.memory_space<vmem>>, %arg4: memref<128x384xbf16, #tpu.memory_space<vmem>>, %arg5: memref<1x384xf32, #tpu.memory_space<vmem>>, %arg6: memref<16x384xf32, #tpu.memory_space<vmem>>) attributes {dimension_semantics = [#tpu.dimension_semantics<parallel>], iteration_bounds = array<i64: 2>, scalar_prefetch = 0 : i64, scratch_operands = 0 : i64, tpu.core_type = #tpu.core_type<tc>, window_params = [{transform_indices = @transform_0, window_bounds = array<i64: 16, 128>}, {pipeline_mode = #tpu.pipeline_mode<synchronous>, transform_indices = @transform_1, window_bounds = array<i64: 1, 128>}, {pipeline_mode = #tpu.pipeline_mode<synchronous>, transform_indices = @transform_2, window_bounds = array<i64: 1, 128>}, {pipeline_mode = #tpu.pipeline_mode<synchronous>, transform_indices = @transform_3, window_bounds = array<i64: 128, 384>}, {pipeline_mode = #tpu.pipeline_mode<synchronous>, transform_indices = @transform_4, window_bounds = array<i64: 1, 384>}, {transform_indices = @transform_5, window_bounds = array<i64: 16, 384>}]} {
    %c0 = arith.constant 0 : index
    %c0_0 = arith.constant 0 : index
    %0 = vector.load %arg1[%c0, %c0_0] : memref<16x128xf32, #tpu.memory_space<vmem>>, vector<16x128xf32>
    %cst = arith.constant dense<0.000000e+00> : vector<16xf32>
    %1 = vector.multi_reduction <add>, %0, %cst [1] : vector<16x128xf32> to vector<16xf32>
    %2 = vector.shape_cast %1 : vector<16xf32> to vector<16x1xf32>
    %cst_1 = arith.constant 1.280000e+02 : f32
    %3 = vector.broadcast %cst_1 : f32 to vector<16x1xf32>
    %4 = arith.divf %2, %3 : vector<16x1xf32>
    %5 = vector.broadcast %4 : vector<16x1xf32> to vector<16x128xf32>
    %6 = arith.subf %0, %5 : vector<16x128xf32>
    %7 = arith.mulf %6, %6 : vector<16x128xf32>
    %cst_2 = arith.constant dense<0.000000e+00> : vector<16xf32>
    %8 = vector.multi_reduction <add>, %7, %cst_2 [1] : vector<16x128xf32> to vector<16xf32>
    %9 = vector.shape_cast %8 : vector<16xf32> to vector<16x1xf32>
    %cst_3 = arith.constant 1.280000e+02 : f32
    %10 = vector.broadcast %cst_3 : f32 to vector<16x1xf32>
    %11 = arith.divf %9, %10 : vector<16x1xf32>
    %cst_4 = arith.constant 9.99999974E-6 : f32
    %12 = vector.broadcast %cst_4 : f32 to vector<16x1xf32>
    %13 = arith.addf %11, %12 : vector<16x1xf32>
    %14 = math.rsqrt %13 : vector<16x1xf32>
    %15 = vector.broadcast %14 : vector<16x1xf32> to vector<16x128xf32>
    %16 = arith.mulf %6, %15 : vector<16x128xf32>
    %c0_5 = arith.constant 0 : index
    %c0_6 = arith.constant 0 : index
    %17 = vector.load %arg2[%c0_5, %c0_6] : memref<1x128xf32, #tpu.memory_space<vmem>>, vector<1x128xf32>
    %18 = vector.broadcast %17 : vector<1x128xf32> to vector<16x128xf32>
    %19 = arith.mulf %16, %18 : vector<16x128xf32>
    %c0_7 = arith.constant 0 : index
    %c0_8 = arith.constant 0 : index
    %20 = vector.load %arg3[%c0_7, %c0_8] : memref<1x128xf32, #tpu.memory_space<vmem>>, vector<1x128xf32>
    %21 = vector.broadcast %20 : vector<1x128xf32> to vector<16x128xf32>
    %22 = arith.addf %19, %21 : vector<16x128xf32>
    %23 = arith.truncf %22 : vector<16x128xf32> to vector<16x128xbf16>
    %c0_9 = arith.constant 0 : index
    %c0_10 = arith.constant 0 : index
    %24 = vector.load %arg4[%c0_9, %c0_10] : memref<128x384xbf16, #tpu.memory_space<vmem>>, vector<128x384xbf16>
    %cst_11 = arith.constant dense<0.000000e+00> : vector<16x384xf32>
    %25 = tpu.matmul %23, %24, %cst_11 {dimension_numbers = #tpu.dot_dimension_numbers<[1], [0], [0], [1], [0, 0, 1, 1], [], []>} : vector<16x128xbf16>, vector<128x384xbf16>, vector<16x384xf32> -> vector<16x384xf32>
    %c0_12 = arith.constant 0 : index
    %c0_13 = arith.constant 0 : index
    %26 = vector.load %arg5[%c0_12, %c0_13] : memref<1x384xf32, #tpu.memory_space<vmem>>, vector<1x384xf32>
    %27 = vector.broadcast %26 : vector<1x384xf32> to vector<16x384xf32>
    %28 = arith.addf %25, %27 : vector<16x384xf32>
    %c0_14 = arith.constant 0 : index
    %c0_15 = arith.constant 0 : index
    %29 = vector.load %arg6[%c0_14, %c0_15] : memref<16x384xf32, #tpu.memory_space<vmem>>, vector<16x384xf32>
    tpu.vector_store %arg6[%c0_14, %c0_15], %28 {strides = array<i32>} : memref<16x384xf32, #tpu.memory_space<vmem>>, vector<16x384xf32>,
    return
  }
  func.func @transform_0(%arg0: i32) -> (i32, i32) {
    %c0_i32 = arith.constant 0 : i32
    %c0_i32_0 = arith.constant 0 : i32
    return %arg0, %c0_i32 : i32, i32
  }
  func.func @transform_1(%arg0: i32) -> (i32, i32) {
    %c0_i32 = arith.constant 0 : i32
    %c0_i32_0 = arith.constant 0 : i32
    %c0_i32_1 = arith.constant 0 : i32
    return %c0_i32, %c0_i32_0 : i32, i32
  }
  func.func @transform_2(%arg0: i32) -> (i32, i32) {
    %c0_i32 = arith.constant 0 : i32
    %c0_i32_0 = arith.constant 0 : i32
    %c0_i32_1 = arith.constant 0 : i32
    return %c0_i32, %c0_i32_0 : i32, i32
  }
  func.func @transform_3(%arg0: i32) -> (i32, i32) {
    %c0_i32 = arith.constant 0 : i32
    %c0_i32_0 = arith.constant 0 : i32
    %c0_i32_1 = arith.constant 0 : i32
    return %c0_i32, %c0_i32_0 : i32, i32
  }
  func.func @transform_4(%arg0: i32) -> (i32, i32) {
    %c0_i32 = arith.constant 0 : i32
    %c0_i32_0 = arith.constant 0 : i32
    %c0_i32_1 = arith.constant 0 : i32
    return %c0_i32, %c0_i32_0 : i32, i32
  }
  func.func @transform_5(%arg0: i32) -> (i32, i32) {
    %c0_i32 = arith.constant 0 : i32
    %c0_i32_0 = arith.constant 0 : i32
    return %arg0, %c0_i32 : i32, i32
  }
}

module attributes {stable_mosaic.version = 11 : i64} {
  func.func @_mhsa_kernel(%arg0: i32, %arg1: memref<1x4x16x32xf32, #tpu.memory_space<vmem>>, %arg2: memref<1x4x16x32xf32, #tpu.memory_space<vmem>>, %arg3: memref<1x4x16x32xf32, #tpu.memory_space<vmem>>, %arg4: memref<1x16x128xf32, #tpu.memory_space<vmem>>) attributes {dimension_semantics = [#tpu.dimension_semantics<parallel>], iteration_bounds = array<i64: 2>, scalar_prefetch = 0 : i64, scratch_operands = 0 : i64, tpu.core_type = #tpu.core_type<tc>, window_params = [{transform_indices = @transform_0, window_bounds = array<i64: 1, 4, 16, 32>}, {transform_indices = @transform_1, window_bounds = array<i64: 1, 4, 16, 32>}, {transform_indices = @transform_2, window_bounds = array<i64: 1, 4, 16, 32>}, {transform_indices = @transform_3, window_bounds = array<i64: 1, 16, 128>}]} {
    %c0 = arith.constant 0 : index
    %c0_0 = arith.constant 0 : index
    %c0_1 = arith.constant 0 : index
    %c0_2 = arith.constant 0 : index
    %0 = vector.load %arg1[%c0, %c0_0, %c0_1, %c0_2] : memref<1x4x16x32xf32, #tpu.memory_space<vmem>>, vector<1x1x16x32xf32>
    %1 = vector.shape_cast %0 : vector<1x1x16x32xf32> to vector<16x32xf32>
    %2 = arith.truncf %1 : vector<16x32xf32> to vector<16x32xbf16>
    %c0_3 = arith.constant 0 : index
    %c0_4 = arith.constant 0 : index
    %c0_5 = arith.constant 0 : index
    %c0_6 = arith.constant 0 : index
    %3 = vector.load %arg2[%c0_3, %c0_4, %c0_5, %c0_6] : memref<1x4x16x32xf32, #tpu.memory_space<vmem>>, vector<1x1x16x32xf32>
    %4 = vector.shape_cast %3 : vector<1x1x16x32xf32> to vector<16x32xf32>
    %5 = arith.truncf %4 : vector<16x32xf32> to vector<16x32xbf16>
    %c0_7 = arith.constant 0 : index
    %c0_8 = arith.constant 0 : index
    %c0_9 = arith.constant 0 : index
    %c0_10 = arith.constant 0 : index
    %6 = vector.load %arg3[%c0_7, %c0_8, %c0_9, %c0_10] : memref<1x4x16x32xf32, #tpu.memory_space<vmem>>, vector<1x1x16x32xf32>
    %7 = vector.shape_cast %6 : vector<1x1x16x32xf32> to vector<16x32xf32>
    %8 = arith.truncf %7 : vector<16x32xf32> to vector<16x32xbf16>
    %cst = arith.constant dense<0.000000e+00> : vector<16x16xf32>
    %9 = tpu.matmul %2, %5, %cst {dimension_numbers = #tpu.dot_dimension_numbers<[1], [1], [0], [0], [0, 0, 1, 0], [], []>} : vector<16x32xbf16>, vector<16x32xbf16>, vector<16x16xf32> -> vector<16x16xf32>
    %cst_11 = arith.constant 0.176776692 : f32
    %10 = vector.broadcast %cst_11 : f32 to vector<16x16xf32>
    %11 = arith.mulf %9, %10 : vector<16x16xf32>
    %cst_12 = arith.constant dense<0xFF800000> : vector<16xf32>
    %12 = vector.multi_reduction <maximumf>, %11, %cst_12 [1] : vector<16x16xf32> to vector<16xf32>
    %13 = vector.shape_cast %12 : vector<16xf32> to vector<16x1xf32>
    %14 = vector.broadcast %13 : vector<16x1xf32> to vector<16x16xf32>
    %15 = arith.subf %11, %14 : vector<16x16xf32>
    %16 = math.exp %15 : vector<16x16xf32>
    %cst_13 = arith.constant dense<0.000000e+00> : vector<16xf32>
    %17 = vector.multi_reduction <add>, %16, %cst_13 [1] : vector<16x16xf32> to vector<16xf32>
    %18 = vector.shape_cast %17 : vector<16xf32> to vector<16x1xf32>
    %19 = vector.broadcast %18 : vector<16x1xf32> to vector<16x16xf32>
    %20 = arith.divf %16, %19 : vector<16x16xf32>
    %21 = arith.truncf %20 : vector<16x16xf32> to vector<16x16xbf16>
    %cst_14 = arith.constant dense<0.000000e+00> : vector<16x32xf32>
    %22 = tpu.matmul %21, %8, %cst_14 {dimension_numbers = #tpu.dot_dimension_numbers<[1], [0], [0], [1], [0, 0, 1, 1], [], []>} : vector<16x16xbf16>, vector<16x32xbf16>, vector<16x32xf32> -> vector<16x32xf32>
    %c0_15 = arith.constant 0 : index
    %c0_16 = arith.constant 0 : index
    %c0_17 = arith.constant 0 : index
    %23 = vector.load %arg4[%c0_15, %c0_16, %c0_17] : memref<1x16x128xf32, #tpu.memory_space<vmem>>, vector<1x16x32xf32>
    %24 = vector.shape_cast %23 : vector<1x16x32xf32> to vector<16x32xf32>
    %25 = vector.shape_cast %22 : vector<16x32xf32> to vector<1x16x32xf32>
    tpu.vector_store %arg4[%c0_15, %c0_16, %c0_17], %25 {strides = array<i32>} : memref<1x16x128xf32, #tpu.memory_space<vmem>>, vector<1x16x32xf32>,
    %c0_18 = arith.constant 0 : index
    %c1 = arith.constant 1 : index
    %c0_19 = arith.constant 0 : index
    %c0_20 = arith.constant 0 : index
    %26 = vector.load %arg1[%c0_18, %c1, %c0_19, %c0_20] : memref<1x4x16x32xf32, #tpu.memory_space<vmem>>, vector<1x1x16x32xf32>
    %27 = vector.shape_cast %26 : vector<1x1x16x32xf32> to vector<16x32xf32>
    %28 = arith.truncf %27 : vector<16x32xf32> to vector<16x32xbf16>
    %c0_21 = arith.constant 0 : index
    %c1_22 = arith.constant 1 : index
    %c0_23 = arith.constant 0 : index
    %c0_24 = arith.constant 0 : index
    %29 = vector.load %arg2[%c0_21, %c1_22, %c0_23, %c0_24] : memref<1x4x16x32xf32, #tpu.memory_space<vmem>>, vector<1x1x16x32xf32>
    %30 = vector.shape_cast %29 : vector<1x1x16x32xf32> to vector<16x32xf32>
    %31 = arith.truncf %30 : vector<16x32xf32> to vector<16x32xbf16>
    %c0_25 = arith.constant 0 : index
    %c1_26 = arith.constant 1 : index
    %c0_27 = arith.constant 0 : index
    %c0_28 = arith.constant 0 : index
    %32 = vector.load %arg3[%c0_25, %c1_26, %c0_27, %c0_28] : memref<1x4x16x32xf32, #tpu.memory_space<vmem>>, vector<1x1x16x32xf32>
    %33 = vector.shape_cast %32 : vector<1x1x16x32xf32> to vector<16x32xf32>
    %34 = arith.truncf %33 : vector<16x32xf32> to vector<16x32xbf16>
    %cst_29 = arith.constant dense<0.000000e+00> : vector<16x16xf32>
    %35 = tpu.matmul %28, %31, %cst_29 {dimension_numbers = #tpu.dot_dimension_numbers<[1], [1], [0], [0], [0, 0, 1, 0], [], []>} : vector<16x32xbf16>, vector<16x32xbf16>, vector<16x16xf32> -> vector<16x16xf32>
    %cst_30 = arith.constant 0.176776692 : f32
    %36 = vector.broadcast %cst_30 : f32 to vector<16x16xf32>
    %37 = arith.mulf %35, %36 : vector<16x16xf32>
    %cst_31 = arith.constant dense<0xFF800000> : vector<16xf32>
    %38 = vector.multi_reduction <maximumf>, %37, %cst_31 [1] : vector<16x16xf32> to vector<16xf32>
    %39 = vector.shape_cast %38 : vector<16xf32> to vector<16x1xf32>
    %40 = vector.broadcast %39 : vector<16x1xf32> to vector<16x16xf32>
    %41 = arith.subf %37, %40 : vector<16x16xf32>
    %42 = math.exp %41 : vector<16x16xf32>
    %cst_32 = arith.constant dense<0.000000e+00> : vector<16xf32>
    %43 = vector.multi_reduction <add>, %42, %cst_32 [1] : vector<16x16xf32> to vector<16xf32>
    %44 = vector.shape_cast %43 : vector<16xf32> to vector<16x1xf32>
    %45 = vector.broadcast %44 : vector<16x1xf32> to vector<16x16xf32>
    %46 = arith.divf %42, %45 : vector<16x16xf32>
    %47 = arith.truncf %46 : vector<16x16xf32> to vector<16x16xbf16>
    %cst_33 = arith.constant dense<0.000000e+00> : vector<16x32xf32>
    %48 = tpu.matmul %47, %34, %cst_33 {dimension_numbers = #tpu.dot_dimension_numbers<[1], [0], [0], [1], [0, 0, 1, 1], [], []>} : vector<16x16xbf16>, vector<16x32xbf16>, vector<16x32xf32> -> vector<16x32xf32>
    %c0_34 = arith.constant 0 : index
    %c0_35 = arith.constant 0 : index
    %c32 = arith.constant 32 : index
    %49 = vector.load %arg4[%c0_34, %c0_35, %c32] : memref<1x16x128xf32, #tpu.memory_space<vmem>>, vector<1x16x32xf32>
    %50 = vector.shape_cast %49 : vector<1x16x32xf32> to vector<16x32xf32>
    %51 = vector.shape_cast %48 : vector<16x32xf32> to vector<1x16x32xf32>
    tpu.vector_store %arg4[%c0_34, %c0_35, %c32], %51 {strides = array<i32>} : memref<1x16x128xf32, #tpu.memory_space<vmem>>, vector<1x16x32xf32>,
    %c0_36 = arith.constant 0 : index
    %c2 = arith.constant 2 : index
    %c0_37 = arith.constant 0 : index
    %c0_38 = arith.constant 0 : index
    %52 = vector.load %arg1[%c0_36, %c2, %c0_37, %c0_38] : memref<1x4x16x32xf32, #tpu.memory_space<vmem>>, vector<1x1x16x32xf32>
    %53 = vector.shape_cast %52 : vector<1x1x16x32xf32> to vector<16x32xf32>
    %54 = arith.truncf %53 : vector<16x32xf32> to vector<16x32xbf16>
    %c0_39 = arith.constant 0 : index
    %c2_40 = arith.constant 2 : index
    %c0_41 = arith.constant 0 : index
    %c0_42 = arith.constant 0 : index
    %55 = vector.load %arg2[%c0_39, %c2_40, %c0_41, %c0_42] : memref<1x4x16x32xf32, #tpu.memory_space<vmem>>, vector<1x1x16x32xf32>
    %56 = vector.shape_cast %55 : vector<1x1x16x32xf32> to vector<16x32xf32>
    %57 = arith.truncf %56 : vector<16x32xf32> to vector<16x32xbf16>
    %c0_43 = arith.constant 0 : index
    %c2_44 = arith.constant 2 : index
    %c0_45 = arith.constant 0 : index
    %c0_46 = arith.constant 0 : index
    %58 = vector.load %arg3[%c0_43, %c2_44, %c0_45, %c0_46] : memref<1x4x16x32xf32, #tpu.memory_space<vmem>>, vector<1x1x16x32xf32>
    %59 = vector.shape_cast %58 : vector<1x1x16x32xf32> to vector<16x32xf32>
    %60 = arith.truncf %59 : vector<16x32xf32> to vector<16x32xbf16>
    %cst_47 = arith.constant dense<0.000000e+00> : vector<16x16xf32>
    %61 = tpu.matmul %54, %57, %cst_47 {dimension_numbers = #tpu.dot_dimension_numbers<[1], [1], [0], [0], [0, 0, 1, 0], [], []>} : vector<16x32xbf16>, vector<16x32xbf16>, vector<16x16xf32> -> vector<16x16xf32>
    %cst_48 = arith.constant 0.176776692 : f32
    %62 = vector.broadcast %cst_48 : f32 to vector<16x16xf32>
    %63 = arith.mulf %61, %62 : vector<16x16xf32>
    %cst_49 = arith.constant dense<0xFF800000> : vector<16xf32>
    %64 = vector.multi_reduction <maximumf>, %63, %cst_49 [1] : vector<16x16xf32> to vector<16xf32>
    %65 = vector.shape_cast %64 : vector<16xf32> to vector<16x1xf32>
    %66 = vector.broadcast %65 : vector<16x1xf32> to vector<16x16xf32>
    %67 = arith.subf %63, %66 : vector<16x16xf32>
    %68 = math.exp %67 : vector<16x16xf32>
    %cst_50 = arith.constant dense<0.000000e+00> : vector<16xf32>
    %69 = vector.multi_reduction <add>, %68, %cst_50 [1] : vector<16x16xf32> to vector<16xf32>
    %70 = vector.shape_cast %69 : vector<16xf32> to vector<16x1xf32>
    %71 = vector.broadcast %70 : vector<16x1xf32> to vector<16x16xf32>
    %72 = arith.divf %68, %71 : vector<16x16xf32>
    %73 = arith.truncf %72 : vector<16x16xf32> to vector<16x16xbf16>
    %cst_51 = arith.constant dense<0.000000e+00> : vector<16x32xf32>
    %74 = tpu.matmul %73, %60, %cst_51 {dimension_numbers = #tpu.dot_dimension_numbers<[1], [0], [0], [1], [0, 0, 1, 1], [], []>} : vector<16x16xbf16>, vector<16x32xbf16>, vector<16x32xf32> -> vector<16x32xf32>
    %c0_52 = arith.constant 0 : index
    %c0_53 = arith.constant 0 : index
    %c64 = arith.constant 64 : index
    %75 = vector.load %arg4[%c0_52, %c0_53, %c64] : memref<1x16x128xf32, #tpu.memory_space<vmem>>, vector<1x16x32xf32>
    %76 = vector.shape_cast %75 : vector<1x16x32xf32> to vector<16x32xf32>
    %77 = vector.shape_cast %74 : vector<16x32xf32> to vector<1x16x32xf32>
    tpu.vector_store %arg4[%c0_52, %c0_53, %c64], %77 {strides = array<i32>} : memref<1x16x128xf32, #tpu.memory_space<vmem>>, vector<1x16x32xf32>,
    %c0_54 = arith.constant 0 : index
    %c3 = arith.constant 3 : index
    %c0_55 = arith.constant 0 : index
    %c0_56 = arith.constant 0 : index
    %78 = vector.load %arg1[%c0_54, %c3, %c0_55, %c0_56] : memref<1x4x16x32xf32, #tpu.memory_space<vmem>>, vector<1x1x16x32xf32>
    %79 = vector.shape_cast %78 : vector<1x1x16x32xf32> to vector<16x32xf32>
    %80 = arith.truncf %79 : vector<16x32xf32> to vector<16x32xbf16>
    %c0_57 = arith.constant 0 : index
    %c3_58 = arith.constant 3 : index
    %c0_59 = arith.constant 0 : index
    %c0_60 = arith.constant 0 : index
    %81 = vector.load %arg2[%c0_57, %c3_58, %c0_59, %c0_60] : memref<1x4x16x32xf32, #tpu.memory_space<vmem>>, vector<1x1x16x32xf32>
    %82 = vector.shape_cast %81 : vector<1x1x16x32xf32> to vector<16x32xf32>
    %83 = arith.truncf %82 : vector<16x32xf32> to vector<16x32xbf16>
    %c0_61 = arith.constant 0 : index
    %c3_62 = arith.constant 3 : index
    %c0_63 = arith.constant 0 : index
    %c0_64 = arith.constant 0 : index
    %84 = vector.load %arg3[%c0_61, %c3_62, %c0_63, %c0_64] : memref<1x4x16x32xf32, #tpu.memory_space<vmem>>, vector<1x1x16x32xf32>
    %85 = vector.shape_cast %84 : vector<1x1x16x32xf32> to vector<16x32xf32>
    %86 = arith.truncf %85 : vector<16x32xf32> to vector<16x32xbf16>
    %cst_65 = arith.constant dense<0.000000e+00> : vector<16x16xf32>
    %87 = tpu.matmul %80, %83, %cst_65 {dimension_numbers = #tpu.dot_dimension_numbers<[1], [1], [0], [0], [0, 0, 1, 0], [], []>} : vector<16x32xbf16>, vector<16x32xbf16>, vector<16x16xf32> -> vector<16x16xf32>
    %cst_66 = arith.constant 0.176776692 : f32
    %88 = vector.broadcast %cst_66 : f32 to vector<16x16xf32>
    %89 = arith.mulf %87, %88 : vector<16x16xf32>
    %cst_67 = arith.constant dense<0xFF800000> : vector<16xf32>
    %90 = vector.multi_reduction <maximumf>, %89, %cst_67 [1] : vector<16x16xf32> to vector<16xf32>
    %91 = vector.shape_cast %90 : vector<16xf32> to vector<16x1xf32>
    %92 = vector.broadcast %91 : vector<16x1xf32> to vector<16x16xf32>
    %93 = arith.subf %89, %92 : vector<16x16xf32>
    %94 = math.exp %93 : vector<16x16xf32>
    %cst_68 = arith.constant dense<0.000000e+00> : vector<16xf32>
    %95 = vector.multi_reduction <add>, %94, %cst_68 [1] : vector<16x16xf32> to vector<16xf32>
    %96 = vector.shape_cast %95 : vector<16xf32> to vector<16x1xf32>
    %97 = vector.broadcast %96 : vector<16x1xf32> to vector<16x16xf32>
    %98 = arith.divf %94, %97 : vector<16x16xf32>
    %99 = arith.truncf %98 : vector<16x16xf32> to vector<16x16xbf16>
    %cst_69 = arith.constant dense<0.000000e+00> : vector<16x32xf32>
    %100 = tpu.matmul %99, %86, %cst_69 {dimension_numbers = #tpu.dot_dimension_numbers<[1], [0], [0], [1], [0, 0, 1, 1], [], []>} : vector<16x16xbf16>, vector<16x32xbf16>, vector<16x32xf32> -> vector<16x32xf32>
    %c0_70 = arith.constant 0 : index
    %c0_71 = arith.constant 0 : index
    %c96 = arith.constant 96 : index
    %101 = vector.load %arg4[%c0_70, %c0_71, %c96] : memref<1x16x128xf32, #tpu.memory_space<vmem>>, vector<1x16x32xf32>
    %102 = vector.shape_cast %101 : vector<1x16x32xf32> to vector<16x32xf32>
    %103 = vector.shape_cast %100 : vector<16x32xf32> to vector<1x16x32xf32>
    tpu.vector_store %arg4[%c0_70, %c0_71, %c96], %103 {strides = array<i32>} : memref<1x16x128xf32, #tpu.memory_space<vmem>>, vector<1x16x32xf32>,
    return
  }
  func.func @transform_0(%arg0: i32) -> (i32, i32, i32, i32) {
    %c0_i32 = arith.constant 0 : i32
    %c0_i32_0 = arith.constant 0 : i32
    %c0_i32_1 = arith.constant 0 : i32
    %c0_i32_2 = arith.constant 0 : i32
    return %arg0, %c0_i32, %c0_i32_0, %c0_i32_1 : i32, i32, i32, i32
  }
  func.func @transform_1(%arg0: i32) -> (i32, i32, i32, i32) {
    %c0_i32 = arith.constant 0 : i32
    %c0_i32_0 = arith.constant 0 : i32
    %c0_i32_1 = arith.constant 0 : i32
    %c0_i32_2 = arith.constant 0 : i32
    return %arg0, %c0_i32, %c0_i32_0, %c0_i32_1 : i32, i32, i32, i32
  }
  func.func @transform_2(%arg0: i32) -> (i32, i32, i32, i32) {
    %c0_i32 = arith.constant 0 : i32
    %c0_i32_0 = arith.constant 0 : i32
    %c0_i32_1 = arith.constant 0 : i32
    %c0_i32_2 = arith.constant 0 : i32
    return %arg0, %c0_i32, %c0_i32_0, %c0_i32_1 : i32, i32, i32, i32
  }
  func.func @transform_3(%arg0: i32) -> (i32, i32, i32) {
    %c0_i32 = arith.constant 0 : i32
    %c0_i32_0 = arith.constant 0 : i32
    %c0_i32_1 = arith.constant 0 : i32
    return %arg0, %c0_i32, %c0_i32_0 : i32, i32, i32
  }
}

module attributes {stable_mosaic.version = 11 : i64} {
  func.func @_fused_linear_kernel(%arg0: i32, %arg1: memref<16x128xf32, #tpu.memory_space<vmem>>, %arg2: memref<128x128xbf16, #tpu.memory_space<vmem>>, %arg3: memref<1x128xf32, #tpu.memory_space<vmem>>, %arg4: memref<16x128xf32, #tpu.memory_space<vmem>>, %arg5: memref<16x128xf32, #tpu.memory_space<vmem>>) attributes {dimension_semantics = [#tpu.dimension_semantics<parallel>], iteration_bounds = array<i64: 2>, scalar_prefetch = 0 : i64, scratch_operands = 0 : i64, tpu.core_type = #tpu.core_type<tc>, window_params = [{transform_indices = @transform_0, window_bounds = array<i64: 16, 128>}, {pipeline_mode = #tpu.pipeline_mode<synchronous>, transform_indices = @transform_1, window_bounds = array<i64: 128, 128>}, {pipeline_mode = #tpu.pipeline_mode<synchronous>, transform_indices = @transform_2, window_bounds = array<i64: 1, 128>}, {transform_indices = @transform_3, window_bounds = array<i64: 16, 128>}, {transform_indices = @transform_4, window_bounds = array<i64: 16, 128>}]} {
    %c0 = arith.constant 0 : index
    %c0_0 = arith.constant 0 : index
    %0 = vector.load %arg1[%c0, %c0_0] : memref<16x128xf32, #tpu.memory_space<vmem>>, vector<16x128xf32>
    %1 = arith.truncf %0 : vector<16x128xf32> to vector<16x128xbf16>
    %c0_1 = arith.constant 0 : index
    %c0_2 = arith.constant 0 : index
    %2 = vector.load %arg2[%c0_1, %c0_2] : memref<128x128xbf16, #tpu.memory_space<vmem>>, vector<128x128xbf16>
    %cst = arith.constant dense<0.000000e+00> : vector<16x128xf32>
    %3 = tpu.matmul %1, %2, %cst {dimension_numbers = #tpu.dot_dimension_numbers<[1], [0], [0], [1], [0, 0, 1, 1], [], []>} : vector<16x128xbf16>, vector<128x128xbf16>, vector<16x128xf32> -> vector<16x128xf32>
    %c0_3 = arith.constant 0 : index
    %c0_4 = arith.constant 0 : index
    %4 = vector.load %arg3[%c0_3, %c0_4] : memref<1x128xf32, #tpu.memory_space<vmem>>, vector<1x128xf32>
    %5 = vector.broadcast %4 : vector<1x128xf32> to vector<16x128xf32>
    %6 = arith.addf %3, %5 : vector<16x128xf32>
    %c0_5 = arith.constant 0 : index
    %c0_6 = arith.constant 0 : index
    %7 = vector.load %arg4[%c0_5, %c0_6] : memref<16x128xf32, #tpu.memory_space<vmem>>, vector<16x128xf32>
    %8 = arith.addf %6, %7 : vector<16x128xf32>
    %c0_7 = arith.constant 0 : index
    %c0_8 = arith.constant 0 : index
    %9 = vector.load %arg5[%c0_7, %c0_8] : memref<16x128xf32, #tpu.memory_space<vmem>>, vector<16x128xf32>
    tpu.vector_store %arg5[%c0_7, %c0_8], %8 {strides = array<i32>} : memref<16x128xf32, #tpu.memory_space<vmem>>, vector<16x128xf32>,
    return
  }
  func.func @transform_0(%arg0: i32) -> (i32, i32) {
    %c0_i32 = arith.constant 0 : i32
    %c0_i32_0 = arith.constant 0 : i32
    return %arg0, %c0_i32 : i32, i32
  }
  func.func @transform_1(%arg0: i32) -> (i32, i32) {
    %c0_i32 = arith.constant 0 : i32
    %c0_i32_0 = arith.constant 0 : i32
    %c0_i32_1 = arith.constant 0 : i32
    return %c0_i32, %c0_i32_0 : i32, i32
  }
  func.func @transform_2(%arg0: i32) -> (i32, i32) {
    %c0_i32 = arith.constant 0 : i32
    %c0_i32_0 = arith.constant 0 : i32
    %c0_i32_1 = arith.constant 0 : i32
    return %c0_i32, %c0_i32_0 : i32, i32
  }
  func.func @transform_3(%arg0: i32) -> (i32, i32) {
    %c0_i32 = arith.constant 0 : i32
    %c0_i32_0 = arith.constant 0 : i32
    return %arg0, %c0_i32 : i32, i32
  }
  func.func @transform_4(%arg0: i32) -> (i32, i32) {
    %c0_i32 = arith.constant 0 : i32
    %c0_i32_0 = arith.constant 0 : i32
    return %arg0, %c0_i32 : i32, i32
  }
}

module attributes {stable_mosaic.version = 11 : i64} {
  func.func @_fused_linear_kernel(%arg0: i32, %arg1: memref<16x128xf32, #tpu.memory_space<vmem>>, %arg2: memref<1x128xf32, #tpu.memory_space<vmem>>, %arg3: memref<1x128xf32, #tpu.memory_space<vmem>>, %arg4: memref<128x256xbf16, #tpu.memory_space<vmem>>, %arg5: memref<1x256xf32, #tpu.memory_space<vmem>>, %arg6: memref<256x128xbf16, #tpu.memory_space<vmem>>, %arg7: memref<1x128xf32, #tpu.memory_space<vmem>>, %arg8: memref<16x128xf32, #tpu.memory_space<vmem>>, %arg9: memref<16x128xf32, #tpu.memory_space<vmem>>) attributes {dimension_semantics = [#tpu.dimension_semantics<parallel>], iteration_bounds = array<i64: 2>, scalar_prefetch = 0 : i64, scratch_operands = 0 : i64, tpu.core_type = #tpu.core_type<tc>, window_params = [{transform_indices = @transform_0, window_bounds = array<i64: 16, 128>}, {pipeline_mode = #tpu.pipeline_mode<synchronous>, transform_indices = @transform_1, window_bounds = array<i64: 1, 128>}, {pipeline_mode = #tpu.pipeline_mode<synchronous>, transform_indices = @transform_2, window_bounds = array<i64: 1, 128>}, {pipeline_mode = #tpu.pipeline_mode<synchronous>, transform_indices = @transform_3, window_bounds = array<i64: 128, 256>}, {pipeline_mode = #tpu.pipeline_mode<synchronous>, transform_indices = @transform_4, window_bounds = array<i64: 1, 256>}, {pipeline_mode = #tpu.pipeline_mode<synchronous>, transform_indices = @transform_5, window_bounds = array<i64: 256, 128>}, {pipeline_mode = #tpu.pipeline_mode<synchronous>, transform_indices = @transform_6, window_bounds = array<i64: 1, 128>}, {transform_indices = @transform_7, window_bounds = array<i64: 16, 128>}, {transform_indices = @transform_8, window_bounds = array<i64: 16, 128>}]} {
    %c0 = arith.constant 0 : index
    %c0_0 = arith.constant 0 : index
    %0 = vector.load %arg1[%c0, %c0_0] : memref<16x128xf32, #tpu.memory_space<vmem>>, vector<16x128xf32>
    %cst = arith.constant dense<0.000000e+00> : vector<16xf32>
    %1 = vector.multi_reduction <add>, %0, %cst [1] : vector<16x128xf32> to vector<16xf32>
    %2 = vector.shape_cast %1 : vector<16xf32> to vector<16x1xf32>
    %cst_1 = arith.constant 1.280000e+02 : f32
    %3 = vector.broadcast %cst_1 : f32 to vector<16x1xf32>
    %4 = arith.divf %2, %3 : vector<16x1xf32>
    %5 = vector.broadcast %4 : vector<16x1xf32> to vector<16x128xf32>
    %6 = arith.subf %0, %5 : vector<16x128xf32>
    %7 = arith.mulf %6, %6 : vector<16x128xf32>
    %cst_2 = arith.constant dense<0.000000e+00> : vector<16xf32>
    %8 = vector.multi_reduction <add>, %7, %cst_2 [1] : vector<16x128xf32> to vector<16xf32>
    %9 = vector.shape_cast %8 : vector<16xf32> to vector<16x1xf32>
    %cst_3 = arith.constant 1.280000e+02 : f32
    %10 = vector.broadcast %cst_3 : f32 to vector<16x1xf32>
    %11 = arith.divf %9, %10 : vector<16x1xf32>
    %cst_4 = arith.constant 9.99999974E-6 : f32
    %12 = vector.broadcast %cst_4 : f32 to vector<16x1xf32>
    %13 = arith.addf %11, %12 : vector<16x1xf32>
    %14 = math.rsqrt %13 : vector<16x1xf32>
    %15 = vector.broadcast %14 : vector<16x1xf32> to vector<16x128xf32>
    %16 = arith.mulf %6, %15 : vector<16x128xf32>
    %c0_5 = arith.constant 0 : index
    %c0_6 = arith.constant 0 : index
    %17 = vector.load %arg2[%c0_5, %c0_6] : memref<1x128xf32, #tpu.memory_space<vmem>>, vector<1x128xf32>
    %18 = vector.broadcast %17 : vector<1x128xf32> to vector<16x128xf32>
    %19 = arith.mulf %16, %18 : vector<16x128xf32>
    %c0_7 = arith.constant 0 : index
    %c0_8 = arith.constant 0 : index
    %20 = vector.load %arg3[%c0_7, %c0_8] : memref<1x128xf32, #tpu.memory_space<vmem>>, vector<1x128xf32>
    %21 = vector.broadcast %20 : vector<1x128xf32> to vector<16x128xf32>
    %22 = arith.addf %19, %21 : vector<16x128xf32>
    %23 = arith.truncf %22 : vector<16x128xf32> to vector<16x128xbf16>
    %c0_9 = arith.constant 0 : index
    %c0_10 = arith.constant 0 : index
    %24 = vector.load %arg4[%c0_9, %c0_10] : memref<128x256xbf16, #tpu.memory_space<vmem>>, vector<128x256xbf16>
    %cst_11 = arith.constant dense<0.000000e+00> : vector<16x256xf32>
    %25 = tpu.matmul %23, %24, %cst_11 {dimension_numbers = #tpu.dot_dimension_numbers<[1], [0], [0], [1], [0, 0, 1, 1], [], []>} : vector<16x128xbf16>, vector<128x256xbf16>, vector<16x256xf32> -> vector<16x256xf32>
    %c0_12 = arith.constant 0 : index
    %c0_13 = arith.constant 0 : index
    %26 = vector.load %arg5[%c0_12, %c0_13] : memref<1x256xf32, #tpu.memory_space<vmem>>, vector<1x256xf32>
    %27 = vector.broadcast %26 : vector<1x256xf32> to vector<16x256xf32>
    %28 = arith.addf %25, %27 : vector<16x256xf32>
    %29 = arith.mulf %28, %28 : vector<16x256xf32>
    %30 = arith.mulf %28, %29 : vector<16x256xf32>
    %cst_14 = arith.constant 4.471500e-02 : f32
    %31 = vector.broadcast %cst_14 : f32 to vector<16x256xf32>
    %32 = arith.mulf %31, %30 : vector<16x256xf32>
    %33 = arith.addf %28, %32 : vector<16x256xf32>
    %cst_15 = arith.constant 0.797884583 : f32
    %34 = vector.broadcast %cst_15 : f32 to vector<16x256xf32>
    %35 = arith.mulf %34, %33 : vector<16x256xf32>
    %36 = math.tanh %35 : vector<16x256xf32>
    %cst_16 = arith.constant 1.000000e+00 : f32
    %37 = vector.broadcast %cst_16 : f32 to vector<16x256xf32>
    %38 = arith.addf %37, %36 : vector<16x256xf32>
    %cst_17 = arith.constant 5.000000e-01 : f32
    %39 = vector.broadcast %cst_17 : f32 to vector<16x256xf32>
    %40 = arith.mulf %39, %38 : vector<16x256xf32>
    %41 = arith.mulf %28, %40 : vector<16x256xf32>
    %42 = arith.truncf %41 : vector<16x256xf32> to vector<16x256xbf16>
    %c0_18 = arith.constant 0 : index
    %c0_19 = arith.constant 0 : index
    %43 = vector.load %arg6[%c0_18, %c0_19] : memref<256x128xbf16, #tpu.memory_space<vmem>>, vector<256x128xbf16>
    %cst_20 = arith.constant dense<0.000000e+00> : vector<16x128xf32>
    %44 = tpu.matmul %42, %43, %cst_20 {dimension_numbers = #tpu.dot_dimension_numbers<[1], [0], [0], [1], [0, 0, 1, 1], [], []>} : vector<16x256xbf16>, vector<256x128xbf16>, vector<16x128xf32> -> vector<16x128xf32>
    %c0_21 = arith.constant 0 : index
    %c0_22 = arith.constant 0 : index
    %45 = vector.load %arg7[%c0_21, %c0_22] : memref<1x128xf32, #tpu.memory_space<vmem>>, vector<1x128xf32>
    %46 = vector.broadcast %45 : vector<1x128xf32> to vector<16x128xf32>
    %47 = arith.addf %44, %46 : vector<16x128xf32>
    %c0_23 = arith.constant 0 : index
    %c0_24 = arith.constant 0 : index
    %48 = vector.load %arg8[%c0_23, %c0_24] : memref<16x128xf32, #tpu.memory_space<vmem>>, vector<16x128xf32>
    %49 = arith.addf %47, %48 : vector<16x128xf32>
    %c0_25 = arith.constant 0 : index
    %c0_26 = arith.constant 0 : index
    %50 = vector.load %arg9[%c0_25, %c0_26] : memref<16x128xf32, #tpu.memory_space<vmem>>, vector<16x128xf32>
    tpu.vector_store %arg9[%c0_25, %c0_26], %49 {strides = array<i32>} : memref<16x128xf32, #tpu.memory_space<vmem>>, vector<16x128xf32>,
    return
  }
  func.func @transform_0(%arg0: i32) -> (i32, i32) {
    %c0_i32 = arith.constant 0 : i32
    %c0_i32_0 = arith.constant 0 : i32
    return %arg0, %c0_i32 : i32, i32
  }
  func.func @transform_1(%arg0: i32) -> (i32, i32) {
    %c0_i32 = arith.constant 0 : i32
    %c0_i32_0 = arith.constant 0 : i32
    %c0_i32_1 = arith.constant 0 : i32
    return %c0_i32, %c0_i32_0 : i32, i32
  }
  func.func @transform_2(%arg0: i32) -> (i32, i32) {
    %c0_i32 = arith.constant 0 : i32
    %c0_i32_0 = arith.constant 0 : i32
    %c0_i32_1 = arith.constant 0 : i32
    return %c0_i32, %c0_i32_0 : i32, i32
  }
  func.func @transform_3(%arg0: i32) -> (i32, i32) {
    %c0_i32 = arith.constant 0 : i32
    %c0_i32_0 = arith.constant 0 : i32
    %c0_i32_1 = arith.constant 0 : i32
    return %c0_i32, %c0_i32_0 : i32, i32
  }
  func.func @transform_4(%arg0: i32) -> (i32, i32) {
    %c0_i32 = arith.constant 0 : i32
    %c0_i32_0 = arith.constant 0 : i32
    %c0_i32_1 = arith.constant 0 : i32
    return %c0_i32, %c0_i32_0 : i32, i32
  }
  func.func @transform_5(%arg0: i32) -> (i32, i32) {
    %c0_i32 = arith.constant 0 : i32
    %c0_i32_0 = arith.constant 0 : i32
    %c0_i32_1 = arith.constant 0 : i32
    return %c0_i32, %c0_i32_0 : i32, i32
  }
  func.func @transform_6(%arg0: i32) -> (i32, i32) {
    %c0_i32 = arith.constant 0 : i32
    %c0_i32_0 = arith.constant 0 : i32
    %c0_i32_1 = arith.constant 0 : i32
    return %c0_i32, %c0_i32_0 : i32, i32
  }
  func.func @transform_7(%arg0: i32) -> (i32, i32) {
    %c0_i32 = arith.constant 0 : i32
    %c0_i32_0 = arith.constant 0 : i32
    return %arg0, %c0_i32 : i32, i32
  }
  func.func @transform_8(%arg0: i32) -> (i32, i32) {
    %c0_i32 = arith.constant 0 : i32
    %c0_i32_0 = arith.constant 0 : i32
    return %arg0, %c0_i32 : i32, i32
  }
}

module attributes {stable_mosaic.version = 11 : i64} {
  func.func @_fused_linear_kernel(%arg0: i32, %arg1: memref<16x128xf32, #tpu.memory_space<vmem>>, %arg2: memref<1x128xf32, #tpu.memory_space<vmem>>, %arg3: memref<1x128xf32, #tpu.memory_space<vmem>>, %arg4: memref<128x256xbf16, #tpu.memory_space<vmem>>, %arg5: memref<1x256xf32, #tpu.memory_space<vmem>>, %arg6: memref<256x128xbf16, #tpu.memory_space<vmem>>, %arg7: memref<1x128xf32, #tpu.memory_space<vmem>>, %arg8: memref<16x128xf32, #tpu.memory_space<vmem>>, %arg9: memref<16x128xf32, #tpu.memory_space<vmem>>) attributes {dimension_semantics = [#tpu.dimension_semantics<parallel>], iteration_bounds = array<i64: 2>, scalar_prefetch = 0 : i64, scratch_operands = 0 : i64, tpu.core_type = #tpu.core_type<tc>, window_params = [{transform_indices = @transform_0, window_bounds = array<i64: 16, 128>}, {pipeline_mode = #tpu.pipeline_mode<synchronous>, transform_indices = @transform_1, window_bounds = array<i64: 1, 128>}, {pipeline_mode = #tpu.pipeline_mode<synchronous>, transform_indices = @transform_2, window_bounds = array<i64: 1, 128>}, {pipeline_mode = #tpu.pipeline_mode<synchronous>, transform_indices = @transform_3, window_bounds = array<i64: 128, 256>}, {pipeline_mode = #tpu.pipeline_mode<synchronous>, transform_indices = @transform_4, window_bounds = array<i64: 1, 256>}, {pipeline_mode = #tpu.pipeline_mode<synchronous>, transform_indices = @transform_5, window_bounds = array<i64: 256, 128>}, {pipeline_mode = #tpu.pipeline_mode<synchronous>, transform_indices = @transform_6, window_bounds = array<i64: 1, 128>}, {transform_indices = @transform_7, window_bounds = array<i64: 16, 128>}, {transform_indices = @transform_8, window_bounds = array<i64: 16, 128>}]} {
    %c0 = arith.constant 0 : index
    %c0_0 = arith.constant 0 : index
    %0 = vector.load %arg1[%c0, %c0_0] : memref<16x128xf32, #tpu.memory_space<vmem>>, vector<16x128xf32>
    %cst = arith.constant dense<0.000000e+00> : vector<16xf32>
    %1 = vector.multi_reduction <add>, %0, %cst [1] : vector<16x128xf32> to vector<16xf32>
    %2 = vector.shape_cast %1 : vector<16xf32> to vector<16x1xf32>
    %cst_1 = arith.constant 1.280000e+02 : f32
    %3 = vector.broadcast %cst_1 : f32 to vector<16x1xf32>
    %4 = arith.divf %2, %3 : vector<16x1xf32>
    %5 = vector.broadcast %4 : vector<16x1xf32> to vector<16x128xf32>
    %6 = arith.subf %0, %5 : vector<16x128xf32>
    %7 = arith.mulf %6, %6 : vector<16x128xf32>
    %cst_2 = arith.constant dense<0.000000e+00> : vector<16xf32>
    %8 = vector.multi_reduction <add>, %7, %cst_2 [1] : vector<16x128xf32> to vector<16xf32>
    %9 = vector.shape_cast %8 : vector<16xf32> to vector<16x1xf32>
    %cst_3 = arith.constant 1.280000e+02 : f32
    %10 = vector.broadcast %cst_3 : f32 to vector<16x1xf32>
    %11 = arith.divf %9, %10 : vector<16x1xf32>
    %cst_4 = arith.constant 9.99999974E-6 : f32
    %12 = vector.broadcast %cst_4 : f32 to vector<16x1xf32>
    %13 = arith.addf %11, %12 : vector<16x1xf32>
    %14 = math.rsqrt %13 : vector<16x1xf32>
    %15 = vector.broadcast %14 : vector<16x1xf32> to vector<16x128xf32>
    %16 = arith.mulf %6, %15 : vector<16x128xf32>
    %c0_5 = arith.constant 0 : index
    %c0_6 = arith.constant 0 : index
    %17 = vector.load %arg2[%c0_5, %c0_6] : memref<1x128xf32, #tpu.memory_space<vmem>>, vector<1x128xf32>
    %18 = vector.broadcast %17 : vector<1x128xf32> to vector<16x128xf32>
    %19 = arith.mulf %16, %18 : vector<16x128xf32>
    %c0_7 = arith.constant 0 : index
    %c0_8 = arith.constant 0 : index
    %20 = vector.load %arg3[%c0_7, %c0_8] : memref<1x128xf32, #tpu.memory_space<vmem>>, vector<1x128xf32>
    %21 = vector.broadcast %20 : vector<1x128xf32> to vector<16x128xf32>
    %22 = arith.addf %19, %21 : vector<16x128xf32>
    %23 = arith.truncf %22 : vector<16x128xf32> to vector<16x128xbf16>
    %c0_9 = arith.constant 0 : index
    %c0_10 = arith.constant 0 : index
    %24 = vector.load %arg4[%c0_9, %c0_10] : memref<128x256xbf16, #tpu.memory_space<vmem>>, vector<128x256xbf16>
    %cst_11 = arith.constant dense<0.000000e+00> : vector<16x256xf32>
    %25 = tpu.matmul %23, %24, %cst_11 {dimension_numbers = #tpu.dot_dimension_numbers<[1], [0], [0], [1], [0, 0, 1, 1], [], []>} : vector<16x128xbf16>, vector<128x256xbf16>, vector<16x256xf32> -> vector<16x256xf32>
    %c0_12 = arith.constant 0 : index
    %c0_13 = arith.constant 0 : index
    %26 = vector.load %arg5[%c0_12, %c0_13] : memref<1x256xf32, #tpu.memory_space<vmem>>, vector<1x256xf32>
    %27 = vector.broadcast %26 : vector<1x256xf32> to vector<16x256xf32>
    %28 = arith.addf %25, %27 : vector<16x256xf32>
    %29 = arith.mulf %28, %28 : vector<16x256xf32>
    %30 = arith.mulf %28, %29 : vector<16x256xf32>
    %cst_14 = arith.constant 4.471500e-02 : f32
    %31 = vector.broadcast %cst_14 : f32 to vector<16x256xf32>
    %32 = arith.mulf %31, %30 : vector<16x256xf32>
    %33 = arith.addf %28, %32 : vector<16x256xf32>
    %cst_15 = arith.constant 0.797884583 : f32
    %34 = vector.broadcast %cst_15 : f32 to vector<16x256xf32>
    %35 = arith.mulf %34, %33 : vector<16x256xf32>
    %36 = math.tanh %35 : vector<16x256xf32>
    %cst_16 = arith.constant 1.000000e+00 : f32
    %37 = vector.broadcast %cst_16 : f32 to vector<16x256xf32>
    %38 = arith.addf %37, %36 : vector<16x256xf32>
    %cst_17 = arith.constant 5.000000e-01 : f32
    %39 = vector.broadcast %cst_17 : f32 to vector<16x256xf32>
    %40 = arith.mulf %39, %38 : vector<16x256xf32>
    %41 = arith.mulf %28, %40 : vector<16x256xf32>
    %42 = arith.truncf %41 : vector<16x256xf32> to vector<16x256xbf16>
    %c0_18 = arith.constant 0 : index
    %c0_19 = arith.constant 0 : index
    %43 = vector.load %arg6[%c0_18, %c0_19] : memref<256x128xbf16, #tpu.memory_space<vmem>>, vector<256x128xbf16>
    %cst_20 = arith.constant dense<0.000000e+00> : vector<16x128xf32>
    %44 = tpu.matmul %42, %43, %cst_20 {dimension_numbers = #tpu.dot_dimension_numbers<[1], [0], [0], [1], [0, 0, 1, 1], [], []>} : vector<16x256xbf16>, vector<256x128xbf16>, vector<16x128xf32> -> vector<16x128xf32>
    %c0_21 = arith.constant 0 : index
    %c0_22 = arith.constant 0 : index
    %45 = vector.load %arg7[%c0_21, %c0_22] : memref<1x128xf32, #tpu.memory_space<vmem>>, vector<1x128xf32>
    %46 = vector.broadcast %45 : vector<1x128xf32> to vector<16x128xf32>
    %47 = arith.addf %44, %46 : vector<16x128xf32>
    %c0_23 = arith.constant 0 : index
    %c0_24 = arith.constant 0 : index
    %48 = vector.load %arg8[%c0_23, %c0_24] : memref<16x128xf32, #tpu.memory_space<vmem>>, vector<16x128xf32>
    %49 = arith.addf %47, %48 : vector<16x128xf32>
    %c0_25 = arith.constant 0 : index
    %c0_26 = arith.constant 0 : index
    %50 = vector.load %arg9[%c0_25, %c0_26] : memref<16x128xf32, #tpu.memory_space<vmem>>, vector<16x128xf32>
    tpu.vector_store %arg9[%c0_25, %c0_26], %49 {strides = array<i32>} : memref<16x128xf32, #tpu.memory_space<vmem>>, vector<16x128xf32>,
    return
  }
  func.func @transform_0(%arg0: i32) -> (i32, i32) {
    %c0_i32 = arith.constant 0 : i32
    %c0_i32_0 = arith.constant 0 : i32
    return %arg0, %c0_i32 : i32, i32
  }
  func.func @transform_1(%arg0: i32) -> (i32, i32) {
    %c0_i32 = arith.constant 0 : i32
    %c0_i32_0 = arith.constant 0 : i32
    %c0_i32_1 = arith.constant 0 : i32
    return %c0_i32, %c0_i32_0 : i32, i32
  }
  func.func @transform_2(%arg0: i32) -> (i32, i32) {
    %c0_i32 = arith.constant 0 : i32
    %c0_i32_0 = arith.constant 0 : i32
    %c0_i32_1 = arith.constant 0 : i32
    return %c0_i32, %c0_i32_0 : i32, i32
  }
  func.func @transform_3(%arg0: i32) -> (i32, i32) {
    %c0_i32 = arith.constant 0 : i32
    %c0_i32_0 = arith.constant 0 : i32
    %c0_i32_1 = arith.constant 0 : i32
    return %c0_i32, %c0_i32_0 : i32, i32
  }
  func.func @transform_4(%arg0: i32) -> (i32, i32) {
    %c0_i32 = arith.constant 0 : i32
    %c0_i32_0 = arith.constant 0 : i32
    %c0_i32_1 = arith.constant 0 : i32
    return %c0_i32, %c0_i32_0 : i32, i32
  }
  func.func @transform_5(%arg0: i32) -> (i32, i32) {
    %c0_i32 = arith.constant 0 : i32
    %c0_i32_0 = arith.constant 0 : i32
    %c0_i32_1 = arith.constant 0 : i32
    return %c0_i32, %c0_i32_0 : i32, i32
  }
  func.func @transform_6(%arg0: i32) -> (i32, i32) {
    %c0_i32 = arith.constant 0 : i32
    %c0_i32_0 = arith.constant 0 : i32
    %c0_i32_1 = arith.constant 0 : i32
    return %c0_i32, %c0_i32_0 : i32, i32
  }
  func.func @transform_7(%arg0: i32) -> (i32, i32) {
    %c0_i32 = arith.constant 0 : i32
    %c0_i32_0 = arith.constant 0 : i32
    return %arg0, %c0_i32 : i32, i32
  }
  func.func @transform_8(%arg0: i32) -> (i32, i32) {
    %c0_i32 = arith.constant 0 : i32
    %c0_i32_0 = arith.constant 0 : i32
    return %arg0, %c0_i32 : i32, i32
  }
}

</mosaic_0001>

<llo_original>
// kernel: vit_encoder_forward.9
$region0: #{vit_encoder_forward.9}
  #allocation0 [shape = 'u32[]', space=smem, size = 0x4, offset = 0x4, fixed_abs, tag = 'smem constant byte address 0x4 - core index']
  #allocation1 [shape = 'u32[144,128]{1,0:T(1,128)}', space=vmem, size = 0x12000, scoped, tag = 'internal scratch']
  %s0 = inlined_call_operand.vmem [shape: f32[32,64], index: 0, kind: input, shape index: {}]
  %s1 = inlined_call_operand.vmem [shape: bf16[64,128], index: 1, kind: input, shape index: {}]
  %s2 = inlined_call_operand.vmem [shape: f32[1,128], index: 2, kind: input, shape index: {}]
  %s3 = inlined_call_operand.vmem [shape: f32[32,128], index: 3, kind: output, shape index: {}]
  %s4 = sld [smem:[#allocation0]]
  $region45: #{vit_encoder_forward.9} parent=0
    _
  %s6 = ssub.s32 1, %s4
  %s7 = scalar_select 0, %s6, %s4
  loop: start=0, step=1, limit=4
  $region2: #{vit_encoder_forward.9} parent=0 // loop_pre_header
    _
  $region3: #{vit_encoder_forward.9} parent=0 // loop_header
    %s9 = sphi 0, %s13
    %p10 = scmp.ge.s32.totalorder %s9, 4
    %s19 = sphi 0, %s21
    %s22 = sphi 0, %s19
    %s23 = sphi 0, %s22
    %s39 = sphi 0, %s23
    %s43 = sphi 0, %s43
    %s45 = sphi 0, %s43
    %s46 = sphi 0, %s45
    %s60 = sphi 0, %s46
    %s64 = sphi 0, %s64
    %s66 = sphi 0, %s64
    %s67 = sphi 0, %s66
    %s81 = sphi 0, %s67
    %s87 = sphi 0, %s89
    %s90 = sphi 0, %s87
    %s91 = sphi 0, %s90
    %s107 = sphi 0, %s91
  $region4: #{vit_encoder_forward.9} parent=0 // loop_header_branch
    %12 = sbr.rel (%p10) target = $region8
  $region5: #{vit_encoder_forward.9} parent=0 // loop_body
    %s14 = ssub.s32 %s9, 1
    %s15 = ssub.s32 %s9, 2
    %s16 = sadd.s32 %s9, 1
    %s17 = ssub.s32 %s9, %s16
    %p18 = scmp.eq.s32.totalorder %s17, 0
    %s20 = sadd.s32 %s19, 1
    %s21 = scalar_select %p18, %s19, %s20
    %p24 = pneg %p18
    %p25 = scmp.eq.s32.totalorder %s9, 1
    %p26 = por %p24, %p25
    %p27 = scmp.ne.s32.totalorder %s19, %s22
    %p28 = scmp.eq.s32.totalorder %s9, 0
    %p29 = por %p27, %p28
    %p30 = scmp.ne.s32.totalorder %s19, %s22
    %p31 = scmp.eq.s32.totalorder %s14, 1
    %p32 = por %p30, %p31
    %p33 = scmp.ne.s32.totalorder %s22, %s23
    %p34 = scmp.eq.s32.totalorder %s14, 0
    %p35 = por %p33, %p34
    %p36 = scmp.ne.s32.totalorder %s22, %s23
    %p37 = scmp.eq.s32.totalorder %s15, 1
    %p38 = por %p36, %p37
    %p40 = scmp.ne.s32.totalorder %s23, %s39
    %p41 = scmp.eq.s32.totalorder %s15, 0
    %p42 = por %p40, %p41
    %s44 = sadd.s32 %s43, 1
    %p47 = scmp.eq.s32.totalorder %s9, 1
    %p48 = scmp.ne.s32.totalorder %s43, %s45
    %p49 = scmp.eq.s32.totalorder %s9, 0
    %p50 = por %p48, %p49
    %p51 = scmp.ne.s32.totalorder %s43, %s45
    %p52 = scmp.eq.s32.totalorder %s14, 1
    %p53 = por %p51, %p52
    %p54 = scmp.ne.s32.totalorder %s45, %s46
    %p55 = scmp.eq.s32.totalorder %s14, 0
    %p56 = por %p54, %p55
    %p57 = scmp.ne.s32.totalorder %s45, %s46
    %p58 = scmp.eq.s32.totalorder %s15, 1
    %p59 = por %p57, %p58
    %p61 = scmp.ne.s32.totalorder %s46, %s60
    %p62 = scmp.eq.s32.totalorder %s15, 0
    %p63 = por %p61, %p62
    %s65 = sadd.s32 %s64, 1
    %p68 = scmp.eq.s32.totalorder %s9, 1
    %p69 = scmp.ne.s32.totalorder %s64, %s66
    %p70 = scmp.eq.s32.totalorder %s9, 0
    %p71 = por %p69, %p70
    %p72 = scmp.ne.s32.totalorder %s64, %s66
    %p73 = scmp.eq.s32.totalorder %s14, 1
    %p74 = por %p72, %p73
    %p75 = scmp.ne.s32.totalorder %s66, %s67
    %p76 = scmp.eq.s32.totalorder %s14, 0
    %p77 = por %p75, %p76
    %p78 = scmp.ne.s32.totalorder %s66, %s67
    %p79 = scmp.eq.s32.totalorder %s15, 1
    %p80 = por %p78, %p79
    %p82 = scmp.ne.s32.totalorder %s67, %s81
    %p83 = scmp.eq.s32.totalorder %s15, 0
    %p84 = por %p82, %p83
    %s85 = ssub.s32 %s9, %s16
    %p86 = scmp.eq.s32.totalorder %s85, 0
    %s88 = sadd.s32 %s87, 1
    %s89 = scalar_select %p86, %s87, %s88
    %p92 = pneg %p86
    %p93 = scmp.eq.s32.totalorder %s9, 1
    %p94 = por %p92, %p93
    %p95 = scmp.ne.s32.totalorder %s87, %s90
    %p96 = scmp.eq.s32.totalorder %s9, 0
    %p97 = por %p95, %p96
    %p98 = scmp.ne.s32.totalorder %s87, %s90
    %p99 = scmp.eq.s32.totalorder %s14, 1
    %p100 = por %p98, %p99
    %p101 = scmp.ne.s32.totalorder %s90, %s91
    %p102 = scmp.eq.s32.totalorder %s14, 0
    %p103 = por %p101, %p102
    %p104 = scmp.ne.s32.totalorder %s90, %s91
    %p105 = scmp.eq.s32.totalorder %s15, 1
    %p106 = por %p104, %p105
    %p108 = scmp.ne.s32.totalorder %s91, %s107
    %p109 = scmp.eq.s32.totalorder %s15, 0
    %p110 = por %p108, %p109
    %p111 = scmp.le.s32.totalorder 1, %s9
    %p112 = scmp.lt.s32.totalorder %s9, 3
    %p113 = pnand %p111, %p112
    %p114 = pneg %p113
    // Predicated region
    $region9: #{vit_encoder_forward.9} parent=5 // pred_check
      _
    $region10: #{vit_encoder_forward.9} parent=5 // pred_check_branch
      %116 = sbr.rel (%p113) target = $region12
    $region11: #{vit_encoder_forward.9} parent=5 // pred_region
      %s117 = ssub.s32 %s9, 1
      // Predicated region
      $region13: #{vit_encoder_forward.9} parent=11 // pred_check
        %p118 = pneg %p56
      $region14: #{vit_encoder_forward.9} parent=11 // pred_check_branch
        %120 = sbr.rel (%p118) target = $region16
      $region15: #{vit_encoder_forward.9} parent=11 // pred_region
        _
      $region16: #{vit_encoder_forward.9} parent=11 // pred_fallthru
        _
      // Predicated region
      $region17: #{vit_encoder_forward.9} parent=11 // pred_check
        %p121 = pneg %p77
      $region18: #{vit_encoder_forward.9} parent=11 // pred_check_branch
        %123 = sbr.rel (%p121) target = $region20
      $region19: #{vit_encoder_forward.9} parent=11 // pred_region
        _
      $region20: #{vit_encoder_forward.9} parent=11 // pred_fallthru
        _
    $region12: #{vit_encoder_forward.9} parent=5 // pred_fallthru
      _
    %p124 = scmp.lt.s32.totalorder %s9, 2
    // Predicated region
    $region21: #{vit_encoder_forward.9} parent=5 // pred_check
      %p125 = pneg %p124
    $region22: #{vit_encoder_forward.9} parent=5 // pred_check_branch
      %127 = sbr.rel (%p125) target = $region24
    $region23: #{vit_encoder_forward.9} parent=5 // pred_region
      // Predicated region
      $region25: #{vit_encoder_forward.9} parent=23 // pred_check
        %p128 = pneg %p29
      $region26: #{vit_encoder_forward.9} parent=23 // pred_check_branch
        %130 = sbr.rel (%p128) target = $region28
      $region27: #{vit_encoder_forward.9} parent=23 // pred_region
        %s131 = smul.u32 2, %s9
        %p132 = scmp.lt.s32.totalorder %s131, 3
        %s133 = scalar_select %p132, %s131, 3
        %s134 = smul.addr %s133, 8
        %s135 = scalar_lea.vmem %s0, %s134
        %s136 = smul.u32 2, %s9
      $region28: #{vit_encoder_forward.9} parent=23 // pred_fallthru
        _
    $region24: #{vit_encoder_forward.9} parent=5 // pred_fallthru
      _
    %p137 = scmp.le.s32.totalorder 1, %s9
    %p138 = scmp.lt.s32.totalorder %s9, 3
    %p139 = pnand %p137, %p138
    %p140 = pneg %p139
    // Predicated region
    $region29: #{vit_encoder_forward.9} parent=5 // pred_check
      _
    $region30: #{vit_encoder_forward.9} parent=5 // pred_check_branch
      %142 = sbr.rel (%p139) target = $region32
    $region31: #{vit_encoder_forward.9} parent=5 // pred_region
      %s143 = ssub.s32 %s9, 1
      %s144 = smul.u32 2, %s14
      %p145 = scmp.lt.s32.totalorder %s144, 3
      %s146 = scalar_select %p145, %s144, 3
      %s147 = smul.addr %s146, 8
      %s148 = scalar_lea.vmem %s0, %s147
      %p149 = pneg %p35
      %p150 = pneg %p32
      %p151 = pneg %p56
      %p152 = pneg %p53
      %p153 = pneg %p77
      %p154 = pneg %p74
      %p155 = pneg %p103
      %p156 = pneg %p100
      %s157 = smul.u32 2, %s14
      %p158 = scmp.lt.s32.totalorder %s157, 3
      %s159 = scalar_select %p158, %s157, 3
      %s160 = smul.addr %s159, 8
      %s161 = scalar_lea.vmem %s3, %s160
      %s162 = smul.u32 2, %s14
      %p163 = scmp.lt.s32.totalorder %s162, 3
      %s164 = scalar_select %p163, %s162, 3
      %s165 = smul.addr %s164, 8
      %s166 = scalar_lea.vmem %s0, %s165
      %s167 = smul.u32 2, %s14
      %s168 = smul.u32 2, %s14
      %p169 = scmp.lt.s32.totalorder %s168, 3
      %s170 = scalar_select %p169, %s168, 3
      %s171 = smul.addr %s170, 8
      %s172 = scalar_lea.vmem %s3, %s171
      %s173 = smul.u32 2, %s14
      %v175 = vld [vmem:[%s166] sm:$0xff]
      %v176 = vld [vmem:[%s166 + $0x8] sm:$0xff]
      %v177 = vpack.c.bf16 %v176, %v175
      %v178 = vld [vmem:[%s1] sm:$0xf]
      %v179 = vld [vmem:[%s1 + $0x4] sm:$0xf]
      %v180 = vld [vmem:[%s1 + $0x8] sm:$0xf]
      %v181 = vld [vmem:[%s1 + $0xc] sm:$0xf]
      %v182 = vld [vmem:[%s1 + $0x10] sm:$0xf]
      %v183 = vld [vmem:[%s1 + $0x14] sm:$0xf]
      %v184 = vld [vmem:[%s1 + $0x18] sm:$0xf]
      %v185 = vld [vmem:[%s1 + $0x1c] sm:$0xf]
      %v186 = vld [vmem:[%s2] sm:$0x1]
      %v188 = vlaneseq
      %v189 = vshrl.u32 %v188, 7
      %v190 = vsub.s32 0, %v189
      %v191 = vrot.slane %v186, %v190
      %v201 = vunpack.c.l.b16 %v178
      %v202 = vunpack.c.l.b16 %v179
      %v203 = vunpack.c.l.b16 %v180
      %v204 = vunpack.c.l.b16 %v181
      %v205 = vunpack.c.l.b16 %v182
      %v206 = vunpack.c.l.b16 %v183
      %v207 = vunpack.c.l.b16 %v184
      %v208 = vunpack.c.l.b16 %v185
      %v209 = vpack.c.b16 %v202, %v201
      %v210 = vpack.c.b16 %v204, %v203
      %v211 = vpack.c.b16 %v206, %v205
      %v212 = vpack.c.b16 %v208, %v207
      %vm217 = vcmask 523264
      %v219 = vsel %vm217, %v177, 0
      %221 = vmatprep.subr.bf16.mxu0 0
      %222 = vmatpush1.bf16.msra.mxu0 %v209
      %223 = vmatprep.subr.bf16.mxu0 0
      %224 = vmatpush1.bf16.msra.mxu0 %v210
      %225 = vmatprep.subr.bf16.mxu0 0
      %226 = vmatpush1.bf16.msra.mxu0 %v211
      %227 = vmatprep.subr.bf16.mxu0 0
      %228 = vmatpush1.bf16.msra.mxu0 %v212
      %229 = vmatprep.subr.bf16.mxu0 0
      %230 = vmatpush1.bf16.msra.mxu0 0
      %231 = vmatprep.subr.bf16.mxu0 0
      %232 = vmatpush1.bf16.msra.mxu0 0
      %233 = vmatprep.subr.bf16.mxu0 0
      %234 = vmatpush1.bf16.msra.mxu0 0
      %235 = vmatprep.subr.bf16.mxu0 0
      %236 = vmatpush1.bf16.msra.mxu0 0
      %237 = vmatprep.subr.bf16.mxu0 0
      %238 = vmatpush1.bf16.msra.mxu0 0
      %239 = vmatprep.subr.bf16.mxu0 0
      %240 = vmatpush1.bf16.msra.mxu0 0
      %241 = vmatprep.subr.bf16.mxu0 0
      %242 = vmatpush1.bf16.msra.mxu0 0
      %243 = vmatprep.subr.bf16.mxu0 0
      %244 = vmatpush1.bf16.msra.mxu0 0
      %245 = vmatprep.subr.bf16.mxu0 0
      %246 = vmatpush1.bf16.msra.mxu0 0
      %247 = vmatprep.subr.bf16.mxu0 0
      %248 = vmatpush1.bf16.msra.mxu0 0
      %249 = vmatprep.subr.bf16.mxu0 0
      %250 = vmatpush1.bf16.msra.mxu0 0
      %251 = vmatprep.subr.bf16.mxu0 0
      %252 = vmatpush1.bf16.msra.mxu0 0
      %253 = vmatprep.mubr.bf16.mxu0 0
      %254 = vmatmul.mubr.bf16.gmra.mrb[0].mxu0 %v219
      %v255 = vpop.f32.mrb[0].mxu0
      %v256 = vadd.f32 %v191, %v255
      %v257 = vpop.f32.mrb[0].mxu0
      %v258 = vpop.f32.mrb[0].mxu0
      %v259 = vadd.f32 %v191, %v258
      %v260 = vpop.f32.mrb[0].mxu0
      %261 = vdwg.mxu0
      %262 = vst [vmem:[%s172] sm:$0xff] %v256
      %263 = vst [vmem:[%s172 + $0x8] sm:$0xff] %v259
      %s264 = smul.u32 2, %s14
      %p265 = scmp.lt.s32.totalorder %s264, 3
      %s266 = scalar_select %p265, %s264, 3
      %s267 = smul.addr %s266, 8
      %s268 = scalar_lea.vmem %s3, %s267
      // Predicated region
      $region33: #{vit_encoder_forward.9} parent=31 // pred_check
        %p269 = pneg %p100
      $region34: #{vit_encoder_forward.9} parent=31 // pred_check_branch
        %271 = sbr.rel (%p269) target = $region36
      $region35: #{vit_encoder_forward.9} parent=31 // pred_region
        %s272 = smul.u32 2, %s14
      $region36: #{vit_encoder_forward.9} parent=31 // pred_fallthru
        _
    $region32: #{vit_encoder_forward.9} parent=5 // pred_fallthru
      _
    %p273 = scmp.le.s32.totalorder 2, %s9
    // Predicated region
    $region37: #{vit_encoder_forward.9} parent=5 // pred_check
      %p274 = pneg %p273
    $region38: #{vit_encoder_forward.9} parent=5 // pred_check_branch
      %276 = sbr.rel (%p274) target = $region40
    $region39: #{vit_encoder_forward.9} parent=5 // pred_region
      %s277 = ssub.s32 %s9, 2
      // Predicated region
      $region41: #{vit_encoder_forward.9} parent=39 // pred_check
        %p278 = pneg %p106
      $region42: #{vit_encoder_forward.9} parent=39 // pred_check_branch
        %280 = sbr.rel (%p278) target = $region44
      $region43: #{vit_encoder_forward.9} parent=39 // pred_region
        %s281 = smul.u32 2, %s15
        %p282 = scmp.lt.s32.totalorder %s281, 3
        %s283 = scalar_select %p282, %s281, 3
        %s284 = smul.addr %s283, 8
        %s285 = scalar_lea.vmem %s3, %s284
      $region44: #{vit_encoder_forward.9} parent=39 // pred_fallthru
        _
    $region40: #{vit_encoder_forward.9} parent=5 // pred_fallthru
      _
  $region6: #{vit_encoder_forward.9} parent=0 // loop_footer
    %s13 = sadd.s32 1, %s9
  $region7: #{vit_encoder_forward.9} parent=0 // loop_footer_branch
    %8 = sbr.rel target = $region3
  $region8: #{vit_encoder_forward.9} parent=0 // loop_exit
    _

// kernel: vit_encoder_forward.10
$region0: #{vit_encoder_forward.10}
  #allocation0 [shape = 'u32[]', space=smem, size = 0x4, offset = 0x4, fixed_abs, tag = 'smem constant byte address 0x4 - core index']
  #allocation1 [shape = 'u32[144,128]{1,0:T(1,128)}', space=vmem, size = 0x12000, scoped, tag = 'internal scratch']
  %s0 = inlined_call_operand.vmem [shape: f32[32,128], index: 0, kind: input, shape index: {}]
  %s1 = inlined_call_operand.vmem [shape: f32[1,128], index: 1, kind: input, shape index: {}]
  %s2 = inlined_call_operand.vmem [shape: f32[1,128], index: 2, kind: input, shape index: {}]
  %s3 = inlined_call_operand.vmem [shape: bf16[128,384], index: 3, kind: input, shape index: {}]
  %s4 = inlined_call_operand.vmem [shape: f32[1,384], index: 4, kind: input, shape index: {}]
  %s5 = inlined_call_operand.vmem [shape: f32[32,384], index: 5, kind: output, shape index: {}]
  %s6 = sld [smem:[#allocation0]]
  $region53: #{vit_encoder_forward.10} parent=0
    _
  %s8 = ssub.s32 1, %s6
  %s9 = scalar_select 0, %s8, %s6
  loop: start=0, step=1, limit=4
  $region2: #{vit_encoder_forward.10} parent=0 // loop_pre_header
    _
  $region3: #{vit_encoder_forward.10} parent=0 // loop_header
    %s11 = sphi 0, %s15
    %p12 = scmp.ge.s32.totalorder %s11, 4
    %s21 = sphi 0, %s23
    %s24 = sphi 0, %s21
    %s25 = sphi 0, %s24
    %s41 = sphi 0, %s25
    %s45 = sphi 0, %s45
    %s47 = sphi 0, %s45
    %s48 = sphi 0, %s47
    %s62 = sphi 0, %s48
    %s66 = sphi 0, %s66
    %s68 = sphi 0, %s66
    %s69 = sphi 0, %s68
    %s83 = sphi 0, %s69
    %s87 = sphi 0, %s87
    %s89 = sphi 0, %s87
    %s90 = sphi 0, %s89
    %s104 = sphi 0, %s90
    %s108 = sphi 0, %s108
    %s110 = sphi 0, %s108
    %s111 = sphi 0, %s110
    %s125 = sphi 0, %s111
    %s131 = sphi 0, %s133
    %s134 = sphi 0, %s131
    %s135 = sphi 0, %s134
    %s151 = sphi 0, %s135
  $region4: #{vit_encoder_forward.10} parent=0 // loop_header_branch
    %14 = sbr.rel (%p12) target = $region8
  $region5: #{vit_encoder_forward.10} parent=0 // loop_body
    %s16 = ssub.s32 %s11, 1
    %s17 = ssub.s32 %s11, 2
    %s18 = sadd.s32 %s11, 1
    %s19 = ssub.s32 %s11, %s18
    %p20 = scmp.eq.s32.totalorder %s19, 0
    %s22 = sadd.s32 %s21, 1
    %s23 = scalar_select %p20, %s21, %s22
    %p26 = pneg %p20
    %p27 = scmp.eq.s32.totalorder %s11, 1
    %p28 = por %p26, %p27
    %p29 = scmp.ne.s32.totalorder %s21, %s24
    %p30 = scmp.eq.s32.totalorder %s11, 0
    %p31 = por %p29, %p30
    %p32 = scmp.ne.s32.totalorder %s21, %s24
    %p33 = scmp.eq.s32.totalorder %s16, 1
    %p34 = por %p32, %p33
    %p35 = scmp.ne.s32.totalorder %s24, %s25
    %p36 = scmp.eq.s32.totalorder %s16, 0
    %p37 = por %p35, %p36
    %p38 = scmp.ne.s32.totalorder %s24, %s25
    %p39 = scmp.eq.s32.totalorder %s17, 1
    %p40 = por %p38, %p39
    %p42 = scmp.ne.s32.totalorder %s25, %s41
    %p43 = scmp.eq.s32.totalorder %s17, 0
    %p44 = por %p42, %p43
    %s46 = sadd.s32 %s45, 1
    %p49 = scmp.eq.s32.totalorder %s11, 1
    %p50 = scmp.ne.s32.totalorder %s45, %s47
    %p51 = scmp.eq.s32.totalorder %s11, 0
    %p52 = por %p50, %p51
    %p53 = scmp.ne.s32.totalorder %s45, %s47
    %p54 = scmp.eq.s32.totalorder %s16, 1
    %p55 = por %p53, %p54
    %p56 = scmp.ne.s32.totalorder %s47, %s48
    %p57 = scmp.eq.s32.totalorder %s16, 0
    %p58 = por %p56, %p57
    %p59 = scmp.ne.s32.totalorder %s47, %s48
    %p60 = scmp.eq.s32.totalorder %s17, 1
    %p61 = por %p59, %p60
    %p63 = scmp.ne.s32.totalorder %s48, %s62
    %p64 = scmp.eq.s32.totalorder %s17, 0
    %p65 = por %p63, %p64
    %s67 = sadd.s32 %s66, 1
    %p70 = scmp.eq.s32.totalorder %s11, 1
    %p71 = scmp.ne.s32.totalorder %s66, %s68
    %p72 = scmp.eq.s32.totalorder %s11, 0
    %p73 = por %p71, %p72
    %p74 = scmp.ne.s32.totalorder %s66, %s68
    %p75 = scmp.eq.s32.totalorder %s16, 1
    %p76 = por %p74, %p75
    %p77 = scmp.ne.s32.totalorder %s68, %s69
    %p78 = scmp.eq.s32.totalorder %s16, 0
    %p79 = por %p77, %p78
    %p80 = scmp.ne.s32.totalorder %s68, %s69
    %p81 = scmp.eq.s32.totalorder %s17, 1
    %p82 = por %p80, %p81
    %p84 = scmp.ne.s32.totalorder %s69, %s83
    %p85 = scmp.eq.s32.totalorder %s17, 0
    %p86 = por %p84, %p85
    %s88 = sadd.s32 %s87, 1
    %p91 = scmp.eq.s32.totalorder %s11, 1
    %p92 = scmp.ne.s32.totalorder %s87, %s89
    %p93 = scmp.eq.s32.totalorder %s11, 0
    %p94 = por %p92, %p93
    %p95 = scmp.ne.s32.totalorder %s87, %s89
    %p96 = scmp.eq.s32.totalorder %s16, 1
    %p97 = por %p95, %p96
    %p98 = scmp.ne.s32.totalorder %s89, %s90
    %p99 = scmp.eq.s32.totalorder %s16, 0
    %p100 = por %p98, %p99
    %p101 = scmp.ne.s32.totalorder %s89, %s90
    %p102 = scmp.eq.s32.totalorder %s17, 1
    %p103 = por %p101, %p102
    %p105 = scmp.ne.s32.totalorder %s90, %s104
    %p106 = scmp.eq.s32.totalorder %s17, 0
    %p107 = por %p105, %p106
    %s109 = sadd.s32 %s108, 1
    %p112 = scmp.eq.s32.totalorder %s11, 1
    %p113 = scmp.ne.s32.totalorder %s108, %s110
    %p114 = scmp.eq.s32.totalorder %s11, 0
    %p115 = por %p113, %p114
    %p116 = scmp.ne.s32.totalorder %s108, %s110
    %p117 = scmp.eq.s32.totalorder %s16, 1
    %p118 = por %p116, %p117
    %p119 = scmp.ne.s32.totalorder %s110, %s111
    %p120 = scmp.eq.s32.totalorder %s16, 0
    %p121 = por %p119, %p120
    %p122 = scmp.ne.s32.totalorder %s110, %s111
    %p123 = scmp.eq.s32.totalorder %s17, 1
    %p124 = por %p122, %p123
    %p126 = scmp.ne.s32.totalorder %s111, %s125
    %p127 = scmp.eq.s32.totalorder %s17, 0
    %p128 = por %p126, %p127
    %s129 = ssub.s32 %s11, %s18
    %p130 = scmp.eq.s32.totalorder %s129, 0
    %s132 = sadd.s32 %s131, 1
    %s133 = scalar_select %p130, %s131, %s132
    %p136 = pneg %p130
    %p137 = scmp.eq.s32.totalorder %s11, 1
    %p138 = por %p136, %p137
    %p139 = scmp.ne.s32.totalorder %s131, %s134
    %p140 = scmp.eq.s32.totalorder %s11, 0
    %p141 = por %p139, %p140
    %p142 = scmp.ne.s32.totalorder %s131, %s134
    %p143 = scmp.eq.s32.totalorder %s16, 1
    %p144 = por %p142, %p143
    %p145 = scmp.ne.s32.totalorder %s134, %s135
    %p146 = scmp.eq.s32.totalorder %s16, 0
    %p147 = por %p145, %p146
    %p148 = scmp.ne.s32.totalorder %s134, %s135
    %p149 = scmp.eq.s32.totalorder %s17, 1
    %p150 = por %p148, %p149
    %p152 = scmp.ne.s32.totalorder %s135, %s151
    %p153 = scmp.eq.s32.totalorder %s17, 0
    %p154 = por %p152, %p153
    %p155 = scmp.le.s32.totalorder 1, %s11
    %p156 = scmp.lt.s32.totalorder %s11, 3
    %p157 = pnand %p155, %p156
    %p158 = pneg %p157
    // Predicated region
    $region9: #{vit_encoder_forward.10} parent=5 // pred_check
      _
    $region10: #{vit_encoder_forward.10} parent=5 // pred_check_branch
      %160 = sbr.rel (%p157) target = $region12
    $region11: #{vit_encoder_forward.10} parent=5 // pred_region
      %s161 = ssub.s32 %s11, 1
      // Predicated region
      $region13: #{vit_encoder_forward.10} parent=11 // pred_check
        %p162 = pneg %p58
      $region14: #{vit_encoder_forward.10} parent=11 // pred_check_branch
        %164 = sbr.rel (%p162) target = $region16
      $region15: #{vit_encoder_forward.10} parent=11 // pred_region
        _
      $region16: #{vit_encoder_forward.10} parent=11 // pred_fallthru
        _
      // Predicated region
      $region17: #{vit_encoder_forward.10} parent=11 // pred_check
        %p165 = pneg %p79
      $region18: #{vit_encoder_forward.10} parent=11 // pred_check_branch
        %167 = sbr.rel (%p165) target = $region20
      $region19: #{vit_encoder_forward.10} parent=11 // pred_region
        _
      $region20: #{vit_encoder_forward.10} parent=11 // pred_fallthru
        _
      // Predicated region
      $region21: #{vit_encoder_forward.10} parent=11 // pred_check
        %p168 = pneg %p100
      $region22: #{vit_encoder_forward.10} parent=11 // pred_check_branch
        %170 = sbr.rel (%p168) target = $region24
      $region23: #{vit_encoder_forward.10} parent=11 // pred_region
        _
      $region24: #{vit_encoder_forward.10} parent=11 // pred_fallthru
        _
      // Predicated region
      $region25: #{vit_encoder_forward.10} parent=11 // pred_check
        %p171 = pneg %p121
      $region26: #{vit_encoder_forward.10} parent=11 // pred_check_branch
        %173 = sbr.rel (%p171) target = $region28
      $region27: #{vit_encoder_forward.10} parent=11 // pred_region
        _
      $region28: #{vit_encoder_forward.10} parent=11 // pred_fallthru
        _
    $region12: #{vit_encoder_forward.10} parent=5 // pred_fallthru
      _
    %p174 = scmp.lt.s32.totalorder %s11, 2
    // Predicated region
    $region29: #{vit_encoder_forward.10} parent=5 // pred_check
      %p175 = pneg %p174
    $region30: #{vit_encoder_forward.10} parent=5 // pred_check_branch
      %177 = sbr.rel (%p175) target = $region32
    $region31: #{vit_encoder_forward.10} parent=5 // pred_region
      // Predicated region
      $region33: #{vit_encoder_forward.10} parent=31 // pred_check
        %p178 = pneg %p31
      $region34: #{vit_encoder_forward.10} parent=31 // pred_check_branch
        %180 = sbr.rel (%p178) target = $region36
      $region35: #{vit_encoder_forward.10} parent=31 // pred_region
        %s181 = smul.u32 2, %s11
        %p182 = scmp.lt.s32.totalorder %s181, 3
        %s183 = scalar_select %p182, %s181, 3
        %s184 = smul.addr %s183, 8
        %s185 = scalar_lea.vmem %s0, %s184
        %s186 = smul.u32 2, %s11
      $region36: #{vit_encoder_forward.10} parent=31 // pred_fallthru
        _
    $region32: #{vit_encoder_forward.10} parent=5 // pred_fallthru
      _
    %p187 = scmp.le.s32.totalorder 1, %s11
    %p188 = scmp.lt.s32.totalorder %s11, 3
    %p189 = pnand %p187, %p188
    %p190 = pneg %p189
    // Predicated region
    $region37: #{vit_encoder_forward.10} parent=5 // pred_check
      _
    $region38: #{vit_encoder_forward.10} parent=5 // pred_check_branch
      %192 = sbr.rel (%p189) target = $region40
    $region39: #{vit_encoder_forward.10} parent=5 // pred_region
      %s193 = ssub.s32 %s11, 1
      %s194 = smul.u32 2, %s16
      %p195 = scmp.lt.s32.totalorder %s194, 3
      %s196 = scalar_select %p195, %s194, 3
      %s197 = smul.addr %s196, 8
      %s198 = scalar_lea.vmem %s0, %s197
      %p199 = pneg %p37
      %p200 = pneg %p34
      %p201 = pneg %p58
      %p202 = pneg %p55
      %p203 = pneg %p79
      %p204 = pneg %p76
      %p205 = pneg %p100
      %p206 = pneg %p97
      %p207 = pneg %p121
      %p208 = pneg %p118
      %p209 = pneg %p147
      %p210 = pneg %p144
      %s211 = smul.u32 2, %s16
      %p212 = scmp.lt.s32.totalorder %s211, 3
      %s213 = scalar_select %p212, %s211, 3
      %s214 = smul.addr %s213, 3
      %s215 = smul.addr %s214, 8
      %s216 = scalar_lea.vmem %s5, %s215
      %s217 = smul.u32 2, %s16
      %p218 = scmp.lt.s32.totalorder %s217, 3
      %s219 = scalar_select %p218, %s217, 3
      %s220 = smul.addr %s219, 8
      %s221 = scalar_lea.vmem %s0, %s220
      %s222 = smul.u32 2, %s16
      %s223 = smul.u32 2, %s16
      %p224 = scmp.lt.s32.totalorder %s223, 3
      %s225 = scalar_select %p224, %s223, 3
      %s226 = smul.addr %s225, 3
      %s227 = smul.addr %s226, 8
      %s228 = scalar_lea.vmem %s5, %s227
      %s229 = smul.u32 2, %s16
      %v231 = vld [vmem:[%s221] sm:$0xff]
      %v232 = vld [vmem:[%s221 + $0x8] sm:$0xff]
      %233 = vadd.xlane.f32.xlu0 %v231
      %v234 = vpop.xlane.xlu0 %233
      %235 = vadd.xlane.f32.xlu0 %v232
      %v236 = vpop.xlane.xlu0 %235
      %v237 = vrcp.pop 128.0
      %v238 = vmul.f32 %v234, %v237
      %v239 = vmul.f32 %v236, %v237
      %v240 = vsub.f32 %v231, %v238
      %v241 = vsub.f32 %v232, %v239
      %v242 = vmul.f32 %v240, %v240
      %v243 = vmul.f32 %v241, %v241
      %244 = vadd.xlane.f32.xlu0 %v242
      %v245 = vpop.xlane.xlu0 %244
      %246 = vadd.xlane.f32.xlu0 %v243
      %v247 = vpop.xlane.xlu0 %246
      %v248 = vmul.f32 %v245, %v237
      %v249 = vmul.f32 %v247, %v237
      %v250 = vadd.f32 %v248, 1e-05
      %v251 = vadd.f32 %v249, 1e-05
      %v252 = vrsqrt.pop %v250
      %v253 = vrsqrt.pop %v251
      %v254 = vmul.f32 %v240, %v252
      %v255 = vmul.f32 %v241, %v253
      %v256 = vld [vmem:[%s1] sm:$0x1]
      %v258 = vlaneseq
      %v259 = vshrl.u32 %v258, 7
      %v260 = vsub.s32 0, %v259
      %v261 = vrot.slane %v256, %v260
      %v263 = vmul.f32 %v254, %v261
      %v264 = vmul.f32 %v255, %v261
      %v265 = vld [vmem:[%s2] sm:$0x1]
      %v267 = vlaneseq
      %v268 = vshrl.u32 %v267, 7
      %v269 = vsub.s32 0, %v268
      %v270 = vrot.slane %v265, %v269
      %v272 = vadd.f32 %v263, %v270
      %v273 = vadd.f32 %v264, %v270
      %v274 = vpack.c.bf16 %v273, %v272
      %v275 = vld [vmem:[%s3] sm:$0xff]
      %v276 = vld [vmem:[%s3 + $0x8] sm:$0xf]
      %v277 = vld [vmem:[%s3 + $0xc] sm:$0xff]
      %v278 = vld [vmem:[%s3 + $0x14] sm:$0xf]
      %v279 = vld [vmem:[%s3 + $0x18] sm:$0xff]
      %v280 = vld [vmem:[%s3 + $0x20] sm:$0xf]
      %v281 = vld [vmem:[%s3 + $0x24] sm:$0xff]
      %v282 = vld [vmem:[%s3 + $0x2c] sm:$0xf]
      %v283 = vld [vmem:[%s3 + $0x30] sm:$0xff]
      %v284 = vld [vmem:[%s3 + $0x38] sm:$0xf]
      %v285 = vld [vmem:[%s3 + $0x3c] sm:$0xff]
      %v286 = vld [vmem:[%s3 + $0x44] sm:$0xf]
      %v287 = vld [vmem:[%s3 + $0x48] sm:$0xff]
      %v288 = vld [vmem:[%s3 + $0x50] sm:$0xf]
      %v289 = vld [vmem:[%s3 + $0x54] sm:$0xff]
      %v290 = vld [vmem:[%s3 + $0x5c] sm:$0xf]
      %v291 = vld [vmem:[%s3 + $0x60] sm:$0xff]
      %v292 = vld [vmem:[%s3 + $0x68] sm:$0xf]
      %v293 = vld [vmem:[%s3 + $0x6c] sm:$0xff]
      %v294 = vld [vmem:[%s3 + $0x74] sm:$0xf]
      %v295 = vld [vmem:[%s3 + $0x78] sm:$0xff]
      %v296 = vld [vmem:[%s3 + $0x80] sm:$0xf]
      %v297 = vld [vmem:[%s3 + $0x84] sm:$0xff]
      %v298 = vld [vmem:[%s3 + $0x8c] sm:$0xf]
      %v299 = vld [vmem:[%s3 + $0x90] sm:$0xff]
      %v300 = vld [vmem:[%s3 + $0x98] sm:$0xf]
      %v301 = vld [vmem:[%s3 + $0x9c] sm:$0xff]
      %v302 = vld [vmem:[%s3 + $0xa4] sm:$0xf]
      %v303 = vld [vmem:[%s3 + $0xa8] sm:$0xff]
      %v304 = vld [vmem:[%s3 + $0xb0] sm:$0xf]
      %v305 = vld [vmem:[%s3 + $0xb4] sm:$0xff]
      %v306 = vld [vmem:[%s3 + $0xbc] sm:$0xf]
      %v307 = vld [vmem:[%s4] sm:$0x7]
      %v309 = vlaneseq
      %v310 = vshrl.u32 %v309, 7
      %v311 = vsub.s32 0, %v310
      %v312 = vrot.slane %v307, %v311
      %v313 = vlaneseq
      %v314 = vshrl.u32 %v313, 7
      %v315 = vsub.s32 1, %v314
      %v316 = vrot.slane %v307, %v315
      %v317 = vlaneseq
      %v318 = vshrl.u32 %v317, 7
      %v319 = vsub.s32 2, %v318
      %v320 = vrot.slane %v307, %v319
      %v356 = vunpack.c.l.b16 %v275
      %v357 = vunpack.c.h.b16 %v275
      %v358 = vunpack.c.l.b16 %v276
      %v359 = vunpack.c.l.b16 %v277
      %v360 = vunpack.c.h.b16 %v277
      %v361 = vunpack.c.l.b16 %v278
      %v362 = vunpack.c.l.b16 %v279
      %v363 = vunpack.c.h.b16 %v279
      %v364 = vunpack.c.l.b16 %v280
      %v365 = vunpack.c.l.b16 %v281
      %v366 = vunpack.c.h.b16 %v281
      %v367 = vunpack.c.l.b16 %v282
      %v368 = vunpack.c.l.b16 %v283
      %v369 = vunpack.c.h.b16 %v283
      %v370 = vunpack.c.l.b16 %v284
      %v371 = vunpack.c.l.b16 %v285
      %v372 = vunpack.c.h.b16 %v285
      %v373 = vunpack.c.l.b16 %v286
      %v374 = vunpack.c.l.b16 %v287
      %v375 = vunpack.c.h.b16 %v287
      %v376 = vunpack.c.l.b16 %v288
      %v377 = vunpack.c.l.b16 %v289
      %v378 = vunpack.c.h.b16 %v289
      %v379 = vunpack.c.l.b16 %v290
      %v380 = vunpack.c.l.b16 %v291
      %v381 = vunpack.c.h.b16 %v291
      %v382 = vunpack.c.l.b16 %v292
      %v383 = vunpack.c.l.b16 %v293
      %v384 = vunpack.c.h.b16 %v293
      %v385 = vunpack.c.l.b16 %v294
      %v386 = vunpack.c.l.b16 %v295
      %v387 = vunpack.c.h.b16 %v295
      %v388 = vunpack.c.l.b16 %v296
      %v389 = vunpack.c.l.b16 %v297
      %v390 = vunpack.c.h.b16 %v297
      %v391 = vunpack.c.l.b16 %v298
      %v392 = vunpack.c.l.b16 %v299
      %v393 = vunpack.c.h.b16 %v299
      %v394 = vunpack.c.l.b16 %v300
      %v395 = vunpack.c.l.b16 %v301
      %v396 = vunpack.c.h.b16 %v301
      %v397 = vunpack.c.l.b16 %v302
      %v398 = vunpack.c.l.b16 %v303
      %v399 = vunpack.c.h.b16 %v303
      %v400 = vunpack.c.l.b16 %v304
      %v401 = vunpack.c.l.b16 %v305
      %v402 = vunpack.c.h.b16 %v305
      %v403 = vunpack.c.l.b16 %v306
      %v404 = vpack.c.b16 %v359, %v356
      %v405 = vpack.c.b16 %v360, %v357
      %v406 = vpack.c.b16 %v361, %v358
      %v407 = vpack.c.b16 %v365, %v362
      %v408 = vpack.c.b16 %v366, %v363
      %v409 = vpack.c.b16 %v367, %v364
      %v410 = vpack.c.b16 %v371, %v368
      %v411 = vpack.c.b16 %v372, %v369
      %v412 = vpack.c.b16 %v373, %v370
      %v413 = vpack.c.b16 %v377, %v374
      %v414 = vpack.c.b16 %v378, %v375
      %v415 = vpack.c.b16 %v379, %v376
      %v416 = vpack.c.b16 %v383, %v380
      %v417 = vpack.c.b16 %v384, %v381
      %v418 = vpack.c.b16 %v385, %v382
      %v419 = vpack.c.b16 %v389, %v386
      %v420 = vpack.c.b16 %v390, %v387
      %v421 = vpack.c.b16 %v391, %v388
      %v422 = vpack.c.b16 %v395, %v392
      %v423 = vpack.c.b16 %v396, %v393
      %v424 = vpack.c.b16 %v397, %v394
      %v425 = vpack.c.b16 %v401, %v398
      %v426 = vpack.c.b16 %v402, %v399
      %v427 = vpack.c.b16 %v403, %v400
      %452 = vmatprep.subr.bf16.mxu0 %v405
      %453 = vmatpush1.bf16.msra.mxu0 %v404
      %454 = vmatprep.subr.bf16.mxu0 %v408
      %455 = vmatpush1.bf16.msra.mxu0 %v407
      %456 = vmatprep.subr.bf16.mxu0 %v411
      %457 = vmatpush1.bf16.msra.mxu0 %v410
      %458 = vmatprep.subr.bf16.mxu0 %v414
      %459 = vmatpush1.bf16.msra.mxu0 %v413
      %460 = vmatprep.subr.bf16.mxu0 %v417
      %461 = vmatpush1.bf16.msra.mxu0 %v416
      %462 = vmatprep.subr.bf16.mxu0 %v420
      %463 = vmatpush1.bf16.msra.mxu0 %v419
      %464 = vmatprep.subr.bf16.mxu0 %v423
      %465 = vmatpush1.bf16.msra.mxu0 %v422
      %466 = vmatprep.subr.bf16.mxu0 %v426
      %467 = vmatpush1.bf16.msra.mxu0 %v425
      %468 = vmatprep.subr.bf16.mxu0 0
      %469 = vmatpush1.bf16.msra.mxu0 0
      %470 = vmatprep.subr.bf16.mxu0 0
      %471 = vmatpush1.bf16.msra.mxu0 0
      %472 = vmatprep.subr.bf16.mxu0 0
      %473 = vmatpush1.bf16.msra.mxu0 0
      %474 = vmatprep.subr.bf16.mxu0 0
      %475 = vmatpush1.bf16.msra.mxu0 0
      %476 = vmatprep.subr.bf16.mxu0 0
      %477 = vmatpush1.bf16.msra.mxu0 0
      %478 = vmatprep.subr.bf16.mxu0 0
      %479 = vmatpush1.bf16.msra.mxu0 0
      %480 = vmatprep.subr.bf16.mxu0 0
      %481 = vmatpush1.bf16.msra.mxu0 0
      %482 = vmatprep.subr.bf16.mxu0 0
      %483 = vmatpush1.bf16.msra.mxu0 0
      %484 = vmatprep.mubr.bf16.mxu0 0
      %485 = vmatmul.mubr.bf16.gmra.mrb[0].mxu0 %v274
      %v486 = vpop.f32.mrb[0].mxu0
      %v487 = vadd.f32 %v312, %v486
      %v488 = vpop.f32.mrb[0].mxu0
      %v489 = vadd.f32 %v316, %v488
      %v490 = vpop.f32.mrb[0].mxu0
      %v491 = vadd.f32 %v312, %v490
      %v492 = vpop.f32.mrb[0].mxu0
      %v493 = vadd.f32 %v316, %v492
      %494 = vdwg.mxu0
      %495 = vmatprep.subr.bf16.mxu0 0
      %496 = vmatpush1.bf16.msra.mxu0 %v406
      %497 = vmatprep.subr.bf16.mxu0 0
      %498 = vmatpush1.bf16.msra.mxu0 %v409
      %499 = vmatprep.subr.bf16.mxu0 0
      %500 = vmatpush1.bf16.msra.mxu0 %v412
      %501 = vmatprep.subr.bf16.mxu0 0
      %502 = vmatpush1.bf16.msra.mxu0 %v415
      %503 = vmatprep.subr.bf16.mxu0 0
      %504 = vmatpush1.bf16.msra.mxu0 %v418
      %505 = vmatprep.subr.bf16.mxu0 0
      %506 = vmatpush1.bf16.msra.mxu0 %v421
      %507 = vmatprep.subr.bf16.mxu0 0
      %508 = vmatpush1.bf16.msra.mxu0 %v424
      %509 = vmatprep.subr.bf16.mxu0 0
      %510 = vmatpush1.bf16.msra.mxu0 %v427
      %511 = vmatprep.subr.bf16.mxu0 0
      %512 = vmatpush1.bf16.msra.mxu0 0
      %513 = vmatprep.subr.bf16.mxu0 0
      %514 = vmatpush1.bf16.msra.mxu0 0
      %515 = vmatprep.subr.bf16.mxu0 0
      %516 = vmatpush1.bf16.msra.mxu0 0
      %517 = vmatprep.subr.bf16.mxu0 0
      %518 = vmatpush1.bf16.msra.mxu0 0
      %519 = vmatprep.subr.bf16.mxu0 0
      %520 = vmatpush1.bf16.msra.mxu0 0
      %521 = vmatprep.subr.bf16.mxu0 0
      %522 = vmatpush1.bf16.msra.mxu0 0
      %523 = vmatprep.subr.bf16.mxu0 0
      %524 = vmatpush1.bf16.msra.mxu0 0
      %525 = vmatprep.subr.bf16.mxu0 0
      %526 = vmatpush1.bf16.msra.mxu0 0
      %527 = vmatprep.mubr.bf16.mxu0 0
      %528 = vmatmul.mubr.bf16.gmra.mrb[0].mxu0 %v274
      %v529 = vpop.f32.mrb[0].mxu0
      %v530 = vadd.f32 %v320, %v529
      %v531 = vpop.f32.mrb[0].mxu0
      %v532 = vpop.f32.mrb[0].mxu0
      %v533 = vadd.f32 %v320, %v532
      %v534 = vpop.f32.mrb[0].mxu0
      %535 = vdwg.mxu0
      %536 = vst [vmem:[%s228] sm:$0xff] %v487
      %537 = vst [vmem:[%s228 + $0x8] sm:$0xff] %v489
      %538 = vst [vmem:[%s228 + $0x10] sm:$0xff] %v530
      %539 = vst [vmem:[%s228 + $0x18] sm:$0xff] %v491
      %540 = vst [vmem:[%s228 + $0x20] sm:$0xff] %v493
      %541 = vst [vmem:[%s228 + $0x28] sm:$0xff] %v533
      %s542 = smul.u32 2, %s16
      %p543 = scmp.lt.s32.totalorder %s542, 3
      %s544 = scalar_select %p543, %s542, 3
      %s545 = smul.addr %s544, 3
      %s546 = smul.addr %s545, 8
      %s547 = scalar_lea.vmem %s5, %s546
      // Predicated region
      $region41: #{vit_encoder_forward.10} parent=39 // pred_check
        %p548 = pneg %p144
      $region42: #{vit_encoder_forward.10} parent=39 // pred_check_branch
        %550 = sbr.rel (%p548) target = $region44
      $region43: #{vit_encoder_forward.10} parent=39 // pred_region
        %s551 = smul.u32 2, %s16
      $region44: #{vit_encoder_forward.10} parent=39 // pred_fallthru
        _
    $region40: #{vit_encoder_forward.10} parent=5 // pred_fallthru
      _
    %p552 = scmp.le.s32.totalorder 2, %s11
    // Predicated region
    $region45: #{vit_encoder_forward.10} parent=5 // pred_check
      %p553 = pneg %p552
    $region46: #{vit_encoder_forward.10} parent=5 // pred_check_branch
      %555 = sbr.rel (%p553) target = $region48
    $region47: #{vit_encoder_forward.10} parent=5 // pred_region
      %s556 = ssub.s32 %s11, 2
      // Predicated region
      $region49: #{vit_encoder_forward.10} parent=47 // pred_check
        %p557 = pneg %p150
      $region50: #{vit_encoder_forward.10} parent=47 // pred_check_branch
        %559 = sbr.rel (%p557) target = $region52
      $region51: #{vit_encoder_forward.10} parent=47 // pred_region
        %s560 = smul.u32 2, %s17
        %p561 = scmp.lt.s32.totalorder %s560, 3
        %s562 = scalar_select %p561, %s560, 3
        %s563 = smul.addr %s562, 3
        %s564 = smul.addr %s563, 8
        %s565 = scalar_lea.vmem %s5, %s564
      $region52: #{vit_encoder_forward.10} parent=47 // pred_fallthru
        _
    $region48: #{vit_encoder_forward.10} parent=5 // pred_fallthru
      _
  $region6: #{vit_encoder_forward.10} parent=0 // loop_footer
    %s15 = sadd.s32 1, %s11
  $region7: #{vit_encoder_forward.10} parent=0 // loop_footer_branch
    %10 = sbr.rel target = $region3
  $region8: #{vit_encoder_forward.10} parent=0 // loop_exit
    _

// kernel: vit_encoder_forward.12
$region0: #{vit_encoder_forward.12}
  #allocation0 [shape = 'u32[]', space=smem, size = 0x4, offset = 0x4, fixed_abs, tag = 'smem constant byte address 0x4 - core index']
  #allocation1 [shape = 'u32[144,128]{1,0:T(1,128)}', space=vmem, size = 0x12000, scoped, tag = 'internal scratch']
  %s0 = inlined_call_operand.vmem [shape: f32[32,128], index: 0, kind: input, shape index: {}]
  %s1 = inlined_call_operand.vmem [shape: bf16[128,128], index: 1, kind: input, shape index: {}]
  %s2 = inlined_call_operand.vmem [shape: f32[1,128], index: 2, kind: input, shape index: {}]
  %s3 = inlined_call_operand.vmem [shape: f32[32,128], index: 3, kind: input, shape index: {}]
  %s4 = inlined_call_operand.vmem [shape: f32[32,128], index: 4, kind: output, shape index: {}]
  %s5 = sld [smem:[#allocation0]]
  $region49: #{vit_encoder_forward.12} parent=0
    _
  %s7 = ssub.s32 1, %s5
  %s8 = scalar_select 0, %s7, %s5
  loop: start=0, step=1, limit=4
  $region2: #{vit_encoder_forward.12} parent=0 // loop_pre_header
    _
  $region3: #{vit_encoder_forward.12} parent=0 // loop_header
    %s10 = sphi 0, %s14
    %p11 = scmp.ge.s32.totalorder %s10, 4
    %s20 = sphi 0, %s22
    %s23 = sphi 0, %s20
    %s24 = sphi 0, %s23
    %s40 = sphi 0, %s24
    %s44 = sphi 0, %s44
    %s46 = sphi 0, %s44
    %s47 = sphi 0, %s46
    %s61 = sphi 0, %s47
    %s65 = sphi 0, %s65
    %s67 = sphi 0, %s65
    %s68 = sphi 0, %s67
    %s82 = sphi 0, %s68
    %s88 = sphi 0, %s90
    %s91 = sphi 0, %s88
    %s92 = sphi 0, %s91
    %s108 = sphi 0, %s92
    %s114 = sphi 0, %s116
    %s117 = sphi 0, %s114
    %s118 = sphi 0, %s117
    %s134 = sphi 0, %s118
  $region4: #{vit_encoder_forward.12} parent=0 // loop_header_branch
    %13 = sbr.rel (%p11) target = $region8
  $region5: #{vit_encoder_forward.12} parent=0 // loop_body
    %s15 = ssub.s32 %s10, 1
    %s16 = ssub.s32 %s10, 2
    %s17 = sadd.s32 %s10, 1
    %s18 = ssub.s32 %s10, %s17
    %p19 = scmp.eq.s32.totalorder %s18, 0
    %s21 = sadd.s32 %s20, 1
    %s22 = scalar_select %p19, %s20, %s21
    %p25 = pneg %p19
    %p26 = scmp.eq.s32.totalorder %s10, 1
    %p27 = por %p25, %p26
    %p28 = scmp.ne.s32.totalorder %s20, %s23
    %p29 = scmp.eq.s32.totalorder %s10, 0
    %p30 = por %p28, %p29
    %p31 = scmp.ne.s32.totalorder %s20, %s23
    %p32 = scmp.eq.s32.totalorder %s15, 1
    %p33 = por %p31, %p32
    %p34 = scmp.ne.s32.totalorder %s23, %s24
    %p35 = scmp.eq.s32.totalorder %s15, 0
    %p36 = por %p34, %p35
    %p37 = scmp.ne.s32.totalorder %s23, %s24
    %p38 = scmp.eq.s32.totalorder %s16, 1
    %p39 = por %p37, %p38
    %p41 = scmp.ne.s32.totalorder %s24, %s40
    %p42 = scmp.eq.s32.totalorder %s16, 0
    %p43 = por %p41, %p42
    %s45 = sadd.s32 %s44, 1
    %p48 = scmp.eq.s32.totalorder %s10, 1
    %p49 = scmp.ne.s32.totalorder %s44, %s46
    %p50 = scmp.eq.s32.totalorder %s10, 0
    %p51 = por %p49, %p50
    %p52 = scmp.ne.s32.totalorder %s44, %s46
    %p53 = scmp.eq.s32.totalorder %s15, 1
    %p54 = por %p52, %p53
    %p55 = scmp.ne.s32.totalorder %s46, %s47
    %p56 = scmp.eq.s32.totalorder %s15, 0
    %p57 = por %p55, %p56
    %p58 = scmp.ne.s32.totalorder %s46, %s47
    %p59 = scmp.eq.s32.totalorder %s16, 1
    %p60 = por %p58, %p59
    %p62 = scmp.ne.s32.totalorder %s47, %s61
    %p63 = scmp.eq.s32.totalorder %s16, 0
    %p64 = por %p62, %p63
    %s66 = sadd.s32 %s65, 1
    %p69 = scmp.eq.s32.totalorder %s10, 1
    %p70 = scmp.ne.s32.totalorder %s65, %s67
    %p71 = scmp.eq.s32.totalorder %s10, 0
    %p72 = por %p70, %p71
    %p73 = scmp.ne.s32.totalorder %s65, %s67
    %p74 = scmp.eq.s32.totalorder %s15, 1
    %p75 = por %p73, %p74
    %p76 = scmp.ne.s32.totalorder %s67, %s68
    %p77 = scmp.eq.s32.totalorder %s15, 0
    %p78 = por %p76, %p77
    %p79 = scmp.ne.s32.totalorder %s67, %s68
    %p80 = scmp.eq.s32.totalorder %s16, 1
    %p81 = por %p79, %p80
    %p83 = scmp.ne.s32.totalorder %s68, %s82
    %p84 = scmp.eq.s32.totalorder %s16, 0
    %p85 = por %p83, %p84
    %s86 = ssub.s32 %s10, %s17
    %p87 = scmp.eq.s32.totalorder %s86, 0
    %s89 = sadd.s32 %s88, 1
    %s90 = scalar_select %p87, %s88, %s89
    %p93 = pneg %p87
    %p94 = scmp.eq.s32.totalorder %s10, 1
    %p95 = por %p93, %p94
    %p96 = scmp.ne.s32.totalorder %s88, %s91
    %p97 = scmp.eq.s32.totalorder %s10, 0
    %p98 = por %p96, %p97
    %p99 = scmp.ne.s32.totalorder %s88, %s91
    %p100 = scmp.eq.s32.totalorder %s15, 1
    %p101 = por %p99, %p100
    %p102 = scmp.ne.s32.totalorder %s91, %s92
    %p103 = scmp.eq.s32.totalorder %s15, 0
    %p104 = por %p102, %p103
    %p105 = scmp.ne.s32.totalorder %s91, %s92
    %p106 = scmp.eq.s32.totalorder %s16, 1
    %p107 = por %p105, %p106
    %p109 = scmp.ne.s32.totalorder %s92, %s108
    %p110 = scmp.eq.s32.totalorder %s16, 0
    %p111 = por %p109, %p110
    %s112 = ssub.s32 %s10, %s17
    %p113 = scmp.eq.s32.totalorder %s112, 0
    %s115 = sadd.s32 %s114, 1
    %s116 = scalar_select %p113, %s114, %s115
    %p119 = pneg %p113
    %p120 = scmp.eq.s32.totalorder %s10, 1
    %p121 = por %p119, %p120
    %p122 = scmp.ne.s32.totalorder %s114, %s117
    %p123 = scmp.eq.s32.totalorder %s10, 0
    %p124 = por %p122, %p123
    %p125 = scmp.ne.s32.totalorder %s114, %s117
    %p126 = scmp.eq.s32.totalorder %s15, 1
    %p127 = por %p125, %p126
    %p128 = scmp.ne.s32.totalorder %s117, %s118
    %p129 = scmp.eq.s32.totalorder %s15, 0
    %p130 = por %p128, %p129
    %p131 = scmp.ne.s32.totalorder %s117, %s118
    %p132 = scmp.eq.s32.totalorder %s16, 1
    %p133 = por %p131, %p132
    %p135 = scmp.ne.s32.totalorder %s118, %s134
    %p136 = scmp.eq.s32.totalorder %s16, 0
    %p137 = por %p135, %p136
    %p138 = scmp.le.s32.totalorder 1, %s10
    %p139 = scmp.lt.s32.totalorder %s10, 3
    %p140 = pnand %p138, %p139
    %p141 = pneg %p140
    // Predicated region
    $region9: #{vit_encoder_forward.12} parent=5 // pred_check
      _
    $region10: #{vit_encoder_forward.12} parent=5 // pred_check_branch
      %143 = sbr.rel (%p140) target = $region12
    $region11: #{vit_encoder_forward.12} parent=5 // pred_region
      %s144 = ssub.s32 %s10, 1
      // Predicated region
      $region13: #{vit_encoder_forward.12} parent=11 // pred_check
        %p145 = pneg %p57
      $region14: #{vit_encoder_forward.12} parent=11 // pred_check_branch
        %147 = sbr.rel (%p145) target = $region16
      $region15: #{vit_encoder_forward.12} parent=11 // pred_region
        _
      $region16: #{vit_encoder_forward.12} parent=11 // pred_fallthru
        _
      // Predicated region
      $region17: #{vit_encoder_forward.12} parent=11 // pred_check
        %p148 = pneg %p78
      $region18: #{vit_encoder_forward.12} parent=11 // pred_check_branch
        %150 = sbr.rel (%p148) target = $region20
      $region19: #{vit_encoder_forward.12} parent=11 // pred_region
        _
      $region20: #{vit_encoder_forward.12} parent=11 // pred_fallthru
        _
    $region12: #{vit_encoder_forward.12} parent=5 // pred_fallthru
      _
    %p151 = scmp.lt.s32.totalorder %s10, 2
    // Predicated region
    $region21: #{vit_encoder_forward.12} parent=5 // pred_check
      %p152 = pneg %p151
    $region22: #{vit_encoder_forward.12} parent=5 // pred_check_branch
      %154 = sbr.rel (%p152) target = $region24
    $region23: #{vit_encoder_forward.12} parent=5 // pred_region
      // Predicated region
      $region25: #{vit_encoder_forward.12} parent=23 // pred_check
        %p155 = pneg %p30
      $region26: #{vit_encoder_forward.12} parent=23 // pred_check_branch
        %157 = sbr.rel (%p155) target = $region28
      $region27: #{vit_encoder_forward.12} parent=23 // pred_region
        %s158 = smul.u32 2, %s10
        %p159 = scmp.lt.s32.totalorder %s158, 3
        %s160 = scalar_select %p159, %s158, 3
        %s161 = smul.addr %s160, 8
        %s162 = scalar_lea.vmem %s0, %s161
        %s163 = smul.u32 2, %s10
      $region28: #{vit_encoder_forward.12} parent=23 // pred_fallthru
        _
      // Predicated region
      $region29: #{vit_encoder_forward.12} parent=23 // pred_check
        %p164 = pneg %p98
      $region30: #{vit_encoder_forward.12} parent=23 // pred_check_branch
        %166 = sbr.rel (%p164) target = $region32
      $region31: #{vit_encoder_forward.12} parent=23 // pred_region
        %s167 = smul.u32 2, %s10
        %p168 = scmp.lt.s32.totalorder %s167, 3
        %s169 = scalar_select %p168, %s167, 3
        %s170 = smul.addr %s169, 8
        %s171 = scalar_lea.vmem %s3, %s170
        %s172 = smul.u32 2, %s10
      $region32: #{vit_encoder_forward.12} parent=23 // pred_fallthru
        _
    $region24: #{vit_encoder_forward.12} parent=5 // pred_fallthru
      _
    %p173 = scmp.le.s32.totalorder 1, %s10
    %p174 = scmp.lt.s32.totalorder %s10, 3
    %p175 = pnand %p173, %p174
    %p176 = pneg %p175
    // Predicated region
    $region33: #{vit_encoder_forward.12} parent=5 // pred_check
      _
    $region34: #{vit_encoder_forward.12} parent=5 // pred_check_branch
      %178 = sbr.rel (%p175) target = $region36
    $region35: #{vit_encoder_forward.12} parent=5 // pred_region
      %s179 = ssub.s32 %s10, 1
      %s180 = smul.u32 2, %s15
      %p181 = scmp.lt.s32.totalorder %s180, 3
      %s182 = scalar_select %p181, %s180, 3
      %s183 = smul.addr %s182, 8
      %s184 = scalar_lea.vmem %s0, %s183
      %p185 = pneg %p36
      %p186 = pneg %p33
      %p187 = pneg %p57
      %p188 = pneg %p54
      %p189 = pneg %p78
      %p190 = pneg %p75
      %s191 = smul.u32 2, %s15
      %p192 = scmp.lt.s32.totalorder %s191, 3
      %s193 = scalar_select %p192, %s191, 3
      %s194 = smul.addr %s193, 8
      %s195 = scalar_lea.vmem %s3, %s194
      %p196 = pneg %p104
      %p197 = pneg %p101
      %p198 = pneg %p130
      %p199 = pneg %p127
      %s200 = smul.u32 2, %s15
      %p201 = scmp.lt.s32.totalorder %s200, 3
      %s202 = scalar_select %p201, %s200, 3
      %s203 = smul.addr %s202, 8
      %s204 = scalar_lea.vmem %s4, %s203
      %s205 = smul.u32 2, %s15
      %p206 = scmp.lt.s32.totalorder %s205, 3
      %s207 = scalar_select %p206, %s205, 3
      %s208 = smul.addr %s207, 8
      %s209 = scalar_lea.vmem %s0, %s208
      %s210 = smul.u32 2, %s15
      %s211 = smul.u32 2, %s15
      %p212 = scmp.lt.s32.totalorder %s211, 3
      %s213 = scalar_select %p212, %s211, 3
      %s214 = smul.addr %s213, 8
      %s215 = scalar_lea.vmem %s3, %s214
      %s216 = smul.u32 2, %s15
      %s217 = smul.u32 2, %s15
      %p218 = scmp.lt.s32.totalorder %s217, 3
      %s219 = scalar_select %p218, %s217, 3
      %s220 = smul.addr %s219, 8
      %s221 = scalar_lea.vmem %s4, %s220
      %s222 = smul.u32 2, %s15
      %v224 = vld [vmem:[%s209] sm:$0xff]
      %v225 = vld [vmem:[%s209 + $0x8] sm:$0xff]
      %v226 = vpack.c.bf16 %v225, %v224
      %v227 = vld [vmem:[%s1] sm:$0xf]
      %v228 = vld [vmem:[%s1 + $0x4] sm:$0xf]
      %v229 = vld [vmem:[%s1 + $0x8] sm:$0xf]
      %v230 = vld [vmem:[%s1 + $0xc] sm:$0xf]
      %v231 = vld [vmem:[%s1 + $0x10] sm:$0xf]
      %v232 = vld [vmem:[%s1 + $0x14] sm:$0xf]
      %v233 = vld [vmem:[%s1 + $0x18] sm:$0xf]
      %v234 = vld [vmem:[%s1 + $0x1c] sm:$0xf]
      %v235 = vld [vmem:[%s1 + $0x20] sm:$0xf]
      %v236 = vld [vmem:[%s1 + $0x24] sm:$0xf]
      %v237 = vld [vmem:[%s1 + $0x28] sm:$0xf]
      %v238 = vld [vmem:[%s1 + $0x2c] sm:$0xf]
      %v239 = vld [vmem:[%s1 + $0x30] sm:$0xf]
      %v240 = vld [vmem:[%s1 + $0x34] sm:$0xf]
      %v241 = vld [vmem:[%s1 + $0x38] sm:$0xf]
      %v242 = vld [vmem:[%s1 + $0x3c] sm:$0xf]
      %v243 = vld [vmem:[%s2] sm:$0x1]
      %v245 = vlaneseq
      %v246 = vshrl.u32 %v245, 7
      %v247 = vsub.s32 0, %v246
      %v248 = vrot.slane %v243, %v247
      %v266 = vunpack.c.l.b16 %v227
      %v267 = vunpack.c.l.b16 %v228
      %v268 = vunpack.c.l.b16 %v229
      %v269 = vunpack.c.l.b16 %v230
      %v270 = vunpack.c.l.b16 %v231
      %v271 = vunpack.c.l.b16 %v232
      %v272 = vunpack.c.l.b16 %v233
      %v273 = vunpack.c.l.b16 %v234
      %v274 = vunpack.c.l.b16 %v235
      %v275 = vunpack.c.l.b16 %v236
      %v276 = vunpack.c.l.b16 %v237
      %v277 = vunpack.c.l.b16 %v238
      %v278 = vunpack.c.l.b16 %v239
      %v279 = vunpack.c.l.b16 %v240
      %v280 = vunpack.c.l.b16 %v241
      %v281 = vunpack.c.l.b16 %v242
      %v282 = vpack.c.b16 %v267, %v266
      %v283 = vpack.c.b16 %v269, %v268
      %v284 = vpack.c.b16 %v271, %v270
      %v285 = vpack.c.b16 %v273, %v272
      %v286 = vpack.c.b16 %v275, %v274
      %v287 = vpack.c.b16 %v277, %v276
      %v288 = vpack.c.b16 %v279, %v278
      %v289 = vpack.c.b16 %v281, %v280
      %298 = vmatprep.subr.bf16.mxu0 0
      %299 = vmatpush1.bf16.msra.mxu0 %v282
      %300 = vmatprep.subr.bf16.mxu0 0
      %301 = vmatpush1.bf16.msra.mxu0 %v283
      %302 = vmatprep.subr.bf16.mxu0 0
      %303 = vmatpush1.bf16.msra.mxu0 %v284
      %304 = vmatprep.subr.bf16.mxu0 0
      %305 = vmatpush1.bf16.msra.mxu0 %v285
      %306 = vmatprep.subr.bf16.mxu0 0
      %307 = vmatpush1.bf16.msra.mxu0 %v286
      %308 = vmatprep.subr.bf16.mxu0 0
      %309 = vmatpush1.bf16.msra.mxu0 %v287
      %310 = vmatprep.subr.bf16.mxu0 0
      %311 = vmatpush1.bf16.msra.mxu0 %v288
      %312 = vmatprep.subr.bf16.mxu0 0
      %313 = vmatpush1.bf16.msra.mxu0 %v289
      %314 = vmatprep.subr.bf16.mxu0 0
      %315 = vmatpush1.bf16.msra.mxu0 0
      %316 = vmatprep.subr.bf16.mxu0 0
      %317 = vmatpush1.bf16.msra.mxu0 0
      %318 = vmatprep.subr.bf16.mxu0 0
      %319 = vmatpush1.bf16.msra.mxu0 0
      %320 = vmatprep.subr.bf16.mxu0 0
      %321 = vmatpush1.bf16.msra.mxu0 0
      %322 = vmatprep.subr.bf16.mxu0 0
      %323 = vmatpush1.bf16.msra.mxu0 0
      %324 = vmatprep.subr.bf16.mxu0 0
      %325 = vmatpush1.bf16.msra.mxu0 0
      %326 = vmatprep.subr.bf16.mxu0 0
      %327 = vmatpush1.bf16.msra.mxu0 0
      %328 = vmatprep.subr.bf16.mxu0 0
      %329 = vmatpush1.bf16.msra.mxu0 0
      %330 = vmatprep.mubr.bf16.mxu0 0
      %331 = vmatmul.mubr.bf16.gmra.mrb[0].mxu0 %v226
      %v332 = vpop.f32.mrb[0].mxu0
      %v333 = vadd.f32 %v248, %v332
      %v334 = vpop.f32.mrb[0].mxu0
      %v335 = vpop.f32.mrb[0].mxu0
      %v336 = vadd.f32 %v248, %v335
      %v337 = vpop.f32.mrb[0].mxu0
      %338 = vdwg.mxu0
      %v339 = vld [vmem:[%s215] sm:$0xff]
      %v340 = vld [vmem:[%s215 + $0x8] sm:$0xff]
      %v341 = vadd.f32 %v333, %v339
      %v342 = vadd.f32 %v336, %v340
      %343 = vst [vmem:[%s221] sm:$0xff] %v341
      %344 = vst [vmem:[%s221 + $0x8] sm:$0xff] %v342
      %s345 = smul.u32 2, %s15
      %p346 = scmp.lt.s32.totalorder %s345, 3
      %s347 = scalar_select %p346, %s345, 3
      %s348 = smul.addr %s347, 8
      %s349 = scalar_lea.vmem %s4, %s348
      // Predicated region
      $region37: #{vit_encoder_forward.12} parent=35 // pred_check
        %p350 = pneg %p127
      $region38: #{vit_encoder_forward.12} parent=35 // pred_check_branch
        %352 = sbr.rel (%p350) target = $region40
      $region39: #{vit_encoder_forward.12} parent=35 // pred_region
        %s353 = smul.u32 2, %s15
      $region40: #{vit_encoder_forward.12} parent=35 // pred_fallthru
        _
    $region36: #{vit_encoder_forward.12} parent=5 // pred_fallthru
      _
    %p354 = scmp.le.s32.totalorder 2, %s10
    // Predicated region
    $region41: #{vit_encoder_forward.12} parent=5 // pred_check
      %p355 = pneg %p354
    $region42: #{vit_encoder_forward.12} parent=5 // pred_check_branch
      %357 = sbr.rel (%p355) target = $region44
    $region43: #{vit_encoder_forward.12} parent=5 // pred_region
      %s358 = ssub.s32 %s10, 2
      // Predicated region
      $region45: #{vit_encoder_forward.12} parent=43 // pred_check
        %p359 = pneg %p133
      $region46: #{vit_encoder_forward.12} parent=43 // pred_check_branch
        %361 = sbr.rel (%p359) target = $region48
      $region47: #{vit_encoder_forward.12} parent=43 // pred_region
        %s362 = smul.u32 2, %s16
        %p363 = scmp.lt.s32.totalorder %s362, 3
        %s364 = scalar_select %p363, %s362, 3
        %s365 = smul.addr %s364, 8
        %s366 = scalar_lea.vmem %s4, %s365
      $region48: #{vit_encoder_forward.12} parent=43 // pred_fallthru
        _
    $region44: #{vit_encoder_forward.12} parent=5 // pred_fallthru
      _
  $region6: #{vit_encoder_forward.12} parent=0 // loop_footer
    %s14 = sadd.s32 1, %s10
  $region7: #{vit_encoder_forward.12} parent=0 // loop_footer_branch
    %9 = sbr.rel target = $region3
  $region8: #{vit_encoder_forward.12} parent=0 // loop_exit
    _

// kernel: vit_encoder_forward.11
$region0: #{vit_encoder_forward.11}
  #allocation0 [shape = 'u32[]', space=smem, size = 0x4, offset = 0x4, fixed_abs, tag = 'smem constant byte address 0x4 - core index']
  #allocation1 [shape = 'u32[144,128]{1,0:T(1,128)}', space=vmem, size = 0x12000, scoped, tag = 'internal scratch']
  %s0 = inlined_call_operand.vmem [shape: f32[2,4,16,32], index: 0, kind: input, shape index: {}]
  %s1 = inlined_call_operand.vmem [shape: f32[2,4,16,32], index: 1, kind: input, shape index: {}]
  %s2 = inlined_call_operand.vmem [shape: f32[2,4,16,32], index: 2, kind: input, shape index: {}]
  %s3 = inlined_call_operand.vmem [shape: f32[2,16,128], index: 3, kind: output, shape index: {}]
  %s4 = sld [smem:[#allocation0]]
  $region45: #{vit_encoder_forward.11} parent=0
    _
  %s6 = ssub.s32 1, %s4
  %s7 = scalar_select 0, %s6, %s4
  loop: start=0, step=1, limit=4
  $region2: #{vit_encoder_forward.11} parent=0 // loop_pre_header
    _
  $region3: #{vit_encoder_forward.11} parent=0 // loop_header
    %s9 = sphi 0, %s13
    %p10 = scmp.ge.s32.totalorder %s9, 4
    %s19 = sphi 0, %s21
    %s22 = sphi 0, %s19
    %s23 = sphi 0, %s22
    %s39 = sphi 0, %s23
    %s45 = sphi 0, %s47
    %s48 = sphi 0, %s45
    %s49 = sphi 0, %s48
    %s65 = sphi 0, %s49
    %s71 = sphi 0, %s73
    %s74 = sphi 0, %s71
    %s75 = sphi 0, %s74
    %s91 = sphi 0, %s75
    %s97 = sphi 0, %s99
    %s100 = sphi 0, %s97
    %s101 = sphi 0, %s100
    %s117 = sphi 0, %s101
  $region4: #{vit_encoder_forward.11} parent=0 // loop_header_branch
    %12 = sbr.rel (%p10) target = $region8
  $region5: #{vit_encoder_forward.11} parent=0 // loop_body
    %s14 = ssub.s32 %s9, 1
    %s15 = ssub.s32 %s9, 2
    %s16 = sadd.s32 %s9, 1
    %s17 = ssub.s32 %s9, %s16
    %p18 = scmp.eq.s32.totalorder %s17, 0
    %s20 = sadd.s32 %s19, 1
    %s21 = scalar_select %p18, %s19, %s20
    %p24 = pneg %p18
    %p25 = scmp.eq.s32.totalorder %s9, 1
    %p26 = por %p24, %p25
    %p27 = scmp.ne.s32.totalorder %s19, %s22
    %p28 = scmp.eq.s32.totalorder %s9, 0
    %p29 = por %p27, %p28
    %p30 = scmp.ne.s32.totalorder %s19, %s22
    %p31 = scmp.eq.s32.totalorder %s14, 1
    %p32 = por %p30, %p31
    %p33 = scmp.ne.s32.totalorder %s22, %s23
    %p34 = scmp.eq.s32.totalorder %s14, 0
    %p35 = por %p33, %p34
    %p36 = scmp.ne.s32.totalorder %s22, %s23
    %p37 = scmp.eq.s32.totalorder %s15, 1
    %p38 = por %p36, %p37
    %p40 = scmp.ne.s32.totalorder %s23, %s39
    %p41 = scmp.eq.s32.totalorder %s15, 0
    %p42 = por %p40, %p41
    %s43 = ssub.s32 %s9, %s16
    %p44 = scmp.eq.s32.totalorder %s43, 0
    %s46 = sadd.s32 %s45, 1
    %s47 = scalar_select %p44, %s45, %s46
    %p50 = pneg %p44
    %p51 = scmp.eq.s32.totalorder %s9, 1
    %p52 = por %p50, %p51
    %p53 = scmp.ne.s32.totalorder %s45, %s48
    %p54 = scmp.eq.s32.totalorder %s9, 0
    %p55 = por %p53, %p54
    %p56 = scmp.ne.s32.totalorder %s45, %s48
    %p57 = scmp.eq.s32.totalorder %s14, 1
    %p58 = por %p56, %p57
    %p59 = scmp.ne.s32.totalorder %s48, %s49
    %p60 = scmp.eq.s32.totalorder %s14, 0
    %p61 = por %p59, %p60
    %p62 = scmp.ne.s32.totalorder %s48, %s49
    %p63 = scmp.eq.s32.totalorder %s15, 1
    %p64 = por %p62, %p63
    %p66 = scmp.ne.s32.totalorder %s49, %s65
    %p67 = scmp.eq.s32.totalorder %s15, 0
    %p68 = por %p66, %p67
    %s69 = ssub.s32 %s9, %s16
    %p70 = scmp.eq.s32.totalorder %s69, 0
    %s72 = sadd.s32 %s71, 1
    %s73 = scalar_select %p70, %s71, %s72
    %p76 = pneg %p70
    %p77 = scmp.eq.s32.totalorder %s9, 1
    %p78 = por %p76, %p77
    %p79 = scmp.ne.s32.totalorder %s71, %s74
    %p80 = scmp.eq.s32.totalorder %s9, 0
    %p81 = por %p79, %p80
    %p82 = scmp.ne.s32.totalorder %s71, %s74
    %p83 = scmp.eq.s32.totalorder %s14, 1
    %p84 = por %p82, %p83
    %p85 = scmp.ne.s32.totalorder %s74, %s75
    %p86 = scmp.eq.s32.totalorder %s14, 0
    %p87 = por %p85, %p86
    %p88 = scmp.ne.s32.totalorder %s74, %s75
    %p89 = scmp.eq.s32.totalorder %s15, 1
    %p90 = por %p88, %p89
    %p92 = scmp.ne.s32.totalorder %s75, %s91
    %p93 = scmp.eq.s32.totalorder %s15, 0
    %p94 = por %p92, %p93
    %s95 = ssub.s32 %s9, %s16
    %p96 = scmp.eq.s32.totalorder %s95, 0
    %s98 = sadd.s32 %s97, 1
    %s99 = scalar_select %p96, %s97, %s98
    %p102 = pneg %p96
    %p103 = scmp.eq.s32.totalorder %s9, 1
    %p104 = por %p102, %p103
    %p105 = scmp.ne.s32.totalorder %s97, %s100
    %p106 = scmp.eq.s32.totalorder %s9, 0
    %p107 = por %p105, %p106
    %p108 = scmp.ne.s32.totalorder %s97, %s100
    %p109 = scmp.eq.s32.totalorder %s14, 1
    %p110 = por %p108, %p109
    %p111 = scmp.ne.s32.totalorder %s100, %s101
    %p112 = scmp.eq.s32.totalorder %s14, 0
    %p113 = por %p111, %p112
    %p114 = scmp.ne.s32.totalorder %s100, %s101
    %p115 = scmp.eq.s32.totalorder %s15, 1
    %p116 = por %p114, %p115
    %p118 = scmp.ne.s32.totalorder %s101, %s117
    %p119 = scmp.eq.s32.totalorder %s15, 0
    %p120 = por %p118, %p119
    %p121 = scmp.le.s32.totalorder 1, %s9
    %p122 = scmp.lt.s32.totalorder %s9, 3
    %p123 = pnand %p121, %p122
    %p124 = pneg %p123
    // Predicated region
    $region9: #{vit_encoder_forward.11} parent=5 // pred_check
      _
    $region10: #{vit_encoder_forward.11} parent=5 // pred_check_branch
      %126 = sbr.rel (%p123) target = $region12
    $region11: #{vit_encoder_forward.11} parent=5 // pred_region
      %s127 = ssub.s32 %s9, 1
    $region12: #{vit_encoder_forward.11} parent=5 // pred_fallthru
      _
    %p128 = scmp.lt.s32.totalorder %s9, 2
    // Predicated region
    $region13: #{vit_encoder_forward.11} parent=5 // pred_check
      %p129 = pneg %p128
    $region14: #{vit_encoder_forward.11} parent=5 // pred_check_branch
      %131 = sbr.rel (%p129) target = $region16
    $region15: #{vit_encoder_forward.11} parent=5 // pred_region
      // Predicated region
      $region17: #{vit_encoder_forward.11} parent=15 // pred_check
        %p132 = pneg %p29
      $region18: #{vit_encoder_forward.11} parent=15 // pred_check_branch
        %134 = sbr.rel (%p132) target = $region20
      $region19: #{vit_encoder_forward.11} parent=15 // pred_region
        %p135 = scmp.lt.s32.totalorder %s9, 1
        %s136 = scalar_select %p135, %s9, 1
        %s137 = smul.addr %s136, 8
        %s138 = smul.addr %s137, 8
        %s139 = scalar_lea.vmem %s0, %s138
      $region20: #{vit_encoder_forward.11} parent=15 // pred_fallthru
        _
      // Predicated region
      $region21: #{vit_encoder_forward.11} parent=15 // pred_check
        %p140 = pneg %p55
      $region22: #{vit_encoder_forward.11} parent=15 // pred_check_branch
        %142 = sbr.rel (%p140) target = $region24
      $region23: #{vit_encoder_forward.11} parent=15 // pred_region
        %p143 = scmp.lt.s32.totalorder %s9, 1
        %s144 = scalar_select %p143, %s9, 1
        %s145 = smul.addr %s144, 8
        %s146 = smul.addr %s145, 8
        %s147 = scalar_lea.vmem %s1, %s146
      $region24: #{vit_encoder_forward.11} parent=15 // pred_fallthru
        _
      // Predicated region
      $region25: #{vit_encoder_forward.11} parent=15 // pred_check
        %p148 = pneg %p81
      $region26: #{vit_encoder_forward.11} parent=15 // pred_check_branch
        %150 = sbr.rel (%p148) target = $region28
      $region27: #{vit_encoder_forward.11} parent=15 // pred_region
        %p151 = scmp.lt.s32.totalorder %s9, 1
        %s152 = scalar_select %p151, %s9, 1
        %s153 = smul.addr %s152, 8
        %s154 = smul.addr %s153, 8
        %s155 = scalar_lea.vmem %s2, %s154
      $region28: #{vit_encoder_forward.11} parent=15 // pred_fallthru
        _
    $region16: #{vit_encoder_forward.11} parent=5 // pred_fallthru
      _
    %p156 = scmp.le.s32.totalorder 1, %s9
    %p157 = scmp.lt.s32.totalorder %s9, 3
    %p158 = pnand %p156, %p157
    %p159 = pneg %p158
    // Predicated region
    $region29: #{vit_encoder_forward.11} parent=5 // pred_check
      _
    $region30: #{vit_encoder_forward.11} parent=5 // pred_check_branch
      %161 = sbr.rel (%p158) target = $region32
    $region31: #{vit_encoder_forward.11} parent=5 // pred_region
      %s162 = ssub.s32 %s9, 1
      %p163 = scmp.lt.s32.totalorder %s14, 1
      %s164 = scalar_select %p163, %s14, 1
      %s165 = smul.addr %s164, 8
      %s166 = smul.addr %s165, 8
      %s167 = scalar_lea.vmem %s0, %s166
      %p168 = pneg %p35
      %p169 = pneg %p32
      %p170 = scmp.lt.s32.totalorder %s14, 1
      %s171 = scalar_select %p170, %s14, 1
      %s172 = smul.addr %s171, 8
      %s173 = smul.addr %s172, 8
      %s174 = scalar_lea.vmem %s1, %s173
      %p175 = pneg %p61
      %p176 = pneg %p58
      %p177 = scmp.lt.s32.totalorder %s14, 1
      %s178 = scalar_select %p177, %s14, 1
      %s179 = smul.addr %s178, 8
      %s180 = smul.addr %s179, 8
      %s181 = scalar_lea.vmem %s2, %s180
      %p182 = pneg %p87
      %p183 = pneg %p84
      %p184 = pneg %p113
      %p185 = pneg %p110
      %p186 = scmp.lt.s32.totalorder %s14, 1
      %s187 = scalar_select %p186, %s14, 1
      %s188 = smul.addr %s187, 2
      %s189 = smul.addr %s188, 8
      %s190 = scalar_lea.vmem %s3, %s189
      %p191 = scmp.lt.s32.totalorder %s14, 1
      %s192 = scalar_select %p191, %s14, 1
      %s193 = smul.addr %s192, 8
      %s194 = smul.addr %s193, 8
      %s195 = scalar_lea.vmem %s0, %s194
      %p196 = scmp.lt.s32.totalorder %s14, 1
      %s197 = scalar_select %p196, %s14, 1
      %s198 = smul.addr %s197, 8
      %s199 = smul.addr %s198, 8
      %s200 = scalar_lea.vmem %s1, %s199
      %p201 = scmp.lt.s32.totalorder %s14, 1
      %s202 = scalar_select %p201, %s14, 1
      %s203 = smul.addr %s202, 8
      %s204 = smul.addr %s203, 8
      %s205 = scalar_lea.vmem %s2, %s204
      %p206 = scmp.lt.s32.totalorder %s14, 1
      %s207 = scalar_select %p206, %s14, 1
      %s208 = smul.addr %s207, 2
      %s209 = smul.addr %s208, 8
      %s210 = scalar_lea.vmem %s3, %s209
      %v212 = vld [vmem:[%s195] sm:$0xff]
      %v213 = vld [vmem:[%s195 + $0x8] sm:$0xff]
      %v214 = vpack.c.bf16 %v213, %v212
      %v215 = vld [vmem:[%s200] sm:$0xff]
      %v216 = vld [vmem:[%s200 + $0x8] sm:$0xff]
      %v217 = vpack.c.bf16 %v216, %v215
      %v218 = vld [vmem:[%s205] sm:$0xff]
      %v219 = vld [vmem:[%s205 + $0x8] sm:$0xff]
      %v220 = vpack.c.bf16 %v219, %v218
      %vm221 = vcmask 261120
      %v223 = vsel %vm221, %v214, 0
      %v226 = vsel %vm221, %v217, 0
      %228 = vmatprep.subr.bf16.mxu0 0
      %229 = vmatpush1.bf16.xpose.msra.mxu0 %v226
      %230 = vmatprep.subr.bf16.mxu0 0
      %231 = vmatpush1.bf16.xpose.msra.mxu0 0
      %232 = vmatprep.subr.bf16.mxu0 0
      %233 = vmatpush1.bf16.xpose.msra.mxu0 0
      %234 = vmatprep.subr.bf16.mxu0 0
      %235 = vmatpush1.bf16.xpose.msra.mxu0 0
      %236 = vmatprep.subr.bf16.mxu0 0
      %237 = vmatpush1.bf16.xpose.msra.mxu0 0
      %238 = vmatprep.subr.bf16.mxu0 0
      %239 = vmatpush1.bf16.xpose.msra.mxu0 0
      %240 = vmatprep.subr.bf16.mxu0 0
      %241 = vmatpush1.bf16.xpose.msra.mxu0 0
      %242 = vmatprep.subr.bf16.mxu0 0
      %243 = vmatpush1.bf16.xpose.msra.mxu0 0
      %244 = vmatprep.subr.bf16.mxu0 0
      %245 = vmatpush1.bf16.xpose.msra.mxu0 0
      %246 = vmatprep.subr.bf16.mxu0 0
      %247 = vmatpush1.bf16.xpose.msra.mxu0 0
      %248 = vmatprep.subr.bf16.mxu0 0
      %249 = vmatpush1.bf16.xpose.msra.mxu0 0
      %250 = vmatprep.subr.bf16.mxu0 0
      %251 = vmatpush1.bf16.xpose.msra.mxu0 0
      %252 = vmatprep.subr.bf16.mxu0 0
      %253 = vmatpush1.bf16.xpose.msra.mxu0 0
      %254 = vmatprep.subr.bf16.mxu0 0
      %255 = vmatpush1.bf16.xpose.msra.mxu0 0
      %256 = vmatprep.subr.bf16.mxu0 0
      %257 = vmatpush1.bf16.xpose.msra.mxu0 0
      %258 = vmatprep.subr.bf16.mxu0 0
      %259 = vmatpush1.bf16.xpose.msra.mxu0 0
      %260 = vmatprep.mubr.bf16.mxu0 0
      %261 = vmatmul.mubr.bf16.gmra.mrb[0].mxu0 %v223
      %v262 = vpop.f32.mrb[0].mxu0
      %v263 = vadd.f32 0.0, %v262
      %v264 = vpop.f32.mrb[0].mxu0
      %v265 = vpop.f32.mrb[0].mxu0
      %v266 = vadd.f32 0.0, %v265
      %v267 = vpop.f32.mrb[0].mxu0
      %268 = vdwg.mxu0
      %v269 = vmul.f32 %v263, 0.17677669
      %v270 = vmul.f32 %v266, 0.17677669
      %vm271 = vcmask 130048
      %v272 = vsel %vm271, %v269, -inf
      %273 = vmax.xlane.f32.xlu0 %v272
      %v274 = vpop.xlane.xlu0 %273
      %v275 = vsel %vm271, %v270, -inf
      %276 = vmax.xlane.f32.xlu0 %v275
      %v277 = vpop.xlane.xlu0 %276
      %v278 = vsub.f32 %v269, %v274
      %v279 = vsub.f32 %v270, %v277
      %v280 = vmul.f32 %v278, 1.442695
      %v281 = vpow.pop %v280
      %v282 = vmul.f32 %v279, 1.442695
      %v283 = vpow.pop %v282
      %v284 = vsel %vm271, %v281, 0.0
      %285 = vadd.xlane.f32.xlu0 %v284
      %v286 = vpop.xlane.xlu0 %285
      %v287 = vsel %vm271, %v283, 0.0
      %288 = vadd.xlane.f32.xlu0 %v287
      %v289 = vpop.xlane.xlu0 %288
      %v290 = vrcp.pop %v286
      %v291 = vmul.f32 %v281, %v290
      %v292 = vrcp.pop %v289
      %v293 = vmul.f32 %v283, %v292
      %v294 = vpack.c.bf16 %v293, %v291
      %v296 = vsel %vm271, %v294, 0
      %298 = vmatprep.subr.bf16.mxu0 0
      %299 = vmatpush1.bf16.msra.mxu0 %v220
      %300 = vmatprep.subr.bf16.mxu0 0
      %301 = vmatpush1.bf16.msra.mxu0 0
      %302 = vmatprep.subr.bf16.mxu0 0
      %303 = vmatpush1.bf16.msra.mxu0 0
      %304 = vmatprep.subr.bf16.mxu0 0
      %305 = vmatpush1.bf16.msra.mxu0 0
      %306 = vmatprep.subr.bf16.mxu0 0
      %307 = vmatpush1.bf16.msra.mxu0 0
      %308 = vmatprep.subr.bf16.mxu0 0
      %309 = vmatpush1.bf16.msra.mxu0 0
      %310 = vmatprep.subr.bf16.mxu0 0
      %311 = vmatpush1.bf16.msra.mxu0 0
      %312 = vmatprep.subr.bf16.mxu0 0
      %313 = vmatpush1.bf16.msra.mxu0 0
      %314 = vmatprep.subr.bf16.mxu0 0
      %315 = vmatpush1.bf16.msra.mxu0 0
      %316 = vmatprep.subr.bf16.mxu0 0
      %317 = vmatpush1.bf16.msra.mxu0 0
      %318 = vmatprep.subr.bf16.mxu0 0
      %319 = vmatpush1.bf16.msra.mxu0 0
      %320 = vmatprep.subr.bf16.mxu0 0
      %321 = vmatpush1.bf16.msra.mxu0 0
      %322 = vmatprep.subr.bf16.mxu0 0
      %323 = vmatpush1.bf16.msra.mxu0 0
      %324 = vmatprep.subr.bf16.mxu0 0
      %325 = vmatpush1.bf16.msra.mxu0 0
      %326 = vmatprep.subr.bf16.mxu0 0
      %327 = vmatpush1.bf16.msra.mxu0 0
      %328 = vmatprep.subr.bf16.mxu0 0
      %329 = vmatpush1.bf16.msra.mxu0 0
      %330 = vmatprep.mubr.bf16.mxu0 0
      %331 = vmatmul.mubr.bf16.gmra.mrb[0].mxu0 %v296
      %v332 = vpop.f32.mrb[0].mxu0
      %v333 = vadd.f32 0.0, %v332
      %v334 = vpop.f32.mrb[0].mxu0
      %v335 = vpop.f32.mrb[0].mxu0
      %v336 = vadd.f32 0.0, %v335
      %v337 = vpop.f32.mrb[0].mxu0
      %338 = vdwg.mxu0
      %339 = vst.msk [vmem:[%s210] sm:$0xff] %vm221, %v333
      %340 = vst.msk [vmem:[%s210 + $0x8] sm:$0xff] %vm221, %v336
      %s341 = scalar_lea.vmem %s195, 16
      %v342 = vld [vmem:[%s341] sm:$0xff]
      %v343 = vld [vmem:[%s341 + $0x8] sm:$0xff]
      %v344 = vpack.c.bf16 %v343, %v342
      %s345 = scalar_lea.vmem %s200, 16
      %v346 = vld [vmem:[%s345] sm:$0xff]
      %v347 = vld [vmem:[%s345 + $0x8] sm:$0xff]
      %v348 = vpack.c.bf16 %v347, %v346
      %s349 = scalar_lea.vmem %s205, 16
      %v350 = vld [vmem:[%s349] sm:$0xff]
      %v351 = vld [vmem:[%s349 + $0x8] sm:$0xff]
      %v352 = vpack.c.bf16 %v351, %v350
      %v354 = vsel %vm221, %v344, 0
      %v357 = vsel %vm221, %v348, 0
      %359 = vmatprep.subr.bf16.mxu0 0
      %360 = vmatpush1.bf16.xpose.msra.mxu0 %v357
      %361 = vmatprep.subr.bf16.mxu0 0
      %362 = vmatpush1.bf16.xpose.msra.mxu0 0
      %363 = vmatprep.subr.bf16.mxu0 0
      %364 = vmatpush1.bf16.xpose.msra.mxu0 0
      %365 = vmatprep.subr.bf16.mxu0 0
      %366 = vmatpush1.bf16.xpose.msra.mxu0 0
      %367 = vmatprep.subr.bf16.mxu0 0
      %368 = vmatpush1.bf16.xpose.msra.mxu0 0
      %369 = vmatprep.subr.bf16.mxu0 0
      %370 = vmatpush1.bf16.xpose.msra.mxu0 0
      %371 = vmatprep.subr.bf16.mxu0 0
      %372 = vmatpush1.bf16.xpose.msra.mxu0 0
      %373 = vmatprep.subr.bf16.mxu0 0
      %374 = vmatpush1.bf16.xpose.msra.mxu0 0
      %375 = vmatprep.subr.bf16.mxu0 0
      %376 = vmatpush1.bf16.xpose.msra.mxu0 0
      %377 = vmatprep.subr.bf16.mxu0 0
      %378 = vmatpush1.bf16.xpose.msra.mxu0 0
      %379 = vmatprep.subr.bf16.mxu0 0
      %380 = vmatpush1.bf16.xpose.msra.mxu0 0
      %381 = vmatprep.subr.bf16.mxu0 0
      %382 = vmatpush1.bf16.xpose.msra.mxu0 0
      %383 = vmatprep.subr.bf16.mxu0 0
      %384 = vmatpush1.bf16.xpose.msra.mxu0 0
      %385 = vmatprep.subr.bf16.mxu0 0
      %386 = vmatpush1.bf16.xpose.msra.mxu0 0
      %387 = vmatprep.subr.bf16.mxu0 0
      %388 = vmatpush1.bf16.xpose.msra.mxu0 0
      %389 = vmatprep.subr.bf16.mxu0 0
      %390 = vmatpush1.bf16.xpose.msra.mxu0 0
      %391 = vmatprep.mubr.bf16.mxu0 0
      %392 = vmatmul.mubr.bf16.gmra.mrb[0].mxu0 %v354
      %v393 = vpop.f32.mrb[0].mxu0
      %v394 = vadd.f32 0.0, %v393
      %v395 = vpop.f32.mrb[0].mxu0
      %v396 = vpop.f32.mrb[0].mxu0
      %v397 = vadd.f32 0.0, %v396
      %v398 = vpop.f32.mrb[0].mxu0
      %399 = vdwg.mxu0
      %v400 = vmul.f32 %v394, 0.17677669
      %v401 = vmul.f32 %v397, 0.17677669
      %v402 = vsel %vm271, %v400, -inf
      %403 = vmax.xlane.f32.xlu0 %v402
      %v404 = vpop.xlane.xlu0 %403
      %v405 = vsel %vm271, %v401, -inf
      %406 = vmax.xlane.f32.xlu0 %v405
      %v407 = vpop.xlane.xlu0 %406
      %v408 = vsub.f32 %v400, %v404
      %v409 = vsub.f32 %v401, %v407
      %v410 = vmul.f32 %v408, 1.442695
      %v411 = vpow.pop %v410
      %v412 = vmul.f32 %v409, 1.442695
      %v413 = vpow.pop %v412
      %v414 = vsel %vm271, %v411, 0.0
      %415 = vadd.xlane.f32.xlu0 %v414
      %v416 = vpop.xlane.xlu0 %415
      %v417 = vsel %vm271, %v413, 0.0
      %418 = vadd.xlane.f32.xlu0 %v417
      %v419 = vpop.xlane.xlu0 %418
      %v420 = vrcp.pop %v416
      %v421 = vmul.f32 %v411, %v420
      %v422 = vrcp.pop %v419
      %v423 = vmul.f32 %v413, %v422
      %v424 = vpack.c.bf16 %v423, %v421
      %v426 = vsel %vm271, %v424, 0
      %428 = vmatprep.subr.bf16.mxu0 0
      %429 = vmatpush1.bf16.msra.mxu0 %v352
      %430 = vmatprep.subr.bf16.mxu0 0
      %431 = vmatpush1.bf16.msra.mxu0 0
      %432 = vmatprep.subr.bf16.mxu0 0
      %433 = vmatpush1.bf16.msra.mxu0 0
      %434 = vmatprep.subr.bf16.mxu0 0
      %435 = vmatpush1.bf16.msra.mxu0 0
      %436 = vmatprep.subr.bf16.mxu0 0
      %437 = vmatpush1.bf16.msra.mxu0 0
      %438 = vmatprep.subr.bf16.mxu0 0
      %439 = vmatpush1.bf16.msra.mxu0 0
      %440 = vmatprep.subr.bf16.mxu0 0
      %441 = vmatpush1.bf16.msra.mxu0 0
      %442 = vmatprep.subr.bf16.mxu0 0
      %443 = vmatpush1.bf16.msra.mxu0 0
      %444 = vmatprep.subr.bf16.mxu0 0
      %445 = vmatpush1.bf16.msra.mxu0 0
      %446 = vmatprep.subr.bf16.mxu0 0
      %447 = vmatpush1.bf16.msra.mxu0 0
      %448 = vmatprep.subr.bf16.mxu0 0
      %449 = vmatpush1.bf16.msra.mxu0 0
      %450 = vmatprep.subr.bf16.mxu0 0
      %451 = vmatpush1.bf16.msra.mxu0 0
      %452 = vmatprep.subr.bf16.mxu0 0
      %453 = vmatpush1.bf16.msra.mxu0 0
      %454 = vmatprep.subr.bf16.mxu0 0
      %455 = vmatpush1.bf16.msra.mxu0 0
      %456 = vmatprep.subr.bf16.mxu0 0
      %457 = vmatpush1.bf16.msra.mxu0 0
      %458 = vmatprep.subr.bf16.mxu0 0
      %459 = vmatpush1.bf16.msra.mxu0 0
      %460 = vmatprep.mubr.bf16.mxu0 0
      %461 = vmatmul.mubr.bf16.gmra.mrb[0].mxu0 %v426
      %v462 = vpop.f32.mrb[0].mxu0
      %v463 = vadd.f32 0.0, %v462
      %v464 = vpop.f32.mrb[0].mxu0
      %v465 = vpop.f32.mrb[0].mxu0
      %v466 = vadd.f32 0.0, %v465
      %v467 = vpop.f32.mrb[0].mxu0
      %468 = vdwg.mxu0
      %471 = vrot.lane.b32.xlu0 %v463, 32
      %v472 = vpop.permute.xlu0 %471
      %473 = vrot.lane.b32.xlu0 %v466, 32
      %v474 = vpop.permute.xlu0 %473
      %vm477 = vcmask 523520
      %478 = vst.msk [vmem:[%s210] sm:$0xff] %vm477, %v472
      %479 = vst.msk [vmem:[%s210 + $0x8] sm:$0xff] %vm477, %v474
      %s480 = scalar_lea.vmem %s195, 32
      %v481 = vld [vmem:[%s480] sm:$0xff]
      %v482 = vld [vmem:[%s480 + $0x8] sm:$0xff]
      %v483 = vpack.c.bf16 %v482, %v481
      %s484 = scalar_lea.vmem %s200, 32
      %v485 = vld [vmem:[%s484] sm:$0xff]
      %v486 = vld [vmem:[%s484 + $0x8] sm:$0xff]
      %v487 = vpack.c.bf16 %v486, %v485
      %s488 = scalar_lea.vmem %s205, 32
      %v489 = vld [vmem:[%s488] sm:$0xff]
      %v490 = vld [vmem:[%s488 + $0x8] sm:$0xff]
      %v491 = vpack.c.bf16 %v490, %v489
      %v493 = vsel %vm221, %v483, 0
      %v496 = vsel %vm221, %v487, 0
      %498 = vmatprep.subr.bf16.mxu0 0
      %499 = vmatpush1.bf16.xpose.msra.mxu0 %v496
      %500 = vmatprep.subr.bf16.mxu0 0
      %501 = vmatpush1.bf16.xpose.msra.mxu0 0
      %502 = vmatprep.subr.bf16.mxu0 0
      %503 = vmatpush1.bf16.xpose.msra.mxu0 0
      %504 = vmatprep.subr.bf16.mxu0 0
      %505 = vmatpush1.bf16.xpose.msra.mxu0 0
      %506 = vmatprep.subr.bf16.mxu0 0
      %507 = vmatpush1.bf16.xpose.msra.mxu0 0
      %508 = vmatprep.subr.bf16.mxu0 0
      %509 = vmatpush1.bf16.xpose.msra.mxu0 0
      %510 = vmatprep.subr.bf16.mxu0 0
      %511 = vmatpush1.bf16.xpose.msra.mxu0 0
      %512 = vmatprep.subr.bf16.mxu0 0
      %513 = vmatpush1.bf16.xpose.msra.mxu0 0
      %514 = vmatprep.subr.bf16.mxu0 0
      %515 = vmatpush1.bf16.xpose.msra.mxu0 0
      %516 = vmatprep.subr.bf16.mxu0 0
      %517 = vmatpush1.bf16.xpose.msra.mxu0 0
      %518 = vmatprep.subr.bf16.mxu0 0
      %519 = vmatpush1.bf16.xpose.msra.mxu0 0
      %520 = vmatprep.subr.bf16.mxu0 0
      %521 = vmatpush1.bf16.xpose.msra.mxu0 0
      %522 = vmatprep.subr.bf16.mxu0 0
      %523 = vmatpush1.bf16.xpose.msra.mxu0 0
      %524 = vmatprep.subr.bf16.mxu0 0
      %525 = vmatpush1.bf16.xpose.msra.mxu0 0
      %526 = vmatprep.subr.bf16.mxu0 0
      %527 = vmatpush1.bf16.xpose.msra.mxu0 0
      %528 = vmatprep.subr.bf16.mxu0 0
      %529 = vmatpush1.bf16.xpose.msra.mxu0 0
      %530 = vmatprep.mubr.bf16.mxu0 0
      %531 = vmatmul.mubr.bf16.gmra.mrb[0].mxu0 %v493
      %v532 = vpop.f32.mrb[0].mxu0
      %v533 = vadd.f32 0.0, %v532
      %v534 = vpop.f32.mrb[0].mxu0
      %v535 = vpop.f32.mrb[0].mxu0
      %v536 = vadd.f32 0.0, %v535
      %v537 = vpop.f32.mrb[0].mxu0
      %538 = vdwg.mxu0
      %v539 = vmul.f32 %v533, 0.17677669
      %v540 = vmul.f32 %v536, 0.17677669
      %v541 = vsel %vm271, %v539, -inf
      %542 = vmax.xlane.f32.xlu0 %v541
      %v543 = vpop.xlane.xlu0 %542
      %v544 = vsel %vm271, %v540, -inf
      %545 = vmax.xlane.f32.xlu0 %v544
      %v546 = vpop.xlane.xlu0 %545
      %v547 = vsub.f32 %v539, %v543
      %v548 = vsub.f32 %v540, %v546
      %v549 = vmul.f32 %v547, 1.442695
      %v550 = vpow.pop %v549
      %v551 = vmul.f32 %v548, 1.442695
      %v552 = vpow.pop %v551
      %v553 = vsel %vm271, %v550, 0.0
      %554 = vadd.xlane.f32.xlu0 %v553
      %v555 = vpop.xlane.xlu0 %554
      %v556 = vsel %vm271, %v552, 0.0
      %557 = vadd.xlane.f32.xlu0 %v556
      %v558 = vpop.xlane.xlu0 %557
      %v559 = vrcp.pop %v555
      %v560 = vmul.f32 %v550, %v559
      %v561 = vrcp.pop %v558
      %v562 = vmul.f32 %v552, %v561
      %v563 = vpack.c.bf16 %v562, %v560
      %v565 = vsel %vm271, %v563, 0
      %567 = vmatprep.subr.bf16.mxu0 0
      %568 = vmatpush1.bf16.msra.mxu0 %v491
      %569 = vmatprep.subr.bf16.mxu0 0
      %570 = vmatpush1.bf16.msra.mxu0 0
      %571 = vmatprep.subr.bf16.mxu0 0
      %572 = vmatpush1.bf16.msra.mxu0 0
      %573 = vmatprep.subr.bf16.mxu0 0
      %574 = vmatpush1.bf16.msra.mxu0 0
      %575 = vmatprep.subr.bf16.mxu0 0
      %576 = vmatpush1.bf16.msra.mxu0 0
      %577 = vmatprep.subr.bf16.mxu0 0
      %578 = vmatpush1.bf16.msra.mxu0 0
      %579 = vmatprep.subr.bf16.mxu0 0
      %580 = vmatpush1.bf16.msra.mxu0 0
      %581 = vmatprep.subr.bf16.mxu0 0
      %582 = vmatpush1.bf16.msra.mxu0 0
      %583 = vmatprep.subr.bf16.mxu0 0
      %584 = vmatpush1.bf16.msra.mxu0 0
      %585 = vmatprep.subr.bf16.mxu0 0
      %586 = vmatpush1.bf16.msra.mxu0 0
      %587 = vmatprep.subr.bf16.mxu0 0
      %588 = vmatpush1.bf16.msra.mxu0 0
      %589 = vmatprep.subr.bf16.mxu0 0
      %590 = vmatpush1.bf16.msra.mxu0 0
      %591 = vmatprep.subr.bf16.mxu0 0
      %592 = vmatpush1.bf16.msra.mxu0 0
      %593 = vmatprep.subr.bf16.mxu0 0
      %594 = vmatpush1.bf16.msra.mxu0 0
      %595 = vmatprep.subr.bf16.mxu0 0
      %596 = vmatpush1.bf16.msra.mxu0 0
      %597 = vmatprep.subr.bf16.mxu0 0
      %598 = vmatpush1.bf16.msra.mxu0 0
      %599 = vmatprep.mubr.bf16.mxu0 0
      %600 = vmatmul.mubr.bf16.gmra.mrb[0].mxu0 %v565
      %v601 = vpop.f32.mrb[0].mxu0
      %v602 = vadd.f32 0.0, %v601
      %v603 = vpop.f32.mrb[0].mxu0
      %v604 = vpop.f32.mrb[0].mxu0
      %v605 = vadd.f32 0.0, %v604
      %v606 = vpop.f32.mrb[0].mxu0
      %607 = vdwg.mxu0
      %610 = vrot.lane.b32.xlu0 %v602, 64
      %v611 = vpop.permute.xlu0 %610
      %612 = vrot.lane.b32.xlu0 %v605, 64
      %v613 = vpop.permute.xlu0 %612
      %vm616 = vcmask 785920
      %617 = vst.msk [vmem:[%s210] sm:$0xff] %vm616, %v611
      %618 = vst.msk [vmem:[%s210 + $0x8] sm:$0xff] %vm616, %v613
      %s619 = scalar_lea.vmem %s195, 48
      %v620 = vld [vmem:[%s619] sm:$0xff]
      %v621 = vld [vmem:[%s619 + $0x8] sm:$0xff]
      %v622 = vpack.c.bf16 %v621, %v620
      %s623 = scalar_lea.vmem %s200, 48
      %v624 = vld [vmem:[%s623] sm:$0xff]
      %v625 = vld [vmem:[%s623 + $0x8] sm:$0xff]
      %v626 = vpack.c.bf16 %v625, %v624
      %s627 = scalar_lea.vmem %s205, 48
      %v628 = vld [vmem:[%s627] sm:$0xff]
      %v629 = vld [vmem:[%s627 + $0x8] sm:$0xff]
      %v630 = vpack.c.bf16 %v629, %v628
      %v632 = vsel %vm221, %v622, 0
      %v635 = vsel %vm221, %v626, 0
      %637 = vmatprep.subr.bf16.mxu0 0
      %638 = vmatpush1.bf16.xpose.msra.mxu0 %v635
      %639 = vmatprep.subr.bf16.mxu0 0
      %640 = vmatpush1.bf16.xpose.msra.mxu0 0
      %641 = vmatprep.subr.bf16.mxu0 0
      %642 = vmatpush1.bf16.xpose.msra.mxu0 0
      %643 = vmatprep.subr.bf16.mxu0 0
      %644 = vmatpush1.bf16.xpose.msra.mxu0 0
      %645 = vmatprep.subr.bf16.mxu0 0
      %646 = vmatpush1.bf16.xpose.msra.mxu0 0
      %647 = vmatprep.subr.bf16.mxu0 0
      %648 = vmatpush1.bf16.xpose.msra.mxu0 0
      %649 = vmatprep.subr.bf16.mxu0 0
      %650 = vmatpush1.bf16.xpose.msra.mxu0 0
      %651 = vmatprep.subr.bf16.mxu0 0
      %652 = vmatpush1.bf16.xpose.msra.mxu0 0
      %653 = vmatprep.subr.bf16.mxu0 0
      %654 = vmatpush1.bf16.xpose.msra.mxu0 0
      %655 = vmatprep.subr.bf16.mxu0 0
      %656 = vmatpush1.bf16.xpose.msra.mxu0 0
      %657 = vmatprep.subr.bf16.mxu0 0
      %658 = vmatpush1.bf16.xpose.msra.mxu0 0
      %659 = vmatprep.subr.bf16.mxu0 0
      %660 = vmatpush1.bf16.xpose.msra.mxu0 0
      %661 = vmatprep.subr.bf16.mxu0 0
      %662 = vmatpush1.bf16.xpose.msra.mxu0 0
      %663 = vmatprep.subr.bf16.mxu0 0
      %664 = vmatpush1.bf16.xpose.msra.mxu0 0
      %665 = vmatprep.subr.bf16.mxu0 0
      %666 = vmatpush1.bf16.xpose.msra.mxu0 0
      %667 = vmatprep.subr.bf16.mxu0 0
      %668 = vmatpush1.bf16.xpose.msra.mxu0 0
      %669 = vmatprep.mubr.bf16.mxu0 0
      %670 = vmatmul.mubr.bf16.gmra.mrb[0].mxu0 %v632
      %v671 = vpop.f32.mrb[0].mxu0
      %v672 = vadd.f32 0.0, %v671
      %v673 = vpop.f32.mrb[0].mxu0
      %v674 = vpop.f32.mrb[0].mxu0
      %v675 = vadd.f32 0.0, %v674
      %v676 = vpop.f32.mrb[0].mxu0
      %677 = vdwg.mxu0
      %v678 = vmul.f32 %v672, 0.17677669
      %v679 = vmul.f32 %v675, 0.17677669
      %v680 = vsel %vm271, %v678, -inf
      %681 = vmax.xlane.f32.xlu0 %v680
      %v682 = vpop.xlane.xlu0 %681
      %v683 = vsel %vm271, %v679, -inf
      %684 = vmax.xlane.f32.xlu0 %v683
      %v685 = vpop.xlane.xlu0 %684
      %v686 = vsub.f32 %v678, %v682
      %v687 = vsub.f32 %v679, %v685
      %v688 = vmul.f32 %v686, 1.442695
      %v689 = vpow.pop %v688
      %v690 = vmul.f32 %v687, 1.442695
      %v691 = vpow.pop %v690
      %v692 = vsel %vm271, %v689, 0.0
      %693 = vadd.xlane.f32.xlu0 %v692
      %v694 = vpop.xlane.xlu0 %693
      %v695 = vsel %vm271, %v691, 0.0
      %696 = vadd.xlane.f32.xlu0 %v695
      %v697 = vpop.xlane.xlu0 %696
      %v698 = vrcp.pop %v694
      %v699 = vmul.f32 %v689, %v698
      %v700 = vrcp.pop %v697
      %v701 = vmul.f32 %v691, %v700
      %v702 = vpack.c.bf16 %v701, %v699
      %v704 = vsel %vm271, %v702, 0
      %706 = vmatprep.subr.bf16.mxu0 0
      %707 = vmatpush1.bf16.msra.mxu0 %v630
      %708 = vmatprep.subr.bf16.mxu0 0
      %709 = vmatpush1.bf16.msra.mxu0 0
      %710 = vmatprep.subr.bf16.mxu0 0
      %711 = vmatpush1.bf16.msra.mxu0 0
      %712 = vmatprep.subr.bf16.mxu0 0
      %713 = vmatpush1.bf16.msra.mxu0 0
      %714 = vmatprep.subr.bf16.mxu0 0
      %715 = vmatpush1.bf16.msra.mxu0 0
      %716 = vmatprep.subr.bf16.mxu0 0
      %717 = vmatpush1.bf16.msra.mxu0 0
      %718 = vmatprep.subr.bf16.mxu0 0
      %719 = vmatpush1.bf16.msra.mxu0 0
      %720 = vmatprep.subr.bf16.mxu0 0
      %721 = vmatpush1.bf16.msra.mxu0 0
      %722 = vmatprep.subr.bf16.mxu0 0
      %723 = vmatpush1.bf16.msra.mxu0 0
      %724 = vmatprep.subr.bf16.mxu0 0
      %725 = vmatpush1.bf16.msra.mxu0 0
      %726 = vmatprep.subr.bf16.mxu0 0
      %727 = vmatpush1.bf16.msra.mxu0 0
      %728 = vmatprep.subr.bf16.mxu0 0
      %729 = vmatpush1.bf16.msra.mxu0 0
      %730 = vmatprep.subr.bf16.mxu0 0
      %731 = vmatpush1.bf16.msra.mxu0 0
      %732 = vmatprep.subr.bf16.mxu0 0
      %733 = vmatpush1.bf16.msra.mxu0 0
      %734 = vmatprep.subr.bf16.mxu0 0
      %735 = vmatpush1.bf16.msra.mxu0 0
      %736 = vmatprep.subr.bf16.mxu0 0
      %737 = vmatpush1.bf16.msra.mxu0 0
      %738 = vmatprep.mubr.bf16.mxu0 0
      %739 = vmatmul.mubr.bf16.gmra.mrb[0].mxu0 %v704
      %v740 = vpop.f32.mrb[0].mxu0
      %v741 = vadd.f32 0.0, %v740
      %v742 = vpop.f32.mrb[0].mxu0
      %v743 = vpop.f32.mrb[0].mxu0
      %v744 = vadd.f32 0.0, %v743
      %v745 = vpop.f32.mrb[0].mxu0
      %746 = vdwg.mxu0
      %749 = vrot.lane.b32.xlu0 %v741, 96
      %v750 = vpop.permute.xlu0 %749
      %751 = vrot.lane.b32.xlu0 %v744, 96
      %v752 = vpop.permute.xlu0 %751
      %vm755 = vcmask 1048320
      %756 = vst.msk [vmem:[%s210] sm:$0xff] %vm755, %v750
      %757 = vst.msk [vmem:[%s210 + $0x8] sm:$0xff] %vm755, %v752
      %p758 = scmp.lt.s32.totalorder %s14, 1
      %s759 = scalar_select %p758, %s14, 1
      %s760 = smul.addr %s759, 2
      %s761 = smul.addr %s760, 8
      %s762 = scalar_lea.vmem %s3, %s761
      // Predicated region
      $region33: #{vit_encoder_forward.11} parent=31 // pred_check
        %p763 = pneg %p110
      $region34: #{vit_encoder_forward.11} parent=31 // pred_check_branch
        %765 = sbr.rel (%p763) target = $region36
      $region35: #{vit_encoder_forward.11} parent=31 // pred_region
        _
      $region36: #{vit_encoder_forward.11} parent=31 // pred_fallthru
        _
    $region32: #{vit_encoder_forward.11} parent=5 // pred_fallthru
      _
    %p766 = scmp.le.s32.totalorder 2, %s9
    // Predicated region
    $region37: #{vit_encoder_forward.11} parent=5 // pred_check
      %p767 = pneg %p766
    $region38: #{vit_encoder_forward.11} parent=5 // pred_check_branch
      %769 = sbr.rel (%p767) target = $region40
    $region39: #{vit_encoder_forward.11} parent=5 // pred_region
      %s770 = ssub.s32 %s9, 2
      // Predicated region
      $region41: #{vit_encoder_forward.11} parent=39 // pred_check
        %p771 = pneg %p116
      $region42: #{vit_encoder_forward.11} parent=39 // pred_check_branch
        %773 = sbr.rel (%p771) target = $region44
      $region43: #{vit_encoder_forward.11} parent=39 // pred_region
        %p774 = scmp.lt.s32.totalorder %s15, 1
        %s775 = scalar_select %p774, %s15, 1
        %s776 = smul.addr %s775, 2
        %s777 = smul.addr %s776, 8
        %s778 = scalar_lea.vmem %s3, %s777
      $region44: #{vit_encoder_forward.11} parent=39 // pred_fallthru
        _
    $region40: #{vit_encoder_forward.11} parent=5 // pred_fallthru
      _
  $region6: #{vit_encoder_forward.11} parent=0 // loop_footer
    %s13 = sadd.s32 1, %s9
  $region7: #{vit_encoder_forward.11} parent=0 // loop_footer_branch
    %8 = sbr.rel target = $region3
  $region8: #{vit_encoder_forward.11} parent=0 // loop_exit
    _

// kernel: vit_encoder_forward.13
$region0: #{vit_encoder_forward.13}
  #allocation0 [shape = 'u32[]', space=smem, size = 0x4, offset = 0x4, fixed_abs, tag = 'smem constant byte address 0x4 - core index']
  #allocation1 [shape = 'u32[144,128]{1,0:T(1,128)}', space=vmem, size = 0x12000, scoped, tag = 'internal scratch']
  %s0 = inlined_call_operand.vmem [shape: f32[32,128], index: 0, kind: input, shape index: {}, may-alias: {0,7}]
  %s1 = inlined_call_operand.vmem [shape: f32[1,128], index: 1, kind: input, shape index: {}]
  %s2 = inlined_call_operand.vmem [shape: f32[1,128], index: 2, kind: input, shape index: {}]
  %s3 = inlined_call_operand.vmem [shape: bf16[128,256], index: 3, kind: input, shape index: {}]
  %s4 = inlined_call_operand.vmem [shape: f32[1,256], index: 4, kind: input, shape index: {}]
  %s5 = inlined_call_operand.vmem [shape: bf16[256,128], index: 5, kind: input, shape index: {}]
  %s6 = inlined_call_operand.vmem [shape: f32[1,128], index: 6, kind: input, shape index: {}]
  %s7 = inlined_call_operand.vmem [shape: f32[32,128], index: 7, kind: input, shape index: {}, may-alias: {0,7}]
  %s8 = inlined_call_operand.vmem [shape: f32[32,128], index: 8, kind: output, shape index: {}]
  %s9 = sld [smem:[#allocation0]]
  $region65: #{vit_encoder_forward.13} parent=0
    _
  %s11 = ssub.s32 1, %s9
  %s12 = scalar_select 0, %s11, %s9
  loop: start=0, step=1, limit=4
  $region2: #{vit_encoder_forward.13} parent=0 // loop_pre_header
    _
  $region3: #{vit_encoder_forward.13} parent=0 // loop_header
    %s14 = sphi 0, %s18
    %p15 = scmp.ge.s32.totalorder %s14, 4
    %s24 = sphi 0, %s26
    %s27 = sphi 0, %s24
    %s28 = sphi 0, %s27
    %s44 = sphi 0, %s28
    %s48 = sphi 0, %s48
    %s50 = sphi 0, %s48
    %s51 = sphi 0, %s50
    %s65 = sphi 0, %s51
    %s69 = sphi 0, %s69
    %s71 = sphi 0, %s69
    %s72 = sphi 0, %s71
    %s86 = sphi 0, %s72
    %s90 = sphi 0, %s90
    %s92 = sphi 0, %s90
    %s93 = sphi 0, %s92
    %s107 = sphi 0, %s93
    %s111 = sphi 0, %s111
    %s113 = sphi 0, %s111
    %s114 = sphi 0, %s113
    %s128 = sphi 0, %s114
    %s132 = sphi 0, %s132
    %s134 = sphi 0, %s132
    %s135 = sphi 0, %s134
    %s149 = sphi 0, %s135
    %s153 = sphi 0, %s153
    %s155 = sphi 0, %s153
    %s156 = sphi 0, %s155
    %s170 = sphi 0, %s156
    %s176 = sphi 0, %s178
    %s179 = sphi 0, %s176
    %s180 = sphi 0, %s179
    %s196 = sphi 0, %s180
    %s202 = sphi 0, %s204
    %s205 = sphi 0, %s202
    %s206 = sphi 0, %s205
    %s222 = sphi 0, %s206
  $region4: #{vit_encoder_forward.13} parent=0 // loop_header_branch
    %17 = sbr.rel (%p15) target = $region8
  $region5: #{vit_encoder_forward.13} parent=0 // loop_body
    %s19 = ssub.s32 %s14, 1
    %s20 = ssub.s32 %s14, 2
    %s21 = sadd.s32 %s14, 1
    %s22 = ssub.s32 %s14, %s21
    %p23 = scmp.eq.s32.totalorder %s22, 0
    %s25 = sadd.s32 %s24, 1
    %s26 = scalar_select %p23, %s24, %s25
    %p29 = pneg %p23
    %p30 = scmp.eq.s32.totalorder %s14, 1
    %p31 = por %p29, %p30
    %p32 = scmp.ne.s32.totalorder %s24, %s27
    %p33 = scmp.eq.s32.totalorder %s14, 0
    %p34 = por %p32, %p33
    %p35 = scmp.ne.s32.totalorder %s24, %s27
    %p36 = scmp.eq.s32.totalorder %s19, 1
    %p37 = por %p35, %p36
    %p38 = scmp.ne.s32.totalorder %s27, %s28
    %p39 = scmp.eq.s32.totalorder %s19, 0
    %p40 = por %p38, %p39
    %p41 = scmp.ne.s32.totalorder %s27, %s28
    %p42 = scmp.eq.s32.totalorder %s20, 1
    %p43 = por %p41, %p42
    %p45 = scmp.ne.s32.totalorder %s28, %s44
    %p46 = scmp.eq.s32.totalorder %s20, 0
    %p47 = por %p45, %p46
    %s49 = sadd.s32 %s48, 1
    %p52 = scmp.eq.s32.totalorder %s14, 1
    %p53 = scmp.ne.s32.totalorder %s48, %s50
    %p54 = scmp.eq.s32.totalorder %s14, 0
    %p55 = por %p53, %p54
    %p56 = scmp.ne.s32.totalorder %s48, %s50
    %p57 = scmp.eq.s32.totalorder %s19, 1
    %p58 = por %p56, %p57
    %p59 = scmp.ne.s32.totalorder %s50, %s51
    %p60 = scmp.eq.s32.totalorder %s19, 0
    %p61 = por %p59, %p60
    %p62 = scmp.ne.s32.totalorder %s50, %s51
    %p63 = scmp.eq.s32.totalorder %s20, 1
    %p64 = por %p62, %p63
    %p66 = scmp.ne.s32.totalorder %s51, %s65
    %p67 = scmp.eq.s32.totalorder %s20, 0
    %p68 = por %p66, %p67
    %s70 = sadd.s32 %s69, 1
    %p73 = scmp.eq.s32.totalorder %s14, 1
    %p74 = scmp.ne.s32.totalorder %s69, %s71
    %p75 = scmp.eq.s32.totalorder %s14, 0
    %p76 = por %p74, %p75
    %p77 = scmp.ne.s32.totalorder %s69, %s71
    %p78 = scmp.eq.s32.totalorder %s19, 1
    %p79 = por %p77, %p78
    %p80 = scmp.ne.s32.totalorder %s71, %s72
    %p81 = scmp.eq.s32.totalorder %s19, 0
    %p82 = por %p80, %p81
    %p83 = scmp.ne.s32.totalorder %s71, %s72
    %p84 = scmp.eq.s32.totalorder %s20, 1
    %p85 = por %p83, %p84
    %p87 = scmp.ne.s32.totalorder %s72, %s86
    %p88 = scmp.eq.s32.totalorder %s20, 0
    %p89 = por %p87, %p88
    %s91 = sadd.s32 %s90, 1
    %p94 = scmp.eq.s32.totalorder %s14, 1
    %p95 = scmp.ne.s32.totalorder %s90, %s92
    %p96 = scmp.eq.s32.totalorder %s14, 0
    %p97 = por %p95, %p96
    %p98 = scmp.ne.s32.totalorder %s90, %s92
    %p99 = scmp.eq.s32.totalorder %s19, 1
    %p100 = por %p98, %p99
    %p101 = scmp.ne.s32.totalorder %s92, %s93
    %p102 = scmp.eq.s32.totalorder %s19, 0
    %p103 = por %p101, %p102
    %p104 = scmp.ne.s32.totalorder %s92, %s93
    %p105 = scmp.eq.s32.totalorder %s20, 1
    %p106 = por %p104, %p105
    %p108 = scmp.ne.s32.totalorder %s93, %s107
    %p109 = scmp.eq.s32.totalorder %s20, 0
    %p110 = por %p108, %p109
    %s112 = sadd.s32 %s111, 1
    %p115 = scmp.eq.s32.totalorder %s14, 1
    %p116 = scmp.ne.s32.totalorder %s111, %s113
    %p117 = scmp.eq.s32.totalorder %s14, 0
    %p118 = por %p116, %p117
    %p119 = scmp.ne.s32.totalorder %s111, %s113
    %p120 = scmp.eq.s32.totalorder %s19, 1
    %p121 = por %p119, %p120
    %p122 = scmp.ne.s32.totalorder %s113, %s114
    %p123 = scmp.eq.s32.totalorder %s19, 0
    %p124 = por %p122, %p123
    %p125 = scmp.ne.s32.totalorder %s113, %s114
    %p126 = scmp.eq.s32.totalorder %s20, 1
    %p127 = por %p125, %p126
    %p129 = scmp.ne.s32.totalorder %s114, %s128
    %p130 = scmp.eq.s32.totalorder %s20, 0
    %p131 = por %p129, %p130
    %s133 = sadd.s32 %s132, 1
    %p136 = scmp.eq.s32.totalorder %s14, 1
    %p137 = scmp.ne.s32.totalorder %s132, %s134
    %p138 = scmp.eq.s32.totalorder %s14, 0
    %p139 = por %p137, %p138
    %p140 = scmp.ne.s32.totalorder %s132, %s134
    %p141 = scmp.eq.s32.totalorder %s19, 1
    %p142 = por %p140, %p141
    %p143 = scmp.ne.s32.totalorder %s134, %s135
    %p144 = scmp.eq.s32.totalorder %s19, 0
    %p145 = por %p143, %p144
    %p146 = scmp.ne.s32.totalorder %s134, %s135
    %p147 = scmp.eq.s32.totalorder %s20, 1
    %p148 = por %p146, %p147
    %p150 = scmp.ne.s32.totalorder %s135, %s149
    %p151 = scmp.eq.s32.totalorder %s20, 0
    %p152 = por %p150, %p151
    %s154 = sadd.s32 %s153, 1
    %p157 = scmp.eq.s32.totalorder %s14, 1
    %p158 = scmp.ne.s32.totalorder %s153, %s155
    %p159 = scmp.eq.s32.totalorder %s14, 0
    %p160 = por %p158, %p159
    %p161 = scmp.ne.s32.totalorder %s153, %s155
    %p162 = scmp.eq.s32.totalorder %s19, 1
    %p163 = por %p161, %p162
    %p164 = scmp.ne.s32.totalorder %s155, %s156
    %p165 = scmp.eq.s32.totalorder %s19, 0
    %p166 = por %p164, %p165
    %p167 = scmp.ne.s32.totalorder %s155, %s156
    %p168 = scmp.eq.s32.totalorder %s20, 1
    %p169 = por %p167, %p168
    %p171 = scmp.ne.s32.totalorder %s156, %s170
    %p172 = scmp.eq.s32.totalorder %s20, 0
    %p173 = por %p171, %p172
    %s174 = ssub.s32 %s14, %s21
    %p175 = scmp.eq.s32.totalorder %s174, 0
    %s177 = sadd.s32 %s176, 1
    %s178 = scalar_select %p175, %s176, %s177
    %p181 = pneg %p175
    %p182 = scmp.eq.s32.totalorder %s14, 1
    %p183 = por %p181, %p182
    %p184 = scmp.ne.s32.totalorder %s176, %s179
    %p185 = scmp.eq.s32.totalorder %s14, 0
    %p186 = por %p184, %p185
    %p187 = scmp.ne.s32.totalorder %s176, %s179
    %p188 = scmp.eq.s32.totalorder %s19, 1
    %p189 = por %p187, %p188
    %p190 = scmp.ne.s32.totalorder %s179, %s180
    %p191 = scmp.eq.s32.totalorder %s19, 0
    %p192 = por %p190, %p191
    %p193 = scmp.ne.s32.totalorder %s179, %s180
    %p194 = scmp.eq.s32.totalorder %s20, 1
    %p195 = por %p193, %p194
    %p197 = scmp.ne.s32.totalorder %s180, %s196
    %p198 = scmp.eq.s32.totalorder %s20, 0
    %p199 = por %p197, %p198
    %s200 = ssub.s32 %s14, %s21
    %p201 = scmp.eq.s32.totalorder %s200, 0
    %s203 = sadd.s32 %s202, 1
    %s204 = scalar_select %p201, %s202, %s203
    %p207 = pneg %p201
    %p208 = scmp.eq.s32.totalorder %s14, 1
    %p209 = por %p207, %p208
    %p210 = scmp.ne.s32.totalorder %s202, %s205
    %p211 = scmp.eq.s32.totalorder %s14, 0
    %p212 = por %p210, %p211
    %p213 = scmp.ne.s32.totalorder %s202, %s205
    %p214 = scmp.eq.s32.totalorder %s19, 1
    %p215 = por %p213, %p214
    %p216 = scmp.ne.s32.totalorder %s205, %s206
    %p217 = scmp.eq.s32.totalorder %s19, 0
    %p218 = por %p216, %p217
    %p219 = scmp.ne.s32.totalorder %s205, %s206
    %p220 = scmp.eq.s32.totalorder %s20, 1
    %p221 = por %p219, %p220
    %p223 = scmp.ne.s32.totalorder %s206, %s222
    %p224 = scmp.eq.s32.totalorder %s20, 0
    %p225 = por %p223, %p224
    %p226 = scmp.le.s32.totalorder 1, %s14
    %p227 = scmp.lt.s32.totalorder %s14, 3
    %p228 = pnand %p226, %p227
    %p229 = pneg %p228
    // Predicated region
    $region9: #{vit_encoder_forward.13} parent=5 // pred_check
      _
    $region10: #{vit_encoder_forward.13} parent=5 // pred_check_branch
      %231 = sbr.rel (%p228) target = $region12
    $region11: #{vit_encoder_forward.13} parent=5 // pred_region
      %s232 = ssub.s32 %s14, 1
      // Predicated region
      $region13: #{vit_encoder_forward.13} parent=11 // pred_check
        %p233 = pneg %p61
      $region14: #{vit_encoder_forward.13} parent=11 // pred_check_branch
        %235 = sbr.rel (%p233) target = $region16
      $region15: #{vit_encoder_forward.13} parent=11 // pred_region
        _
      $region16: #{vit_encoder_forward.13} parent=11 // pred_fallthru
        _
      // Predicated region
      $region17: #{vit_encoder_forward.13} parent=11 // pred_check
        %p236 = pneg %p82
      $region18: #{vit_encoder_forward.13} parent=11 // pred_check_branch
        %238 = sbr.rel (%p236) target = $region20
      $region19: #{vit_encoder_forward.13} parent=11 // pred_region
        _
      $region20: #{vit_encoder_forward.13} parent=11 // pred_fallthru
        _
      // Predicated region
      $region21: #{vit_encoder_forward.13} parent=11 // pred_check
        %p239 = pneg %p103
      $region22: #{vit_encoder_forward.13} parent=11 // pred_check_branch
        %241 = sbr.rel (%p239) target = $region24
      $region23: #{vit_encoder_forward.13} parent=11 // pred_region
        _
      $region24: #{vit_encoder_forward.13} parent=11 // pred_fallthru
        _
      // Predicated region
      $region25: #{vit_encoder_forward.13} parent=11 // pred_check
        %p242 = pneg %p124
      $region26: #{vit_encoder_forward.13} parent=11 // pred_check_branch
        %244 = sbr.rel (%p242) target = $region28
      $region27: #{vit_encoder_forward.13} parent=11 // pred_region
        _
      $region28: #{vit_encoder_forward.13} parent=11 // pred_fallthru
        _
      // Predicated region
      $region29: #{vit_encoder_forward.13} parent=11 // pred_check
        %p245 = pneg %p145
      $region30: #{vit_encoder_forward.13} parent=11 // pred_check_branch
        %247 = sbr.rel (%p245) target = $region32
      $region31: #{vit_encoder_forward.13} parent=11 // pred_region
        _
      $region32: #{vit_encoder_forward.13} parent=11 // pred_fallthru
        _
      // Predicated region
      $region33: #{vit_encoder_forward.13} parent=11 // pred_check
        %p248 = pneg %p166
      $region34: #{vit_encoder_forward.13} parent=11 // pred_check_branch
        %250 = sbr.rel (%p248) target = $region36
      $region35: #{vit_encoder_forward.13} parent=11 // pred_region
        _
      $region36: #{vit_encoder_forward.13} parent=11 // pred_fallthru
        _
    $region12: #{vit_encoder_forward.13} parent=5 // pred_fallthru
      _
    %p251 = scmp.lt.s32.totalorder %s14, 2
    // Predicated region
    $region37: #{vit_encoder_forward.13} parent=5 // pred_check
      %p252 = pneg %p251
    $region38: #{vit_encoder_forward.13} parent=5 // pred_check_branch
      %254 = sbr.rel (%p252) target = $region40
    $region39: #{vit_encoder_forward.13} parent=5 // pred_region
      // Predicated region
      $region41: #{vit_encoder_forward.13} parent=39 // pred_check
        %p255 = pneg %p34
      $region42: #{vit_encoder_forward.13} parent=39 // pred_check_branch
        %257 = sbr.rel (%p255) target = $region44
      $region43: #{vit_encoder_forward.13} parent=39 // pred_region
        %s258 = smul.u32 2, %s14
        %p259 = scmp.lt.s32.totalorder %s258, 3
        %s260 = scalar_select %p259, %s258, 3
        %s261 = smul.addr %s260, 8
        %s262 = scalar_lea.vmem %s0, %s261
        %s263 = smul.u32 2, %s14
      $region44: #{vit_encoder_forward.13} parent=39 // pred_fallthru
        _
      // Predicated region
      $region45: #{vit_encoder_forward.13} parent=39 // pred_check
        %p264 = pneg %p186
      $region46: #{vit_encoder_forward.13} parent=39 // pred_check_branch
        %266 = sbr.rel (%p264) target = $region48
      $region47: #{vit_encoder_forward.13} parent=39 // pred_region
        %s267 = smul.u32 2, %s14
        %p268 = scmp.lt.s32.totalorder %s267, 3
        %s269 = scalar_select %p268, %s267, 3
        %s270 = smul.addr %s269, 8
        %s271 = scalar_lea.vmem %s7, %s270
        %s272 = smul.u32 2, %s14
      $region48: #{vit_encoder_forward.13} parent=39 // pred_fallthru
        _
    $region40: #{vit_encoder_forward.13} parent=5 // pred_fallthru
      _
    %p273 = scmp.le.s32.totalorder 1, %s14
    %p274 = scmp.lt.s32.totalorder %s14, 3
    %p275 = pnand %p273, %p274
    %p276 = pneg %p275
    // Predicated region
    $region49: #{vit_encoder_forward.13} parent=5 // pred_check
      _
    $region50: #{vit_encoder_forward.13} parent=5 // pred_check_branch
      %278 = sbr.rel (%p275) target = $region52
    $region51: #{vit_encoder_forward.13} parent=5 // pred_region
      %s279 = ssub.s32 %s14, 1
      %s280 = smul.u32 2, %s19
      %p281 = scmp.lt.s32.totalorder %s280, 3
      %s282 = scalar_select %p281, %s280, 3
      %s283 = smul.addr %s282, 8
      %s284 = scalar_lea.vmem %s0, %s283
      %p285 = pneg %p40
      %p286 = pneg %p37
      %p287 = pneg %p61
      %p288 = pneg %p58
      %p289 = pneg %p82
      %p290 = pneg %p79
      %p291 = pneg %p103
      %p292 = pneg %p100
      %p293 = pneg %p124
      %p294 = pneg %p121
      %p295 = pneg %p145
      %p296 = pneg %p142
      %p297 = pneg %p166
      %p298 = pneg %p163
      %s299 = smul.u32 2, %s19
      %p300 = scmp.lt.s32.totalorder %s299, 3
      %s301 = scalar_select %p300, %s299, 3
      %s302 = smul.addr %s301, 8
      %s303 = scalar_lea.vmem %s7, %s302
      %p304 = pneg %p192
      %p305 = pneg %p189
      %p306 = pneg %p218
      %p307 = pneg %p215
      %s308 = smul.u32 2, %s19
      %p309 = scmp.lt.s32.totalorder %s308, 3
      %s310 = scalar_select %p309, %s308, 3
      %s311 = smul.addr %s310, 8
      %s312 = scalar_lea.vmem %s8, %s311
      %s313 = smul.u32 2, %s19
      %p314 = scmp.lt.s32.totalorder %s313, 3
      %s315 = scalar_select %p314, %s313, 3
      %s316 = smul.addr %s315, 8
      %s317 = scalar_lea.vmem %s0, %s316
      %s318 = smul.u32 2, %s19
      %s319 = smul.u32 2, %s19
      %p320 = scmp.lt.s32.totalorder %s319, 3
      %s321 = scalar_select %p320, %s319, 3
      %s322 = smul.addr %s321, 8
      %s323 = scalar_lea.vmem %s7, %s322
      %s324 = smul.u32 2, %s19
      %s325 = smul.u32 2, %s19
      %p326 = scmp.lt.s32.totalorder %s325, 3
      %s327 = scalar_select %p326, %s325, 3
      %s328 = smul.addr %s327, 8
      %s329 = scalar_lea.vmem %s8, %s328
      %s330 = smul.u32 2, %s19
      %v332 = vld [vmem:[%s317] sm:$0xff]
      %v333 = vld [vmem:[%s317 + $0x8] sm:$0xff]
      %334 = vadd.xlane.f32.xlu0 %v332
      %v335 = vpop.xlane.xlu0 %334
      %336 = vadd.xlane.f32.xlu0 %v333
      %v337 = vpop.xlane.xlu0 %336
      %v338 = vrcp.pop 128.0
      %v339 = vmul.f32 %v335, %v338
      %v340 = vmul.f32 %v337, %v338
      %v341 = vsub.f32 %v332, %v339
      %v342 = vsub.f32 %v333, %v340
      %v343 = vmul.f32 %v341, %v341
      %v344 = vmul.f32 %v342, %v342
      %345 = vadd.xlane.f32.xlu0 %v343
      %v346 = vpop.xlane.xlu0 %345
      %347 = vadd.xlane.f32.xlu0 %v344
      %v348 = vpop.xlane.xlu0 %347
      %v349 = vmul.f32 %v346, %v338
      %v350 = vmul.f32 %v348, %v338
      %v351 = vadd.f32 %v349, 1e-05
      %v352 = vadd.f32 %v350, 1e-05
      %v353 = vrsqrt.pop %v351
      %v354 = vrsqrt.pop %v352
      %v355 = vmul.f32 %v341, %v353
      %v356 = vmul.f32 %v342, %v354
      %v357 = vld [vmem:[%s1] sm:$0x1]
      %v359 = vlaneseq
      %v360 = vshrl.u32 %v359, 7
      %v361 = vsub.s32 0, %v360
      %v362 = vrot.slane %v357, %v361
      %v364 = vmul.f32 %v355, %v362
      %v365 = vmul.f32 %v356, %v362
      %v366 = vld [vmem:[%s2] sm:$0x1]
      %v368 = vlaneseq
      %v369 = vshrl.u32 %v368, 7
      %v370 = vsub.s32 0, %v369
      %v371 = vrot.slane %v366, %v370
      %v373 = vadd.f32 %v364, %v371
      %v374 = vadd.f32 %v365, %v371
      %v375 = vpack.c.bf16 %v374, %v373
      %v376 = vld [vmem:[%s3] sm:$0xff]
      %v377 = vld [vmem:[%s3 + $0x8] sm:$0xff]
      %v378 = vld [vmem:[%s3 + $0x10] sm:$0xff]
      %v379 = vld [vmem:[%s3 + $0x18] sm:$0xff]
      %v380 = vld [vmem:[%s3 + $0x20] sm:$0xff]
      %v381 = vld [vmem:[%s3 + $0x28] sm:$0xff]
      %v382 = vld [vmem:[%s3 + $0x30] sm:$0xff]
      %v383 = vld [vmem:[%s3 + $0x38] sm:$0xff]
      %v384 = vld [vmem:[%s3 + $0x40] sm:$0xff]
      %v385 = vld [vmem:[%s3 + $0x48] sm:$0xff]
      %v386 = vld [vmem:[%s3 + $0x50] sm:$0xff]
      %v387 = vld [vmem:[%s3 + $0x58] sm:$0xff]
      %v388 = vld [vmem:[%s3 + $0x60] sm:$0xff]
      %v389 = vld [vmem:[%s3 + $0x68] sm:$0xff]
      %v390 = vld [vmem:[%s3 + $0x70] sm:$0xff]
      %v391 = vld [vmem:[%s3 + $0x78] sm:$0xff]
      %v392 = vld [vmem:[%s4] sm:$0x3]
      %v394 = vlaneseq
      %v395 = vshrl.u32 %v394, 7
      %v396 = vsub.s32 0, %v395
      %v397 = vrot.slane %v392, %v396
      %v398 = vlaneseq
      %v399 = vshrl.u32 %v398, 7
      %v400 = vsub.s32 1, %v399
      %v401 = vrot.slane %v392, %v400
      %v420 = vunpack.c.l.b16 %v376
      %v421 = vunpack.c.h.b16 %v376
      %v422 = vunpack.c.l.b16 %v377
      %v423 = vunpack.c.h.b16 %v377
      %v424 = vunpack.c.l.b16 %v378
      %v425 = vunpack.c.h.b16 %v378
      %v426 = vunpack.c.l.b16 %v379
      %v427 = vunpack.c.h.b16 %v379
      %v428 = vunpack.c.l.b16 %v380
      %v429 = vunpack.c.h.b16 %v380
      %v430 = vunpack.c.l.b16 %v381
      %v431 = vunpack.c.h.b16 %v381
      %v432 = vunpack.c.l.b16 %v382
      %v433 = vunpack.c.h.b16 %v382
      %v434 = vunpack.c.l.b16 %v383
      %v435 = vunpack.c.h.b16 %v383
      %v436 = vunpack.c.l.b16 %v384
      %v437 = vunpack.c.h.b16 %v384
      %v438 = vunpack.c.l.b16 %v385
      %v439 = vunpack.c.h.b16 %v385
      %v440 = vunpack.c.l.b16 %v386
      %v441 = vunpack.c.h.b16 %v386
      %v442 = vunpack.c.l.b16 %v387
      %v443 = vunpack.c.h.b16 %v387
      %v444 = vunpack.c.l.b16 %v388
      %v445 = vunpack.c.h.b16 %v388
      %v446 = vunpack.c.l.b16 %v389
      %v447 = vunpack.c.h.b16 %v389
      %v448 = vunpack.c.l.b16 %v390
      %v449 = vunpack.c.h.b16 %v390
      %v450 = vunpack.c.l.b16 %v391
      %v451 = vunpack.c.h.b16 %v391
      %v452 = vpack.c.b16 %v422, %v420
      %v453 = vpack.c.b16 %v423, %v421
      %v454 = vpack.c.b16 %v426, %v424
      %v455 = vpack.c.b16 %v427, %v425
      %v456 = vpack.c.b16 %v430, %v428
      %v457 = vpack.c.b16 %v431, %v429
      %v458 = vpack.c.b16 %v434, %v432
      %v459 = vpack.c.b16 %v435, %v433
      %v460 = vpack.c.b16 %v438, %v436
      %v461 = vpack.c.b16 %v439, %v437
      %v462 = vpack.c.b16 %v442, %v440
      %v463 = vpack.c.b16 %v443, %v441
      %v464 = vpack.c.b16 %v446, %v444
      %v465 = vpack.c.b16 %v447, %v445
      %v466 = vpack.c.b16 %v450, %v448
      %v467 = vpack.c.b16 %v451, %v449
      %484 = vmatprep.subr.bf16.mxu0 %v453
      %485 = vmatpush1.bf16.msra.mxu0 %v452
      %486 = vmatprep.subr.bf16.mxu0 %v455
      %487 = vmatpush1.bf16.msra.mxu0 %v454
      %488 = vmatprep.subr.bf16.mxu0 %v457
      %489 = vmatpush1.bf16.msra.mxu0 %v456
      %490 = vmatprep.subr.bf16.mxu0 %v459
      %491 = vmatpush1.bf16.msra.mxu0 %v458
      %492 = vmatprep.subr.bf16.mxu0 %v461
      %493 = vmatpush1.bf16.msra.mxu0 %v460
      %494 = vmatprep.subr.bf16.mxu0 %v463
      %495 = vmatpush1.bf16.msra.mxu0 %v462
      %496 = vmatprep.subr.bf16.mxu0 %v465
      %497 = vmatpush1.bf16.msra.mxu0 %v464
      %498 = vmatprep.subr.bf16.mxu0 %v467
      %499 = vmatpush1.bf16.msra.mxu0 %v466
      %500 = vmatprep.subr.bf16.mxu0 0
      %501 = vmatpush1.bf16.msra.mxu0 0
      %502 = vmatprep.subr.bf16.mxu0 0
      %503 = vmatpush1.bf16.msra.mxu0 0
      %504 = vmatprep.subr.bf16.mxu0 0
      %505 = vmatpush1.bf16.msra.mxu0 0
      %506 = vmatprep.subr.bf16.mxu0 0
      %507 = vmatpush1.bf16.msra.mxu0 0
      %508 = vmatprep.subr.bf16.mxu0 0
      %509 = vmatpush1.bf16.msra.mxu0 0
      %510 = vmatprep.subr.bf16.mxu0 0
      %511 = vmatpush1.bf16.msra.mxu0 0
      %512 = vmatprep.subr.bf16.mxu0 0
      %513 = vmatpush1.bf16.msra.mxu0 0
      %514 = vmatprep.subr.bf16.mxu0 0
      %515 = vmatpush1.bf16.msra.mxu0 0
      %516 = vmatprep.mubr.bf16.mxu0 0
      %517 = vmatmul.mubr.bf16.gmra.mrb[0].mxu0 %v375
      %v518 = vpop.f32.mrb[0].mxu0
      %v519 = vadd.f32 %v397, %v518
      %v520 = vpop.f32.mrb[0].mxu0
      %v521 = vadd.f32 %v401, %v520
      %v522 = vpop.f32.mrb[0].mxu0
      %v523 = vadd.f32 %v397, %v522
      %v524 = vpop.f32.mrb[0].mxu0
      %v525 = vadd.f32 %v401, %v524
      %526 = vdwg.mxu0
      %v527 = vmul.f32 %v519, %v519
      %v528 = vmul.f32 %v521, %v521
      %v529 = vmul.f32 %v523, %v523
      %v530 = vmul.f32 %v525, %v525
      %v531 = vmul.f32 %v519, %v527
      %v532 = vmul.f32 %v521, %v528
      %v533 = vmul.f32 %v523, %v529
      %v534 = vmul.f32 %v525, %v530
      %v535 = vmul.f32 %v531, 0.044715
      %v536 = vmul.f32 %v532, 0.044715
      %v537 = vmul.f32 %v533, 0.044715
      %v538 = vmul.f32 %v534, 0.044715
      %v539 = vadd.f32 %v519, %v535
      %v540 = vadd.f32 %v521, %v536
      %v541 = vadd.f32 %v523, %v537
      %v542 = vadd.f32 %v525, %v538
      %v543 = vmul.f32 %v539, 0.7978846
      %v544 = vmul.f32 %v540, 0.7978846
      %v545 = vmul.f32 %v541, 0.7978846
      %v546 = vmul.f32 %v542, 0.7978846
      %v547 = vtanh.pop %v543
      %v548 = vtanh.pop %v544
      %v549 = vtanh.pop %v545
      %v550 = vtanh.pop %v546
      %v551 = vadd.f32 %v547, 1.0
      %v552 = vadd.f32 %v548, 1.0
      %v553 = vadd.f32 %v549, 1.0
      %v554 = vadd.f32 %v550, 1.0
      %v555 = vmul.f32 %v551, 0.5
      %v556 = vmul.f32 %v552, 0.5
      %v557 = vmul.f32 %v553, 0.5
      %v558 = vmul.f32 %v554, 0.5
      %v559 = vmul.f32 %v519, %v555
      %v560 = vmul.f32 %v521, %v556
      %v561 = vmul.f32 %v523, %v557
      %v562 = vmul.f32 %v525, %v558
      %v563 = vpack.c.bf16 %v561, %v559
      %v564 = vpack.c.bf16 %v562, %v560
      %v565 = vld [vmem:[%s5] sm:$0xf]
      %v566 = vld [vmem:[%s5 + $0x4] sm:$0xf]
      %v567 = vld [vmem:[%s5 + $0x8] sm:$0xf]
      %v568 = vld [vmem:[%s5 + $0xc] sm:$0xf]
      %v569 = vld [vmem:[%s5 + $0x10] sm:$0xf]
      %v570 = vld [vmem:[%s5 + $0x14] sm:$0xf]
      %v571 = vld [vmem:[%s5 + $0x18] sm:$0xf]
      %v572 = vld [vmem:[%s5 + $0x1c] sm:$0xf]
      %v573 = vld [vmem:[%s5 + $0x20] sm:$0xf]
      %v574 = vld [vmem:[%s5 + $0x24] sm:$0xf]
      %v575 = vld [vmem:[%s5 + $0x28] sm:$0xf]
      %v576 = vld [vmem:[%s5 + $0x2c] sm:$0xf]
      %v577 = vld [vmem:[%s5 + $0x30] sm:$0xf]
      %v578 = vld [vmem:[%s5 + $0x34] sm:$0xf]
      %v579 = vld [vmem:[%s5 + $0x38] sm:$0xf]
      %v580 = vld [vmem:[%s5 + $0x3c] sm:$0xf]
      %v581 = vld [vmem:[%s5 + $0x40] sm:$0xf]
      %v582 = vld [vmem:[%s5 + $0x44] sm:$0xf]
      %v583 = vld [vmem:[%s5 + $0x48] sm:$0xf]
      %v584 = vld [vmem:[%s5 + $0x4c] sm:$0xf]
      %v585 = vld [vmem:[%s5 + $0x50] sm:$0xf]
      %v586 = vld [vmem:[%s5 + $0x54] sm:$0xf]
      %v587 = vld [vmem:[%s5 + $0x58] sm:$0xf]
      %v588 = vld [vmem:[%s5 + $0x5c] sm:$0xf]
      %v589 = vld [vmem:[%s5 + $0x60] sm:$0xf]
      %v590 = vld [vmem:[%s5 + $0x64] sm:$0xf]
      %v591 = vld [vmem:[%s5 + $0x68] sm:$0xf]
      %v592 = vld [vmem:[%s5 + $0x6c] sm:$0xf]
      %v593 = vld [vmem:[%s5 + $0x70] sm:$0xf]
      %v594 = vld [vmem:[%s5 + $0x74] sm:$0xf]
      %v595 = vld [vmem:[%s5 + $0x78] sm:$0xf]
      %v596 = vld [vmem:[%s5 + $0x7c] sm:$0xf]
      %v597 = vld [vmem:[%s6] sm:$0x1]
      %v599 = vlaneseq
      %v600 = vshrl.u32 %v599, 7
      %v601 = vsub.s32 0, %v600
      %v602 = vrot.slane %v597, %v601
      %v636 = vunpack.c.l.b16 %v565
      %v637 = vunpack.c.l.b16 %v566
      %v638 = vunpack.c.l.b16 %v567
      %v639 = vunpack.c.l.b16 %v568
      %v640 = vunpack.c.l.b16 %v569
      %v641 = vunpack.c.l.b16 %v570
      %v642 = vunpack.c.l.b16 %v571
      %v643 = vunpack.c.l.b16 %v572
      %v644 = vunpack.c.l.b16 %v573
      %v645 = vunpack.c.l.b16 %v574
      %v646 = vunpack.c.l.b16 %v575
      %v647 = vunpack.c.l.b16 %v576
      %v648 = vunpack.c.l.b16 %v577
      %v649 = vunpack.c.l.b16 %v578
      %v650 = vunpack.c.l.b16 %v579
      %v651 = vunpack.c.l.b16 %v580
      %v652 = vunpack.c.l.b16 %v581
      %v653 = vunpack.c.l.b16 %v582
      %v654 = vunpack.c.l.b16 %v583
      %v655 = vunpack.c.l.b16 %v584
      %v656 = vunpack.c.l.b16 %v585
      %v657 = vunpack.c.l.b16 %v586
      %v658 = vunpack.c.l.b16 %v587
      %v659 = vunpack.c.l.b16 %v588
      %v660 = vunpack.c.l.b16 %v589
      %v661 = vunpack.c.l.b16 %v590
      %v662 = vunpack.c.l.b16 %v591
      %v663 = vunpack.c.l.b16 %v592
      %v664 = vunpack.c.l.b16 %v593
      %v665 = vunpack.c.l.b16 %v594
      %v666 = vunpack.c.l.b16 %v595
      %v667 = vunpack.c.l.b16 %v596
      %v668 = vpack.c.b16 %v637, %v636
      %v669 = vpack.c.b16 %v639, %v638
      %v670 = vpack.c.b16 %v641, %v640
      %v671 = vpack.c.b16 %v643, %v642
      %v672 = vpack.c.b16 %v645, %v644
      %v673 = vpack.c.b16 %v647, %v646
      %v674 = vpack.c.b16 %v649, %v648
      %v675 = vpack.c.b16 %v651, %v650
      %v676 = vpack.c.b16 %v653, %v652
      %v677 = vpack.c.b16 %v655, %v654
      %v678 = vpack.c.b16 %v657, %v656
      %v679 = vpack.c.b16 %v659, %v658
      %v680 = vpack.c.b16 %v661, %v660
      %v681 = vpack.c.b16 %v663, %v662
      %v682 = vpack.c.b16 %v665, %v664
      %v683 = vpack.c.b16 %v667, %v666
      %700 = vmatprep.subr.bf16.mxu0 0
      %701 = vmatpush1.bf16.msra.mxu0 %v668
      %702 = vmatprep.subr.bf16.mxu0 0
      %703 = vmatpush1.bf16.msra.mxu0 %v669
      %704 = vmatprep.subr.bf16.mxu0 0
      %705 = vmatpush1.bf16.msra.mxu0 %v670
      %706 = vmatprep.subr.bf16.mxu0 0
      %707 = vmatpush1.bf16.msra.mxu0 %v671
      %708 = vmatprep.subr.bf16.mxu0 0
      %709 = vmatpush1.bf16.msra.mxu0 %v672
      %710 = vmatprep.subr.bf16.mxu0 0
      %711 = vmatpush1.bf16.msra.mxu0 %v673
      %712 = vmatprep.subr.bf16.mxu0 0
      %713 = vmatpush1.bf16.msra.mxu0 %v674
      %714 = vmatprep.subr.bf16.mxu0 0
      %715 = vmatpush1.bf16.msra.mxu0 %v675
      %716 = vmatprep.subr.bf16.mxu0 0
      %717 = vmatpush1.bf16.msra.mxu0 %v676
      %718 = vmatprep.subr.bf16.mxu0 0
      %719 = vmatpush1.bf16.msra.mxu0 %v677
      %720 = vmatprep.subr.bf16.mxu0 0
      %721 = vmatpush1.bf16.msra.mxu0 %v678
      %722 = vmatprep.subr.bf16.mxu0 0
      %723 = vmatpush1.bf16.msra.mxu0 %v679
      %724 = vmatprep.subr.bf16.mxu0 0
      %725 = vmatpush1.bf16.msra.mxu0 %v680
      %726 = vmatprep.subr.bf16.mxu0 0
      %727 = vmatpush1.bf16.msra.mxu0 %v681
      %728 = vmatprep.subr.bf16.mxu0 0
      %729 = vmatpush1.bf16.msra.mxu0 %v682
      %730 = vmatprep.subr.bf16.mxu0 0
      %731 = vmatpush1.bf16.msra.mxu0 %v683
      %732 = vmatprep.mubr.bf16.mxu0 %v564
      %733 = vmatmul.mubr.bf16.gmra.mrb[0].mxu0 %v563
      %v734 = vpop.f32.mrb[0].mxu0
      %v735 = vadd.f32 %v602, %v734
      %v736 = vpop.f32.mrb[0].mxu0
      %v737 = vpop.f32.mrb[0].mxu0
      %v738 = vadd.f32 %v602, %v737
      %v739 = vpop.f32.mrb[0].mxu0
      %740 = vdwg.mxu0
      %v741 = vld [vmem:[%s323] sm:$0xff]
      %v742 = vld [vmem:[%s323 + $0x8] sm:$0xff]
      %v743 = vadd.f32 %v735, %v741
      %v744 = vadd.f32 %v738, %v742
      %745 = vst [vmem:[%s329] sm:$0xff] %v743
      %746 = vst [vmem:[%s329 + $0x8] sm:$0xff] %v744
      %s747 = smul.u32 2, %s19
      %p748 = scmp.lt.s32.totalorder %s747, 3
      %s749 = scalar_select %p748, %s747, 3
      %s750 = smul.addr %s749, 8
      %s751 = scalar_lea.vmem %s8, %s750
      // Predicated region
      $region53: #{vit_encoder_forward.13} parent=51 // pred_check
        %p752 = pneg %p215
      $region54: #{vit_encoder_forward.13} parent=51 // pred_check_branch
        %754 = sbr.rel (%p752) target = $region56
      $region55: #{vit_encoder_forward.13} parent=51 // pred_region
        %s755 = smul.u32 2, %s19
      $region56: #{vit_encoder_forward.13} parent=51 // pred_fallthru
        _
    $region52: #{vit_encoder_forward.13} parent=5 // pred_fallthru
      _
    %p756 = scmp.le.s32.totalorder 2, %s14
    // Predicated region
    $region57: #{vit_encoder_forward.13} parent=5 // pred_check
      %p757 = pneg %p756
    $region58: #{vit_encoder_forward.13} parent=5 // pred_check_branch
      %759 = sbr.rel (%p757) target = $region60
    $region59: #{vit_encoder_forward.13} parent=5 // pred_region
      %s760 = ssub.s32 %s14, 2
      // Predicated region
      $region61: #{vit_encoder_forward.13} parent=59 // pred_check
        %p761 = pneg %p221
      $region62: #{vit_encoder_forward.13} parent=59 // pred_check_branch
        %763 = sbr.rel (%p761) target = $region64
      $region63: #{vit_encoder_forward.13} parent=59 // pred_region
        %s764 = smul.u32 2, %s20
        %p765 = scmp.lt.s32.totalorder %s764, 3
        %s766 = scalar_select %p765, %s764, 3
        %s767 = smul.addr %s766, 8
        %s768 = scalar_lea.vmem %s8, %s767
      $region64: #{vit_encoder_forward.13} parent=59 // pred_fallthru
        _
    $region60: #{vit_encoder_forward.13} parent=5 // pred_fallthru
      _
  $region6: #{vit_encoder_forward.13} parent=0 // loop_footer
    %s18 = sadd.s32 1, %s14
  $region7: #{vit_encoder_forward.13} parent=0 // loop_footer_branch
    %13 = sbr.rel target = $region3
  $region8: #{vit_encoder_forward.13} parent=0 // loop_exit
    _

// kernel: vit_encoder_forward.17
$region0: #{vit_encoder_forward.17}
  #allocation0 [shape = 'u32[]', space=smem, size = 0x4, offset = 0x4, fixed_abs, tag = 'smem constant byte address 0x4 - core index']
  #allocation1 [shape = 'u32[144,128]{1,0:T(1,128)}', space=vmem, size = 0x12000, scoped, tag = 'internal scratch']
  %s0 = inlined_call_operand.vmem [shape: f32[32,128], index: 0, kind: input, shape index: {}, may-alias: {0,7}]
  %s1 = inlined_call_operand.vmem [shape: f32[1,128], index: 1, kind: input, shape index: {}]
  %s2 = inlined_call_operand.vmem [shape: f32[1,128], index: 2, kind: input, shape index: {}]
  %s3 = inlined_call_operand.vmem [shape: bf16[128,256], index: 3, kind: input, shape index: {}]
  %s4 = inlined_call_operand.vmem [shape: f32[1,256], index: 4, kind: input, shape index: {}]
  %s5 = inlined_call_operand.vmem [shape: bf16[256,128], index: 5, kind: input, shape index: {}]
  %s6 = inlined_call_operand.vmem [shape: f32[1,128], index: 6, kind: input, shape index: {}]
  %s7 = inlined_call_operand.vmem [shape: f32[32,128], index: 7, kind: input, shape index: {}, may-alias: {0,7}]
  %s8 = inlined_call_operand.hbm [shape: f32[32,128], index: 8, kind: output, shape index: {}]
  %s9 = sld [smem:[#allocation0]]
  $region65: #{vit_encoder_forward.17} parent=0
    _
  %s11 = ssub.s32 1, %s9
  %s12 = scalar_select 0, %s11, %s9
  $region1: #{vit_encoder_forward.17} parent=0
    #allocation2 [shape = 'u8[16384]{0}', space=vmem, size = 0x4000, scoped, tag = 'output window, operand 0']
    #allocation3 [shape = 's32[2]{0}', space=sflag, size = 0x8, scoped, tag = 'scoped memory for vit_encoder_forward.17']
    %13 = vsyncpa [#allocation3], 0
    %s14 = scalar_lea.sflag [#allocation3], 1
    %15 = vsyncpa %s14, 0
    loop: start=0, step=1, limit=4
    $region2: #{vit_encoder_forward.17} parent=1 // loop_pre_header
      _
    $region3: #{vit_encoder_forward.17} parent=1 // loop_header
      %s17 = sphi 0, %s21
      %p18 = scmp.ge.s32.totalorder %s17, 4
      %s27 = sphi 0, %s29
      %s30 = sphi 0, %s27
      %s31 = sphi 0, %s30
      %s47 = sphi 0, %s31
      %s51 = sphi 0, %s51
      %s53 = sphi 0, %s51
      %s54 = sphi 0, %s53
      %s68 = sphi 0, %s54
      %s72 = sphi 0, %s72
      %s74 = sphi 0, %s72
      %s75 = sphi 0, %s74
      %s89 = sphi 0, %s75
      %s93 = sphi 0, %s93
      %s95 = sphi 0, %s93
      %s96 = sphi 0, %s95
      %s110 = sphi 0, %s96
      %s114 = sphi 0, %s114
      %s116 = sphi 0, %s114
      %s117 = sphi 0, %s116
      %s131 = sphi 0, %s117
      %s135 = sphi 0, %s135
      %s137 = sphi 0, %s135
      %s138 = sphi 0, %s137
      %s152 = sphi 0, %s138
      %s156 = sphi 0, %s156
      %s158 = sphi 0, %s156
      %s159 = sphi 0, %s158
      %s173 = sphi 0, %s159
      %s179 = sphi 0, %s181
      %s182 = sphi 0, %s179
      %s183 = sphi 0, %s182
      %s199 = sphi 0, %s183
      %s205 = sphi 0, %s207
      %s208 = sphi 0, %s205
      %s209 = sphi 0, %s208
      %s225 = sphi 0, %s209
    $region4: #{vit_encoder_forward.17} parent=1 // loop_header_branch
      %20 = sbr.rel (%p18) target = $region8
    $region5: #{vit_encoder_forward.17} parent=1 // loop_body
      %s22 = ssub.s32 %s17, 1
      %s23 = ssub.s32 %s17, 2
      %s24 = sadd.s32 %s17, 1
      %s25 = ssub.s32 %s17, %s24
      %p26 = scmp.eq.s32.totalorder %s25, 0
      %s28 = sadd.s32 %s27, 1
      %s29 = scalar_select %p26, %s27, %s28
      %p32 = pneg %p26
      %p33 = scmp.eq.s32.totalorder %s17, 1
      %p34 = por %p32, %p33
      %p35 = scmp.ne.s32.totalorder %s27, %s30
      %p36 = scmp.eq.s32.totalorder %s17, 0
      %p37 = por %p35, %p36
      %p38 = scmp.ne.s32.totalorder %s27, %s30
      %p39 = scmp.eq.s32.totalorder %s22, 1
      %p40 = por %p38, %p39
      %p41 = scmp.ne.s32.totalorder %s30, %s31
      %p42 = scmp.eq.s32.totalorder %s22, 0
      %p43 = por %p41, %p42
      %p44 = scmp.ne.s32.totalorder %s30, %s31
      %p45 = scmp.eq.s32.totalorder %s23, 1
      %p46 = por %p44, %p45
      %p48 = scmp.ne.s32.totalorder %s31, %s47
      %p49 = scmp.eq.s32.totalorder %s23, 0
      %p50 = por %p48, %p49
      %s52 = sadd.s32 %s51, 1
      %p55 = scmp.eq.s32.totalorder %s17, 1
      %p56 = scmp.ne.s32.totalorder %s51, %s53
      %p57 = scmp.eq.s32.totalorder %s17, 0
      %p58 = por %p56, %p57
      %p59 = scmp.ne.s32.totalorder %s51, %s53
      %p60 = scmp.eq.s32.totalorder %s22, 1
      %p61 = por %p59, %p60
      %p62 = scmp.ne.s32.totalorder %s53, %s54
      %p63 = scmp.eq.s32.totalorder %s22, 0
      %p64 = por %p62, %p63
      %p65 = scmp.ne.s32.totalorder %s53, %s54
      %p66 = scmp.eq.s32.totalorder %s23, 1
      %p67 = por %p65, %p66
      %p69 = scmp.ne.s32.totalorder %s54, %s68
      %p70 = scmp.eq.s32.totalorder %s23, 0
      %p71 = por %p69, %p70
      %s73 = sadd.s32 %s72, 1
      %p76 = scmp.eq.s32.totalorder %s17, 1
      %p77 = scmp.ne.s32.totalorder %s72, %s74
      %p78 = scmp.eq.s32.totalorder %s17, 0
      %p79 = por %p77, %p78
      %p80 = scmp.ne.s32.totalorder %s72, %s74
      %p81 = scmp.eq.s32.totalorder %s22, 1
      %p82 = por %p80, %p81
      %p83 = scmp.ne.s32.totalorder %s74, %s75
      %p84 = scmp.eq.s32.totalorder %s22, 0
      %p85 = por %p83, %p84
      %p86 = scmp.ne.s32.totalorder %s74, %s75
      %p87 = scmp.eq.s32.totalorder %s23, 1
      %p88 = por %p86, %p87
      %p90 = scmp.ne.s32.totalorder %s75, %s89
      %p91 = scmp.eq.s32.totalorder %s23, 0
      %p92 = por %p90, %p91
      %s94 = sadd.s32 %s93, 1
      %p97 = scmp.eq.s32.totalorder %s17, 1
      %p98 = scmp.ne.s32.totalorder %s93, %s95
      %p99 = scmp.eq.s32.totalorder %s17, 0
      %p100 = por %p98, %p99
      %p101 = scmp.ne.s32.totalorder %s93, %s95
      %p102 = scmp.eq.s32.totalorder %s22, 1
      %p103 = por %p101, %p102
      %p104 = scmp.ne.s32.totalorder %s95, %s96
      %p105 = scmp.eq.s32.totalorder %s22, 0
      %p106 = por %p104, %p105
      %p107 = scmp.ne.s32.totalorder %s95, %s96
      %p108 = scmp.eq.s32.totalorder %s23, 1
      %p109 = por %p107, %p108
      %p111 = scmp.ne.s32.totalorder %s96, %s110
      %p112 = scmp.eq.s32.totalorder %s23, 0
      %p113 = por %p111, %p112
      %s115 = sadd.s32 %s114, 1
      %p118 = scmp.eq.s32.totalorder %s17, 1
      %p119 = scmp.ne.s32.totalorder %s114, %s116
      %p120 = scmp.eq.s32.totalorder %s17, 0
      %p121 = por %p119, %p120
      %p122 = scmp.ne.s32.totalorder %s114, %s116
      %p123 = scmp.eq.s32.totalorder %s22, 1
      %p124 = por %p122, %p123
      %p125 = scmp.ne.s32.totalorder %s116, %s117
      %p126 = scmp.eq.s32.totalorder %s22, 0
      %p127 = por %p125, %p126
      %p128 = scmp.ne.s32.totalorder %s116, %s117
      %p129 = scmp.eq.s32.totalorder %s23, 1
      %p130 = por %p128, %p129
      %p132 = scmp.ne.s32.totalorder %s117, %s131
      %p133 = scmp.eq.s32.totalorder %s23, 0
      %p134 = por %p132, %p133
      %s136 = sadd.s32 %s135, 1
      %p139 = scmp.eq.s32.totalorder %s17, 1
      %p140 = scmp.ne.s32.totalorder %s135, %s137
      %p141 = scmp.eq.s32.totalorder %s17, 0
      %p142 = por %p140, %p141
      %p143 = scmp.ne.s32.totalorder %s135, %s137
      %p144 = scmp.eq.s32.totalorder %s22, 1
      %p145 = por %p143, %p144
      %p146 = scmp.ne.s32.totalorder %s137, %s138
      %p147 = scmp.eq.s32.totalorder %s22, 0
      %p148 = por %p146, %p147
      %p149 = scmp.ne.s32.totalorder %s137, %s138
      %p150 = scmp.eq.s32.totalorder %s23, 1
      %p151 = por %p149, %p150
      %p153 = scmp.ne.s32.totalorder %s138, %s152
      %p154 = scmp.eq.s32.totalorder %s23, 0
      %p155 = por %p153, %p154
      %s157 = sadd.s32 %s156, 1
      %p160 = scmp.eq.s32.totalorder %s17, 1
      %p161 = scmp.ne.s32.totalorder %s156, %s158
      %p162 = scmp.eq.s32.totalorder %s17, 0
      %p163 = por %p161, %p162
      %p164 = scmp.ne.s32.totalorder %s156, %s158
      %p165 = scmp.eq.s32.totalorder %s22, 1
      %p166 = por %p164, %p165
      %p167 = scmp.ne.s32.totalorder %s158, %s159
      %p168 = scmp.eq.s32.totalorder %s22, 0
      %p169 = por %p167, %p168
      %p170 = scmp.ne.s32.totalorder %s158, %s159
      %p171 = scmp.eq.s32.totalorder %s23, 1
      %p172 = por %p170, %p171
      %p174 = scmp.ne.s32.totalorder %s159, %s173
      %p175 = scmp.eq.s32.totalorder %s23, 0
      %p176 = por %p174, %p175
      %s177 = ssub.s32 %s17, %s24
      %p178 = scmp.eq.s32.totalorder %s177, 0
      %s180 = sadd.s32 %s179, 1
      %s181 = scalar_select %p178, %s179, %s180
      %p184 = pneg %p178
      %p185 = scmp.eq.s32.totalorder %s17, 1
      %p186 = por %p184, %p185
      %p187 = scmp.ne.s32.totalorder %s179, %s182
      %p188 = scmp.eq.s32.totalorder %s17, 0
      %p189 = por %p187, %p188
      %p190 = scmp.ne.s32.totalorder %s179, %s182
      %p191 = scmp.eq.s32.totalorder %s22, 1
      %p192 = por %p190, %p191
      %p193 = scmp.ne.s32.totalorder %s182, %s183
      %p194 = scmp.eq.s32.totalorder %s22, 0
      %p195 = por %p193, %p194
      %p196 = scmp.ne.s32.totalorder %s182, %s183
      %p197 = scmp.eq.s32.totalorder %s23, 1
      %p198 = por %p196, %p197
      %p200 = scmp.ne.s32.totalorder %s183, %s199
      %p201 = scmp.eq.s32.totalorder %s23, 0
      %p202 = por %p200, %p201
      %s203 = ssub.s32 %s17, %s24
      %p204 = scmp.eq.s32.totalorder %s203, 0
      %s206 = sadd.s32 %s205, 1
      %s207 = scalar_select %p204, %s205, %s206
      %p210 = pneg %p204
      %p211 = scmp.eq.s32.totalorder %s17, 1
      %p212 = por %p210, %p211
      %p213 = scmp.ne.s32.totalorder %s205, %s208
      %p214 = scmp.eq.s32.totalorder %s17, 0
      %p215 = por %p213, %p214
      %p216 = scmp.ne.s32.totalorder %s205, %s208
      %p217 = scmp.eq.s32.totalorder %s22, 1
      %p218 = por %p216, %p217
      %p219 = scmp.ne.s32.totalorder %s208, %s209
      %p220 = scmp.eq.s32.totalorder %s22, 0
      %p221 = por %p219, %p220
      %p222 = scmp.ne.s32.totalorder %s208, %s209
      %p223 = scmp.eq.s32.totalorder %s23, 1
      %p224 = por %p222, %p223
      %p226 = scmp.ne.s32.totalorder %s209, %s225
      %p227 = scmp.eq.s32.totalorder %s23, 0
      %p228 = por %p226, %p227
      %p229 = scmp.le.s32.totalorder 1, %s17
      %p230 = scmp.lt.s32.totalorder %s17, 3
      %p231 = pnand %p229, %p230
      %p232 = pneg %p231
      // Predicated region
      $region9: #{vit_encoder_forward.17} parent=5 // pred_check
        _
      $region10: #{vit_encoder_forward.17} parent=5 // pred_check_branch
        %234 = sbr.rel (%p231) target = $region12
      $region11: #{vit_encoder_forward.17} parent=5 // pred_region
        %s235 = ssub.s32 %s17, 1
        // Predicated region
        $region13: #{vit_encoder_forward.17} parent=11 // pred_check
          %p236 = pneg %p64
        $region14: #{vit_encoder_forward.17} parent=11 // pred_check_branch
          %238 = sbr.rel (%p236) target = $region16
        $region15: #{vit_encoder_forward.17} parent=11 // pred_region
          _
        $region16: #{vit_encoder_forward.17} parent=11 // pred_fallthru
          _
        // Predicated region
        $region17: #{vit_encoder_forward.17} parent=11 // pred_check
          %p239 = pneg %p85
        $region18: #{vit_encoder_forward.17} parent=11 // pred_check_branch
          %241 = sbr.rel (%p239) target = $region20
        $region19: #{vit_encoder_forward.17} parent=11 // pred_region
          _
        $region20: #{vit_encoder_forward.17} parent=11 // pred_fallthru
          _
        // Predicated region
        $region21: #{vit_encoder_forward.17} parent=11 // pred_check
          %p242 = pneg %p106
        $region22: #{vit_encoder_forward.17} parent=11 // pred_check_branch
          %244 = sbr.rel (%p242) target = $region24
        $region23: #{vit_encoder_forward.17} parent=11 // pred_region
          _
        $region24: #{vit_encoder_forward.17} parent=11 // pred_fallthru
          _
        // Predicated region
        $region25: #{vit_encoder_forward.17} parent=11 // pred_check
          %p245 = pneg %p127
        $region26: #{vit_encoder_forward.17} parent=11 // pred_check_branch
          %247 = sbr.rel (%p245) target = $region28
        $region27: #{vit_encoder_forward.17} parent=11 // pred_region
          _
        $region28: #{vit_encoder_forward.17} parent=11 // pred_fallthru
          _
        // Predicated region
        $region29: #{vit_encoder_forward.17} parent=11 // pred_check
          %p248 = pneg %p148
        $region30: #{vit_encoder_forward.17} parent=11 // pred_check_branch
          %250 = sbr.rel (%p248) target = $region32
        $region31: #{vit_encoder_forward.17} parent=11 // pred_region
          _
        $region32: #{vit_encoder_forward.17} parent=11 // pred_fallthru
          _
        // Predicated region
        $region33: #{vit_encoder_forward.17} parent=11 // pred_check
          %p251 = pneg %p169
        $region34: #{vit_encoder_forward.17} parent=11 // pred_check_branch
          %253 = sbr.rel (%p251) target = $region36
        $region35: #{vit_encoder_forward.17} parent=11 // pred_region
          _
        $region36: #{vit_encoder_forward.17} parent=11 // pred_fallthru
          _
      $region12: #{vit_encoder_forward.17} parent=5 // pred_fallthru
        _
      %p254 = scmp.lt.s32.totalorder %s17, 2
      // Predicated region
      $region37: #{vit_encoder_forward.17} parent=5 // pred_check
        %p255 = pneg %p254
      $region38: #{vit_encoder_forward.17} parent=5 // pred_check_branch
        %257 = sbr.rel (%p255) target = $region40
      $region39: #{vit_encoder_forward.17} parent=5 // pred_region
        // Predicated region
        $region41: #{vit_encoder_forward.17} parent=39 // pred_check
          %p258 = pneg %p37
        $region42: #{vit_encoder_forward.17} parent=39 // pred_check_branch
          %260 = sbr.rel (%p258) target = $region44
        $region43: #{vit_encoder_forward.17} parent=39 // pred_region
          %s261 = smul.u32 2, %s17
          %p262 = scmp.lt.s32.totalorder %s261, 3
          %s263 = scalar_select %p262, %s261, 3
          %s264 = smul.addr %s263, 8
          %s265 = scalar_lea.vmem %s0, %s264
          %s266 = smul.u32 2, %s17
        $region44: #{vit_encoder_forward.17} parent=39 // pred_fallthru
          _
        // Predicated region
        $region45: #{vit_encoder_forward.17} parent=39 // pred_check
          %p267 = pneg %p189
        $region46: #{vit_encoder_forward.17} parent=39 // pred_check_branch
          %269 = sbr.rel (%p267) target = $region48
        $region47: #{vit_encoder_forward.17} parent=39 // pred_region
          %s270 = smul.u32 2, %s17
          %p271 = scmp.lt.s32.totalorder %s270, 3
          %s272 = scalar_select %p271, %s270, 3
          %s273 = smul.addr %s272, 8
          %s274 = scalar_lea.vmem %s7, %s273
          %s275 = smul.u32 2, %s17
        $region48: #{vit_encoder_forward.17} parent=39 // pred_fallthru
          _
      $region40: #{vit_encoder_forward.17} parent=5 // pred_fallthru
        _
      %p276 = scmp.le.s32.totalorder 1, %s17
      %p277 = scmp.lt.s32.totalorder %s17, 3
      %p278 = pnand %p276, %p277
      %p279 = pneg %p278
      // Predicated region
      $region49: #{vit_encoder_forward.17} parent=5 // pred_check
        _
      $region50: #{vit_encoder_forward.17} parent=5 // pred_check_branch
        %281 = sbr.rel (%p278) target = $region52
      $region51: #{vit_encoder_forward.17} parent=5 // pred_region
        %s282 = ssub.s32 %s17, 1
        %s283 = smul.u32 2, %s22
        %p284 = scmp.lt.s32.totalorder %s283, 3
        %s285 = scalar_select %p284, %s283, 3
        %s286 = smul.addr %s285, 8
        %s287 = scalar_lea.vmem %s0, %s286
        %p288 = pneg %p43
        %p289 = pneg %p40
        %p290 = pneg %p64
        %p291 = pneg %p61
        %p292 = pneg %p85
        %p293 = pneg %p82
        %p294 = pneg %p106
        %p295 = pneg %p103
        %p296 = pneg %p127
        %p297 = pneg %p124
        %p298 = pneg %p148
        %p299 = pneg %p145
        %p300 = pneg %p169
        %p301 = pneg %p166
        %s302 = smul.u32 2, %s22
        %p303 = scmp.lt.s32.totalorder %s302, 3
        %s304 = scalar_select %p303, %s302, 3
        %s305 = smul.addr %s304, 8
        %s306 = scalar_lea.vmem %s7, %s305
        %p307 = pneg %p195
        %p308 = pneg %p192
        %p309 = pneg %p221
        %p310 = pneg %p218
        %s311 = sand.u32 %s208, 1
        %s312 = scalar_lea.sflag [#allocation3], %s311
        %s313 = sand.u32 %s208, 1
        %s314 = smul.addr %s313, 16
        %s315 = scalar_lea.vmem [#allocation2], %s314
        %s316 = smul.u32 2, %s22
        %p317 = scmp.lt.s32.totalorder %s316, 3
        %s318 = scalar_select %p317, %s316, 3
        %s319 = smul.addr %s318, 8
        %s320 = scalar_lea.vmem %s0, %s319
        %s321 = smul.u32 2, %s22
        %s322 = smul.u32 2, %s22
        %p323 = scmp.lt.s32.totalorder %s322, 3
        %s324 = scalar_select %p323, %s322, 3
        %s325 = smul.addr %s324, 8
        %s326 = scalar_lea.vmem %s7, %s325
        %s327 = smul.u32 2, %s22
        %s328 = smul.u32 2, %s22
        %v330 = vld [vmem:[%s320] sm:$0xff]
        %v331 = vld [vmem:[%s320 + $0x8] sm:$0xff]
        %332 = vadd.xlane.f32.xlu0 %v330
        %v333 = vpop.xlane.xlu0 %332
        %334 = vadd.xlane.f32.xlu0 %v331
        %v335 = vpop.xlane.xlu0 %334
        %v336 = vrcp.pop 128.0
        %v337 = vmul.f32 %v333, %v336
        %v338 = vmul.f32 %v335, %v336
        %v339 = vsub.f32 %v330, %v337
        %v340 = vsub.f32 %v331, %v338
        %v341 = vmul.f32 %v339, %v339
        %v342 = vmul.f32 %v340, %v340
        %343 = vadd.xlane.f32.xlu0 %v341
        %v344 = vpop.xlane.xlu0 %343
        %345 = vadd.xlane.f32.xlu0 %v342
        %v346 = vpop.xlane.xlu0 %345
        %v347 = vmul.f32 %v344, %v336
        %v348 = vmul.f32 %v346, %v336
        %v349 = vadd.f32 %v347, 1e-05
        %v350 = vadd.f32 %v348, 1e-05
        %v351 = vrsqrt.pop %v349
        %v352 = vrsqrt.pop %v350
        %v353 = vmul.f32 %v339, %v351
        %v354 = vmul.f32 %v340, %v352
        %v355 = vld [vmem:[%s1] sm:$0x1]
        %v357 = vlaneseq
        %v358 = vshrl.u32 %v357, 7
        %v359 = vsub.s32 0, %v358
        %v360 = vrot.slane %v355, %v359
        %v362 = vmul.f32 %v353, %v360
        %v363 = vmul.f32 %v354, %v360
        %v364 = vld [vmem:[%s2] sm:$0x1]
        %v366 = vlaneseq
        %v367 = vshrl.u32 %v366, 7
        %v368 = vsub.s32 0, %v367
        %v369 = vrot.slane %v364, %v368
        %v371 = vadd.f32 %v362, %v369
        %v372 = vadd.f32 %v363, %v369
        %v373 = vpack.c.bf16 %v372, %v371
        %v374 = vld [vmem:[%s3] sm:$0xff]
        %v375 = vld [vmem:[%s3 + $0x8] sm:$0xff]
        %v376 = vld [vmem:[%s3 + $0x10] sm:$0xff]
        %v377 = vld [vmem:[%s3 + $0x18] sm:$0xff]
        %v378 = vld [vmem:[%s3 + $0x20] sm:$0xff]
        %v379 = vld [vmem:[%s3 + $0x28] sm:$0xff]
        %v380 = vld [vmem:[%s3 + $0x30] sm:$0xff]
        %v381 = vld [vmem:[%s3 + $0x38] sm:$0xff]
        %v382 = vld [vmem:[%s3 + $0x40] sm:$0xff]
        %v383 = vld [vmem:[%s3 + $0x48] sm:$0xff]
        %v384 = vld [vmem:[%s3 + $0x50] sm:$0xff]
        %v385 = vld [vmem:[%s3 + $0x58] sm:$0xff]
        %v386 = vld [vmem:[%s3 + $0x60] sm:$0xff]
        %v387 = vld [vmem:[%s3 + $0x68] sm:$0xff]
        %v388 = vld [vmem:[%s3 + $0x70] sm:$0xff]
        %v389 = vld [vmem:[%s3 + $0x78] sm:$0xff]
        %v390 = vld [vmem:[%s4] sm:$0x3]
        %v392 = vlaneseq
        %v393 = vshrl.u32 %v392, 7
        %v394 = vsub.s32 0, %v393
        %v395 = vrot.slane %v390, %v394
        %v396 = vlaneseq
        %v397 = vshrl.u32 %v396, 7
        %v398 = vsub.s32 1, %v397
        %v399 = vrot.slane %v390, %v398
        %v418 = vunpack.c.l.b16 %v374
        %v419 = vunpack.c.h.b16 %v374
        %v420 = vunpack.c.l.b16 %v375
        %v421 = vunpack.c.h.b16 %v375
        %v422 = vunpack.c.l.b16 %v376
        %v423 = vunpack.c.h.b16 %v376
        %v424 = vunpack.c.l.b16 %v377
        %v425 = vunpack.c.h.b16 %v377
        %v426 = vunpack.c.l.b16 %v378
        %v427 = vunpack.c.h.b16 %v378
        %v428 = vunpack.c.l.b16 %v379
        %v429 = vunpack.c.h.b16 %v379
        %v430 = vunpack.c.l.b16 %v380
        %v431 = vunpack.c.h.b16 %v380
        %v432 = vunpack.c.l.b16 %v381
        %v433 = vunpack.c.h.b16 %v381
        %v434 = vunpack.c.l.b16 %v382
        %v435 = vunpack.c.h.b16 %v382
        %v436 = vunpack.c.l.b16 %v383
        %v437 = vunpack.c.h.b16 %v383
        %v438 = vunpack.c.l.b16 %v384
        %v439 = vunpack.c.h.b16 %v384
        %v440 = vunpack.c.l.b16 %v385
        %v441 = vunpack.c.h.b16 %v385
        %v442 = vunpack.c.l.b16 %v386
        %v443 = vunpack.c.h.b16 %v386
        %v444 = vunpack.c.l.b16 %v387
        %v445 = vunpack.c.h.b16 %v387
        %v446 = vunpack.c.l.b16 %v388
        %v447 = vunpack.c.h.b16 %v388
        %v448 = vunpack.c.l.b16 %v389
        %v449 = vunpack.c.h.b16 %v389
        %v450 = vpack.c.b16 %v420, %v418
        %v451 = vpack.c.b16 %v421, %v419
        %v452 = vpack.c.b16 %v424, %v422
        %v453 = vpack.c.b16 %v425, %v423
        %v454 = vpack.c.b16 %v428, %v426
        %v455 = vpack.c.b16 %v429, %v427
        %v456 = vpack.c.b16 %v432, %v430
        %v457 = vpack.c.b16 %v433, %v431
        %v458 = vpack.c.b16 %v436, %v434
        %v459 = vpack.c.b16 %v437, %v435
        %v460 = vpack.c.b16 %v440, %v438
        %v461 = vpack.c.b16 %v441, %v439
        %v462 = vpack.c.b16 %v444, %v442
        %v463 = vpack.c.b16 %v445, %v443
        %v464 = vpack.c.b16 %v448, %v446
        %v465 = vpack.c.b16 %v449, %v447
        %482 = vmatprep.subr.bf16.mxu0 %v451
        %483 = vmatpush1.bf16.msra.mxu0 %v450
        %484 = vmatprep.subr.bf16.mxu0 %v453
        %485 = vmatpush1.bf16.msra.mxu0 %v452
        %486 = vmatprep.subr.bf16.mxu0 %v455
        %487 = vmatpush1.bf16.msra.mxu0 %v454
        %488 = vmatprep.subr.bf16.mxu0 %v457
        %489 = vmatpush1.bf16.msra.mxu0 %v456
        %490 = vmatprep.subr.bf16.mxu0 %v459
        %491 = vmatpush1.bf16.msra.mxu0 %v458
        %492 = vmatprep.subr.bf16.mxu0 %v461
        %493 = vmatpush1.bf16.msra.mxu0 %v460
        %494 = vmatprep.subr.bf16.mxu0 %v463
        %495 = vmatpush1.bf16.msra.mxu0 %v462
        %496 = vmatprep.subr.bf16.mxu0 %v465
        %497 = vmatpush1.bf16.msra.mxu0 %v464
        %498 = vmatprep.subr.bf16.mxu0 0
        %499 = vmatpush1.bf16.msra.mxu0 0
        %500 = vmatprep.subr.bf16.mxu0 0
        %501 = vmatpush1.bf16.msra.mxu0 0
        %502 = vmatprep.subr.bf16.mxu0 0
        %503 = vmatpush1.bf16.msra.mxu0 0
        %504 = vmatprep.subr.bf16.mxu0 0
        %505 = vmatpush1.bf16.msra.mxu0 0
        %506 = vmatprep.subr.bf16.mxu0 0
        %507 = vmatpush1.bf16.msra.mxu0 0
        %508 = vmatprep.subr.bf16.mxu0 0
        %509 = vmatpush1.bf16.msra.mxu0 0
        %510 = vmatprep.subr.bf16.mxu0 0
        %511 = vmatpush1.bf16.msra.mxu0 0
        %512 = vmatprep.subr.bf16.mxu0 0
        %513 = vmatpush1.bf16.msra.mxu0 0
        %514 = vmatprep.mubr.bf16.mxu0 0
        %515 = vmatmul.mubr.bf16.gmra.mrb[0].mxu0 %v373
        %v516 = vpop.f32.mrb[0].mxu0
        %v517 = vadd.f32 %v395, %v516
        %v518 = vpop.f32.mrb[0].mxu0
        %v519 = vadd.f32 %v399, %v518
        %v520 = vpop.f32.mrb[0].mxu0
        %v521 = vadd.f32 %v395, %v520
        %v522 = vpop.f32.mrb[0].mxu0
        %v523 = vadd.f32 %v399, %v522
        %524 = vdwg.mxu0
        %v525 = vmul.f32 %v517, %v517
        %v526 = vmul.f32 %v519, %v519
        %v527 = vmul.f32 %v521, %v521
        %v528 = vmul.f32 %v523, %v523
        %v529 = vmul.f32 %v517, %v525
        %v530 = vmul.f32 %v519, %v526
        %v531 = vmul.f32 %v521, %v527
        %v532 = vmul.f32 %v523, %v528
        %v533 = vmul.f32 %v529, 0.044715
        %v534 = vmul.f32 %v530, 0.044715
        %v535 = vmul.f32 %v531, 0.044715
        %v536 = vmul.f32 %v532, 0.044715
        %v537 = vadd.f32 %v517, %v533
        %v538 = vadd.f32 %v519, %v534
        %v539 = vadd.f32 %v521, %v535
        %v540 = vadd.f32 %v523, %v536
        %v541 = vmul.f32 %v537, 0.7978846
        %v542 = vmul.f32 %v538, 0.7978846
        %v543 = vmul.f32 %v539, 0.7978846
        %v544 = vmul.f32 %v540, 0.7978846
        %v545 = vtanh.pop %v541
        %v546 = vtanh.pop %v542
        %v547 = vtanh.pop %v543
        %v548 = vtanh.pop %v544
        %v549 = vadd.f32 %v545, 1.0
        %v550 = vadd.f32 %v546, 1.0
        %v551 = vadd.f32 %v547, 1.0
        %v552 = vadd.f32 %v548, 1.0
        %v553 = vmul.f32 %v549, 0.5
        %v554 = vmul.f32 %v550, 0.5
        %v555 = vmul.f32 %v551, 0.5
        %v556 = vmul.f32 %v552, 0.5
        %v557 = vmul.f32 %v517, %v553
        %v558 = vmul.f32 %v519, %v554
        %v559 = vmul.f32 %v521, %v555
        %v560 = vmul.f32 %v523, %v556
        %v561 = vpack.c.bf16 %v559, %v557
        %v562 = vpack.c.bf16 %v560, %v558
        %v563 = vld [vmem:[%s5] sm:$0xf]
        %v564 = vld [vmem:[%s5 + $0x4] sm:$0xf]
        %v565 = vld [vmem:[%s5 + $0x8] sm:$0xf]
        %v566 = vld [vmem:[%s5 + $0xc] sm:$0xf]
        %v567 = vld [vmem:[%s5 + $0x10] sm:$0xf]
        %v568 = vld [vmem:[%s5 + $0x14] sm:$0xf]
        %v569 = vld [vmem:[%s5 + $0x18] sm:$0xf]
        %v570 = vld [vmem:[%s5 + $0x1c] sm:$0xf]
        %v571 = vld [vmem:[%s5 + $0x20] sm:$0xf]
        %v572 = vld [vmem:[%s5 + $0x24] sm:$0xf]
        %v573 = vld [vmem:[%s5 + $0x28] sm:$0xf]
        %v574 = vld [vmem:[%s5 + $0x2c] sm:$0xf]
        %v575 = vld [vmem:[%s5 + $0x30] sm:$0xf]
        %v576 = vld [vmem:[%s5 + $0x34] sm:$0xf]
        %v577 = vld [vmem:[%s5 + $0x38] sm:$0xf]
        %v578 = vld [vmem:[%s5 + $0x3c] sm:$0xf]
        %v579 = vld [vmem:[%s5 + $0x40] sm:$0xf]
        %v580 = vld [vmem:[%s5 + $0x44] sm:$0xf]
        %v581 = vld [vmem:[%s5 + $0x48] sm:$0xf]
        %v582 = vld [vmem:[%s5 + $0x4c] sm:$0xf]
        %v583 = vld [vmem:[%s5 + $0x50] sm:$0xf]
        %v584 = vld [vmem:[%s5 + $0x54] sm:$0xf]
        %v585 = vld [vmem:[%s5 + $0x58] sm:$0xf]
        %v586 = vld [vmem:[%s5 + $0x5c] sm:$0xf]
        %v587 = vld [vmem:[%s5 + $0x60] sm:$0xf]
        %v588 = vld [vmem:[%s5 + $0x64] sm:$0xf]
        %v589 = vld [vmem:[%s5 + $0x68] sm:$0xf]
        %v590 = vld [vmem:[%s5 + $0x6c] sm:$0xf]
        %v591 = vld [vmem:[%s5 + $0x70] sm:$0xf]
        %v592 = vld [vmem:[%s5 + $0x74] sm:$0xf]
        %v593 = vld [vmem:[%s5 + $0x78] sm:$0xf]
        %v594 = vld [vmem:[%s5 + $0x7c] sm:$0xf]
        %v595 = vld [vmem:[%s6] sm:$0x1]
        %v597 = vlaneseq
        %v598 = vshrl.u32 %v597, 7
        %v599 = vsub.s32 0, %v598
        %v600 = vrot.slane %v595, %v599
        %v634 = vunpack.c.l.b16 %v563
        %v635 = vunpack.c.l.b16 %v564
        %v636 = vunpack.c.l.b16 %v565
        %v637 = vunpack.c.l.b16 %v566
        %v638 = vunpack.c.l.b16 %v567
        %v639 = vunpack.c.l.b16 %v568
        %v640 = vunpack.c.l.b16 %v569
        %v641 = vunpack.c.l.b16 %v570
        %v642 = vunpack.c.l.b16 %v571
        %v643 = vunpack.c.l.b16 %v572
        %v644 = vunpack.c.l.b16 %v573
        %v645 = vunpack.c.l.b16 %v574
        %v646 = vunpack.c.l.b16 %v575
        %v647 = vunpack.c.l.b16 %v576
        %v648 = vunpack.c.l.b16 %v577
        %v649 = vunpack.c.l.b16 %v578
        %v650 = vunpack.c.l.b16 %v579
        %v651 = vunpack.c.l.b16 %v580
        %v652 = vunpack.c.l.b16 %v581
        %v653 = vunpack.c.l.b16 %v582
        %v654 = vunpack.c.l.b16 %v583
        %v655 = vunpack.c.l.b16 %v584
        %v656 = vunpack.c.l.b16 %v585
        %v657 = vunpack.c.l.b16 %v586
        %v658 = vunpack.c.l.b16 %v587
        %v659 = vunpack.c.l.b16 %v588
        %v660 = vunpack.c.l.b16 %v589
        %v661 = vunpack.c.l.b16 %v590
        %v662 = vunpack.c.l.b16 %v591
        %v663 = vunpack.c.l.b16 %v592
        %v664 = vunpack.c.l.b16 %v593
        %v665 = vunpack.c.l.b16 %v594
        %v666 = vpack.c.b16 %v635, %v634
        %v667 = vpack.c.b16 %v637, %v636
        %v668 = vpack.c.b16 %v639, %v638
        %v669 = vpack.c.b16 %v641, %v640
        %v670 = vpack.c.b16 %v643, %v642
        %v671 = vpack.c.b16 %v645, %v644
        %v672 = vpack.c.b16 %v647, %v646
        %v673 = vpack.c.b16 %v649, %v648
        %v674 = vpack.c.b16 %v651, %v650
        %v675 = vpack.c.b16 %v653, %v652
        %v676 = vpack.c.b16 %v655, %v654
        %v677 = vpack.c.b16 %v657, %v656
        %v678 = vpack.c.b16 %v659, %v658
        %v679 = vpack.c.b16 %v661, %v660
        %v680 = vpack.c.b16 %v663, %v662
        %v681 = vpack.c.b16 %v665, %v664
        %698 = vmatprep.subr.bf16.mxu0 0
        %699 = vmatpush1.bf16.msra.mxu0 %v666
        %700 = vmatprep.subr.bf16.mxu0 0
        %701 = vmatpush1.bf16.msra.mxu0 %v667
        %702 = vmatprep.subr.bf16.mxu0 0
        %703 = vmatpush1.bf16.msra.mxu0 %v668
        %704 = vmatprep.subr.bf16.mxu0 0
        %705 = vmatpush1.bf16.msra.mxu0 %v669
        %706 = vmatprep.subr.bf16.mxu0 0
        %707 = vmatpush1.bf16.msra.mxu0 %v670
        %708 = vmatprep.subr.bf16.mxu0 0
        %709 = vmatpush1.bf16.msra.mxu0 %v671
        %710 = vmatprep.subr.bf16.mxu0 0
        %711 = vmatpush1.bf16.msra.mxu0 %v672
        %712 = vmatprep.subr.bf16.mxu0 0
        %713 = vmatpush1.bf16.msra.mxu0 %v673
        %714 = vmatprep.subr.bf16.mxu0 0
        %715 = vmatpush1.bf16.msra.mxu0 %v674
        %716 = vmatprep.subr.bf16.mxu0 0
        %717 = vmatpush1.bf16.msra.mxu0 %v675
        %718 = vmatprep.subr.bf16.mxu0 0
        %719 = vmatpush1.bf16.msra.mxu0 %v676
        %720 = vmatprep.subr.bf16.mxu0 0
        %721 = vmatpush1.bf16.msra.mxu0 %v677
        %722 = vmatprep.subr.bf16.mxu0 0
        %723 = vmatpush1.bf16.msra.mxu0 %v678
        %724 = vmatprep.subr.bf16.mxu0 0
        %725 = vmatpush1.bf16.msra.mxu0 %v679
        %726 = vmatprep.subr.bf16.mxu0 0
        %727 = vmatpush1.bf16.msra.mxu0 %v680
        %728 = vmatprep.subr.bf16.mxu0 0
        %729 = vmatpush1.bf16.msra.mxu0 %v681
        %730 = vmatprep.mubr.bf16.mxu0 %v562
        %731 = vmatmul.mubr.bf16.gmra.mrb[0].mxu0 %v561
        %v732 = vpop.f32.mrb[0].mxu0
        %v733 = vadd.f32 %v600, %v732
        %v734 = vpop.f32.mrb[0].mxu0
        %v735 = vpop.f32.mrb[0].mxu0
        %v736 = vadd.f32 %v600, %v735
        %v737 = vpop.f32.mrb[0].mxu0
        %738 = vdwg.mxu0
        %v739 = vld [vmem:[%s326] sm:$0xff]
        %v740 = vld [vmem:[%s326 + $0x8] sm:$0xff]
        %v741 = vadd.f32 %v733, %v739
        %v742 = vadd.f32 %v736, %v740
        %743 = vst [vmem:[%s315] sm:$0xff] %v741
        %744 = vst [vmem:[%s315 + $0x8] sm:$0xff] %v742
        %s745 = sand.u32 %s208, 1
        %s746 = scalar_lea.sflag [#allocation3], %s745
        %s747 = sand.u32 %s208, 1
        %s748 = smul.addr %s747, 16
        %s749 = scalar_lea.vmem [#allocation2], %s748
        // Predicated region
        $region53: #{vit_encoder_forward.17} parent=51 // pred_check
          %p750 = pneg %p218
        $region54: #{vit_encoder_forward.17} parent=51 // pred_check_branch
          %752 = sbr.rel (%p750) target = $region56
        $region55: #{vit_encoder_forward.17} parent=51 // pred_region
          %s753 = smul.u32 2, %s22
          %s755 = ssub.s32 256, 256
          %756 = vsyncadd %s746, %s755
          %s757 = smul.addr %s753, 128
          %s758 = scalar_lea.hbm %s8, %s757
          %s759 = sshll.u32 %s749, 4
          %s760 = int_to_ptr.vmem [resolvable:$true] %s759
          %765 = dma.vmem_to_hbm [thread:$0]  %s760, 256, %s758, %s746, 128, 128, 8
        $region56: #{vit_encoder_forward.17} parent=51 // pred_fallthru
          _
      $region52: #{vit_encoder_forward.17} parent=5 // pred_fallthru
        _
      %p766 = scmp.le.s32.totalorder 2, %s17
      // Predicated region
      $region57: #{vit_encoder_forward.17} parent=5 // pred_check
        %p767 = pneg %p766
      $region58: #{vit_encoder_forward.17} parent=5 // pred_check_branch
        %769 = sbr.rel (%p767) target = $region60
      $region59: #{vit_encoder_forward.17} parent=5 // pred_region
        %s770 = ssub.s32 %s17, 2
        // Predicated region
        $region61: #{vit_encoder_forward.17} parent=59 // pred_check
          %p771 = pneg %p224
        $region62: #{vit_encoder_forward.17} parent=59 // pred_check_branch
          %773 = sbr.rel (%p771) target = $region64
        $region63: #{vit_encoder_forward.17} parent=59 // pred_region
          %s774 = sand.u32 %s209, 1
          %s775 = scalar_lea.sflag [#allocation3], %s774
          %s776 = sand.u32 %s209, 1
          %s777 = smul.addr %s776, 16
          %s778 = scalar_lea.vmem [#allocation2], %s777
          %779 = dma.done %s775, 256
        $region64: #{vit_encoder_forward.17} parent=59 // pred_fallthru
          _
      $region60: #{vit_encoder_forward.17} parent=5 // pred_fallthru
        _
    $region6: #{vit_encoder_forward.17} parent=1 // loop_footer
      %s21 = sadd.s32 1, %s17
    $region7: #{vit_encoder_forward.17} parent=1 // loop_footer_branch
      %16 = sbr.rel target = $region3
    $region8: #{vit_encoder_forward.17} parent=1 // loop_exit
      _
    %780 = vsyncpa [#allocation3], 1
    %s781 = scalar_lea.sflag [#allocation3], 1
    %782 = vsyncpa %s781, 1

</llo_original>
